<compile_context>
chip_gen: v7x
topology: tpu7x:2x2x1
jax: 0.10.0
libtpu: 0.0.40
codegen_flags: <defaults>
</compile_context>

<pallas_src>
import functools

import jax
import jax.numpy as jnp
from jax import lax
from jax.experimental import pallas as pl
from jax.experimental.pallas import tpu as pltpu


_TOKEN_TILE_CAP = 2048  # raised from 128: these kernels are HBM-bound


def _token_tile(n, cap=_TOKEN_TILE_CAP):
    """Largest tile <= cap that divides n and is a multiple of 128 (or n)."""
    if n <= cap:
        return n
    t = cap
    while t >= 128:
        if n % t == 0:
            return t
        t //= 2
    return n


# ---------------------------------------------------------------------------
# in-kernel helpers (f32 math; tanh/rsqrt/reciprocal run on the EUP)
# ---------------------------------------------------------------------------
def _gelu(x):
    # tanh-approximation GELU (torch nn.GELU defaults to exact erf).
    c = 0.7978845608028654  # sqrt(2/pi)
    return 0.5 * x * (1.0 + jnp.tanh(c * (x + 0.044715 * x * x * x)))


def _instance_norm(s, eps=1e-5):
    # InstanceNorm2d (affine-free) over a whole 2-D score plane, biased var.
    row_mu = jnp.mean(s, axis=-1, keepdims=True)
    mu = jnp.mean(row_mu, axis=0, keepdims=True)
    d = s - mu
    row_ms = jnp.mean(d * d, axis=-1, keepdims=True)
    var = jnp.mean(row_ms, axis=0, keepdims=True)
    return d * lax.rsqrt(var + eps)


def _softmax_lastdim(s):
    s = s - jnp.max(s, axis=-1, keepdims=True)
    e = jnp.exp(s)
    return e * pl.reciprocal(jnp.sum(e, axis=-1, keepdims=True), approx=True)


def _channel_layernorm(x, g, b, eps):
    # x: (C, n) f32 channel-major; LayerNorm over the channel axis (axis 0).
    mu = jnp.mean(x, axis=0, keepdims=True)
    d = x - mu
    var = jnp.mean(d * d, axis=0, keepdims=True)
    return d * lax.rsqrt(var + eps) * g + b


def _epilogue(attn_f32, en_res, g, b, w_mo, b_mo, eps):
    # residual add + encoder LayerNorm + map_out (1x1 conv) + GELU, channel-major
    x = attn_f32 + en_res.astype(jnp.float32)                     # (C, N)
    y = _channel_layernorm(x, g, b, eps)
    z = jnp.dot(w_mo, y.astype(jnp.bfloat16),
                preferred_element_type=jnp.float32) + b_mo        # (Cout, N)
    return _gelu(z)


# ---------------------------------------------------------------------------
# Kernel 1: map_in (1x1 conv) + GELU + attn LayerNorm + k_l2u/v_l2u memory
# projection, channel-major, tiled over (batch, token tile).
# ---------------------------------------------------------------------------
def _map_in_kv_kernel(x_ref, w_in_ref, b_in_ref, g_ref, be_ref, w_kv_ref,
                      en_ref, emb_ref, k_ref, v_ref, *, eps):
    x = x_ref[0].astype(jnp.bfloat16)                             # (Cin, tn)
    y = jnp.dot(w_in_ref[...], x, preferred_element_type=jnp.float32)  # (C, tn)
    y = _gelu(y + b_in_ref[...])
    en_ref[0] = y.astype(en_ref.dtype)                            # residual (pre-LN)
    emb = _channel_layernorm(y, g_ref[...], be_ref[...], eps)
    embb = emb.astype(jnp.bfloat16)
    emb_ref[0] = embb
    kv = jnp.dot(w_kv_ref[...], embb,
                 preferred_element_type=jnp.float32)               # (2*CH, tn)
    ch = k_ref.shape[1]
    k_ref[0] = kv[:ch].astype(k_ref.dtype)
    v_ref[0] = kv[ch:].astype(v_ref.dtype)


def map_in_ln_kv(x, w_inT, b_in, g, be, w_kvT, *, eps=1e-6):
    B, Cin, N = x.shape
    C = w_inT.shape[0]
    KV2 = w_kvT.shape[0]
    CH = KV2 // 2
    tn = _token_tile(N)
    bf = jnp.bfloat16
    return pl.pallas_call(
        functools.partial(_map_in_kv_kernel, eps=eps),
        grid=(B, N // tn),
        out_shape=(jax.ShapeDtypeStruct((B, C, N), bf),
                   jax.ShapeDtypeStruct((B, C, N), bf),
                   jax.ShapeDtypeStruct((B, CH, N), bf),
                   jax.ShapeDtypeStruct((B, CH, N), bf)),
        in_specs=[
            pl.BlockSpec((1, Cin, tn), lambda bi, t: (bi, 0, t)),
            pl.BlockSpec((C, Cin), lambda bi, t: (0, 0)),
            pl.BlockSpec((C, 1), lambda bi, t: (0, 0)),
            pl.BlockSpec((C, 1), lambda bi, t: (0, 0)),
            pl.BlockSpec((C, 1), lambda bi, t: (0, 0)),
            pl.BlockSpec((KV2, C), lambda bi, t: (0, 0)),
        ],
        out_specs=(pl.BlockSpec((1, C, tn), lambda bi, t: (bi, 0, t)),
                   pl.BlockSpec((1, C, tn), lambda bi, t: (bi, 0, t)),
                   pl.BlockSpec((1, CH, tn), lambda bi, t: (bi, 0, t)),
                   pl.BlockSpec((1, CH, tn), lambda bi, t: (bi, 0, t))),
        compiler_params=pltpu.CompilerParams(
            dimension_semantics=("parallel", "parallel")),
    )(x, w_inT, b_in, g, be, w_kvT)


# ---------------------------------------------------------------------------
# Kernel 2: self channel-attention (per batch element, head-fused) + fused
# residual / encoder-LN / map_out / GELU epilogue.  Channel-major throughout.
# ---------------------------------------------------------------------------
def _self_attn_kernel(emb_ref, en_ref, wqkv_ref, wout_ref, g_ref, be_ref,
                      wmo_ref, bmo_ref, o_ref, *, num_heads, head_dim, eps):
    x = emb_ref[0]                                                 # (C, N) bf16
    qkv = jnp.dot(wqkv_ref[...], x,
                  preferred_element_type=jnp.float32)              # (3*HC, N)
    hc = num_heads * head_dim
    outs = []
    for h_i in range(num_heads):
        lo = h_i * head_dim
        qh = qkv[lo:lo + head_dim].astype(jnp.bfloat16)             # (C, N)
        kh = qkv[hc + lo:hc + lo + head_dim].astype(jnp.bfloat16)
        vh = qkv[2 * hc + lo:2 * hc + lo + head_dim].astype(jnp.bfloat16)
        # scores s[c1, c2] = sum_n q[c1, n] k[c2, n]
        s = lax.dot_general(qh, kh, (((1,), (1,)), ((), ())),
                            preferred_element_type=jnp.float32)     # (C, C)
        p = _softmax_lastdim(_instance_norm(s)).astype(jnp.bfloat16)
        outs.append(jnp.dot(p, vh, preferred_element_type=jnp.float32))  # (C, N)
    z = jnp.concatenate(outs, axis=0).astype(jnp.bfloat16)          # (HC, N)
    attn = jnp.dot(wout_ref[...], z,
                   preferred_element_type=jnp.float32)               # (C, N)
    o_ref[0] = _epilogue(attn, en_ref[0], g_ref[...], be_ref[...],
                         wmo_ref[...], bmo_ref[...], eps).astype(o_ref.dtype)


def self_channel_attn_out(embT, enT, w_qkvT, w_outT, g, be, w_moT, b_mo, *,
                          eps=1e-6):
    B0, C, N = embT.shape
    hc = w_outT.shape[1]
    num_heads = hc // C
    Cout = w_moT.shape[0]
    return pl.pallas_call(
        functools.partial(_self_attn_kernel, num_heads=num_heads,
                          head_dim=C, eps=eps),
        grid=(B0,),
        out_shape=jax.ShapeDtypeStruct((B0, Cout, N), jnp.float32),
        in_specs=[
            pl.BlockSpec((1, C, N), lambda i: (i, 0, 0)),
            pl.BlockSpec((1, C, N), lambda i: (i, 0, 0)),
            pl.BlockSpec(w_qkvT.shape, lambda i: (0, 0)),
            pl.BlockSpec(w_outT.shape, lambda i: (0, 0)),
            pl.BlockSpec((C, 1), lambda i: (0, 0)),
            pl.BlockSpec((C, 1), lambda i: (0, 0)),
            pl.BlockSpec(w_moT.shape, lambda i: (0, 0)),
            pl.BlockSpec((Cout, 1), lambda i: (0, 0)),
        ],
        out_specs=pl.BlockSpec((1, Cout, N), lambda i: (i, 0, 0)),
        compiler_params=pltpu.CompilerParams(dimension_semantics=("parallel",)),
    )(embT, enT, w_qkvT, w_outT, g, be, w_moT, b_mo)


# ---------------------------------------------------------------------------
# Kernel 3: cross attention labeled -> unlabeled memory + fused epilogue.
# K/V memory is channel-major (B0*CH, N) so the 'b n c -> n (b c)' rearrange
# is a free contiguous reshape on the host.
# ---------------------------------------------------------------------------
def _cross_attn_kernel(emb_ref, en_ref, wq_ref, k_ref, v_ref, wout_ref,
                       g_ref, be_ref, wmo_ref, bmo_ref, o_ref, *, eps):
    x = emb_ref[0]                                                 # (C, N) bf16
    q = jnp.dot(wq_ref[...], x,
                preferred_element_type=jnp.float32).astype(jnp.bfloat16)  # (CH, N)
    s = lax.dot_general(q, k_ref[...], (((1,), (1,)), ((), ())),
                        preferred_element_type=jnp.float32)         # (CH, B0*CH)
    p = _softmax_lastdim(_instance_norm(s)).astype(jnp.bfloat16)
    z = jnp.dot(p, v_ref[...], preferred_element_type=jnp.float32)   # (CH, N)
    attn = jnp.dot(wout_ref[...], z.astype(jnp.bfloat16),
                   preferred_element_type=jnp.float32)                # (C, N)
    o_ref[0] = _epilogue(attn, en_ref[0], g_ref[...], be_ref[...],
                         wmo_ref[...], bmo_ref[...], eps).astype(o_ref.dtype)


def cross_attn_out(embT, enT, w_qT, k_mem, v_mem, w_outT, g, be, w_moT, b_mo,
                   *, eps=1e-6):
    B0, C, N = embT.shape
    CH = w_qT.shape[0]
    M = k_mem.shape[0]
    Cout = w_moT.shape[0]
    # TODO(synk): at production resolution the fully-resident K/V memory should
    # be streamed over a token-tile grid axis (two-phase s-accumulate / P@V) to
    # fit v7x's 64 MiB VMEM; full residency is fine at these shapes.
    return pl.pallas_call(
        functools.partial(_cross_attn_kernel, eps=eps),
        grid=(B0,),
        out_shape=jax.ShapeDtypeStruct((B0, Cout, N), jnp.float32),
        in_specs=[
            pl.BlockSpec((1, C, N), lambda i: (i, 0, 0)),
            pl.BlockSpec((1, C, N), lambda i: (i, 0, 0)),
            pl.BlockSpec((CH, C), lambda i: (0, 0)),
            pl.BlockSpec((M, N), lambda i: (0, 0)),
            pl.BlockSpec((M, N), lambda i: (0, 0)),
            pl.BlockSpec((C, CH), lambda i: (0, 0)),
            pl.BlockSpec((C, 1), lambda i: (0, 0)),
            pl.BlockSpec((C, 1), lambda i: (0, 0)),
            pl.BlockSpec(w_moT.shape, lambda i: (0, 0)),
            pl.BlockSpec((Cout, 1), lambda i: (0, 0)),
        ],
        out_specs=pl.BlockSpec((1, Cout, N), lambda i: (i, 0, 0)),
        compiler_params=pltpu.CompilerParams(dimension_semantics=("parallel",)),
    )(embT, enT, w_qT, k_mem, v_mem, w_outT, g, be, w_moT, b_mo)


# ---------------------------------------------------------------------------
# parameters (deterministic synthetic init, shapes from AllSpark.__init__),
# packed/transposed for the channel-major kernels.
# ---------------------------------------------------------------------------
def _xavier(key, shape):
    fan_in, fan_out = shape
    lim = (6.0 / (fan_in + fan_out)) ** 0.5
    return jax.random.uniform(key, shape, jnp.float32, -lim, lim)


def init_params(key, num_heads, embedding_channels, channel_num, channel_num_out):
    C, H = embedding_channels, num_heads
    CH = C * H
    bf = jnp.bfloat16
    ks = jax.random.split(key, 12)

    # token-major orientation weights (y = x @ W), then repack channel-major.
    w_q_u = _xavier(ks[2], (C, CH))
    w_k_u = _xavier(ks[3], (C, CH))
    w_v_u = _xavier(ks[4], (C, CH))
    w_out_u = _xavier(ks[5], (CH, C))
    w_q_l2u = _xavier(ks[6], (C, CH))
    w_k_l2u = _xavier(ks[7], (C, CH))
    w_v_l2u = _xavier(ks[8], (C, CH))
    w_out_l2u = _xavier(ks[9], (CH, C))

    # head-fused QKV for the self channel-attention: rows [q(HC) | k(HC) | v(HC)],
    # head h owns rows h*C:(h+1)*C within each block.
    w_qkv_uT = jnp.concatenate([w_q_u.T, w_k_u.T, w_v_u.T], axis=0)   # (3HC, C)
    # out_u: torch flatten order is row index c*H + h (permute(0,3,2,1));
    # repack so column h*C + c multiplies head-h/channel-c of the fused z.
    w_out_uT = w_out_u.reshape(C, H, C).transpose(1, 0, 2).reshape(CH, C).T  # (C, HC)
    # fused k_l2u|v_l2u projection (rows [k(CH) | v(CH)]).
    w_kv_l2uT = jnp.concatenate([w_k_l2u.T, w_v_l2u.T], axis=0)       # (2CH, C)

    return {
        # map_in: Conv2d(channel_num, C, 1) + GELU   (channel-major: y^T = W x^T)
        "w_inT": _xavier(ks[0], (C, channel_num)).astype(bf),
        "b_in": jax.random.normal(ks[1], (C, 1), jnp.float32) * 1e-6,
        # attn_norm / encoder_norm (LayerNorm, eps=1e-6)
        "ln_attn_g": jnp.ones((C, 1), jnp.float32),
        "ln_attn_b": jnp.zeros((C, 1), jnp.float32),
        "ln_enc_g": jnp.ones((C, 1), jnp.float32),
        "ln_enc_b": jnp.zeros((C, 1), jnp.float32),
        # CrossAttnMem linears (bias-free)
        "w_qkv_uT": w_qkv_uT.astype(bf),        # (3HC, C)
        "w_out_uT": w_out_uT.astype(bf),        # (C, HC)
        "w_q_l2uT": w_q_l2u.T.astype(bf),       # (CH, C)
        "w_kv_l2uT": w_kv_l2uT.astype(bf),      # (2CH, C)
        "w_out_l2uT": w_out_l2u.T.astype(bf),   # (C, CH)
        # map_out: Conv2d(C, channel_num_out, 1) + GELU
        "w_map_outT": _xavier(ks[10], (channel_num_out, C)).astype(bf),
        "b_out": jax.random.normal(ks[11], (channel_num_out, 1), jnp.float32) * 1e-6,
    }


# ---------------------------------------------------------------------------
# AllSpark forward (eval mode: dropout = identity, S-Mem branch not taken).
# The reference duplicates the batch; both halves are bit-identical, so the
# shared front-end runs once and is reused for the labeled / unlabeled paths.
# ---------------------------------------------------------------------------
@jax.jit
def _allspark_forward_full(params, en):
    B0, Cin, hh, ww = en.shape
    C = params["w_inT"].shape[0]
    CH = params["w_q_l2uT"].shape[0]
    Cout = params["w_map_outT"].shape[0]
    N = hh * ww

    x = en.reshape(B0, Cin, N)                 # channel-major tokens, no copy

    # map_in + GELU + attn LayerNorm + k/v_l2u memory projection (one kernel)
    enT, embT, kT, vT = map_in_ln_kv(
        x, params["w_inT"], params["b_in"],
        params["ln_attn_g"], params["ln_attn_b"],
        params["w_kv_l2uT"], eps=1e-6)

    # 'b n c -> n (b c)' equivalent is a contiguous reshape in this layout
    k_mem = kT.reshape(B0 * CH, N)
    v_mem = vT.reshape(B0 * CH, N)

    # unlabeled half: self channel-attention + fused epilogue -> (B0, Cout, N)
    out_u = self_channel_attn_out(embT, enT,
                                  params["w_qkv_uT"], params["w_out_uT"],
                                  params["ln_enc_g"], params["ln_enc_b"],
                                  params["w_map_outT"], params["b_out"],
                                  eps=1e-6)
    # labeled half: cross attention into the unlabeled memory + fused epilogue
    out_l = cross_attn_out(embT, enT, params["w_q_l2uT"], k_mem, v_mem,
                           params["w_out_l2uT"],
                           params["ln_enc_g"], params["ln_enc_b"],
                           params["w_map_outT"], params["b_out"], eps=1e-6)

    out = jnp.concatenate([out_l, out_u], axis=0)       # (2*B0, Cout, N) f32
    return out.reshape(2 * B0, Cout, hh, ww)            # already NCHW layout


def allspark_forward(params, en, pseudo_label, pseudo_prob_map, using_SMem=False):
    # TODO(synk): training-mode S-Mem FIFO enqueue (_dequeue_and_enqueue) and the
    #             bilinear pseudo_prob_map resize are training-only; the
    #             eval-mode forward is reproduced here.
    del pseudo_label, pseudo_prob_map, using_SMem
    B0 = en.shape[0]
    full = _allspark_forward_full(params, en)            # both halves computed
    return full[:B0]                                     # eval split (first half)


if __name__ == "__main__":
    num_heads = 2
    embedding_channels = 32
    channel_num = 4
    channel_num_out = 4
    num_class = 4
    patch_num = 64   # only used by the (training-only) S-Mem buffer

    key = jax.random.PRNGKey(0)
    kp, kx = jax.random.split(key)
    params = init_params(kp, num_heads, embedding_channels,
                         channel_num, channel_num_out)

    B0, h, w = 2, 16, 16
    en = jax.random.normal(kx, (B0, channel_num, h, w), jnp.float32)
    pseudo_label = jnp.zeros((B0, h, w), jnp.int32)                  # unused (eval)
    pseudo_prob_map = jnp.zeros((B0, num_class, h, w), jnp.float32)  # unused (eval)

    out = allspark_forward(params, en, pseudo_label, pseudo_prob_map)
    out = jax.block_until_ready(out)
    assert out.shape == (B0, channel_num_out, h, w)
    assert bool(jnp.isfinite(out).all())
    print("KERNEL_OK")
</pallas_src>

<mosaic_0001>
module attributes {stable_mosaic.version = 11 : i64} {
  func.func @_map_in_kv_kernel(%arg0: i32, %arg1: i32, %arg2: memref<1x4x256xf32, #tpu.memory_space<vmem>>, %arg3: memref<32x4xbf16, #tpu.memory_space<vmem>>, %arg4: memref<32x1xf32, #tpu.memory_space<vmem>>, %arg5: memref<32x1xf32, #tpu.memory_space<vmem>>, %arg6: memref<32x1xf32, #tpu.memory_space<vmem>>, %arg7: memref<128x32xbf16, #tpu.memory_space<vmem>>, %arg8: memref<1x32x256xbf16, #tpu.memory_space<vmem>>, %arg9: memref<1x32x256xbf16, #tpu.memory_space<vmem>>, %arg10: memref<1x64x256xbf16, #tpu.memory_space<vmem>>, %arg11: memref<1x64x256xbf16, #tpu.memory_space<vmem>>) attributes {dimension_semantics = [#tpu.dimension_semantics<parallel>, #tpu.dimension_semantics<parallel>], iteration_bounds = array<i64: 2, 1>, scalar_prefetch = 0 : i64, scratch_operands = 0 : i64, tpu.core_type = #tpu.core_type<tc>, window_params = [{transform_indices = @transform_0, window_bounds = array<i64: 1, 4, 256>}, {pipeline_mode = #tpu.pipeline_mode<synchronous>, transform_indices = @transform_1, window_bounds = array<i64: 32, 4>}, {pipeline_mode = #tpu.pipeline_mode<synchronous>, transform_indices = @transform_2, window_bounds = array<i64: 32, 1>}, {pipeline_mode = #tpu.pipeline_mode<synchronous>, transform_indices = @transform_3, window_bounds = array<i64: 32, 1>}, {pipeline_mode = #tpu.pipeline_mode<synchronous>, transform_indices = @transform_4, window_bounds = array<i64: 32, 1>}, {pipeline_mode = #tpu.pipeline_mode<synchronous>, transform_indices = @transform_5, window_bounds = array<i64: 128, 32>}, {transform_indices = @transform_6, window_bounds = array<i64: 1, 32, 256>}, {transform_indices = @transform_7, window_bounds = array<i64: 1, 32, 256>}, {transform_indices = @transform_8, window_bounds = array<i64: 1, 64, 256>}, {transform_indices = @transform_9, window_bounds = array<i64: 1, 64, 256>}]} {
    %c0 = arith.constant 0 : index
    %c0_0 = arith.constant 0 : index
    %c0_1 = arith.constant 0 : index
    %0 = vector.load %arg2[%c0, %c0_0, %c0_1] : memref<1x4x256xf32, #tpu.memory_space<vmem>>, vector<1x4x256xf32>
    %1 = vector.shape_cast %0 : vector<1x4x256xf32> to vector<4x256xf32>
    %2 = arith.truncf %1 : vector<4x256xf32> to vector<4x256xbf16>
    %c0_2 = arith.constant 0 : index
    %c0_3 = arith.constant 0 : index
    %3 = vector.load %arg3[%c0_2, %c0_3] : memref<32x4xbf16, #tpu.memory_space<vmem>>, vector<32x4xbf16>
    %cst = arith.constant dense<0.000000e+00> : vector<32x256xf32>
    %4 = tpu.matmul %3, %2, %cst {dimension_numbers = #tpu.dot_dimension_numbers<[1], [0], [0], [1], [0, 0, 1, 1], [], []>} : vector<32x4xbf16>, vector<4x256xbf16>, vector<32x256xf32> -> vector<32x256xf32>
    %c0_4 = arith.constant 0 : index
    %c0_5 = arith.constant 0 : index
    %5 = vector.load %arg4[%c0_4, %c0_5] : memref<32x1xf32, #tpu.memory_space<vmem>>, vector<32x1xf32>
    %6 = vector.broadcast %5 : vector<32x1xf32> to vector<32x256xf32>
    %7 = arith.addf %4, %6 : vector<32x256xf32>
    %cst_6 = arith.constant 5.000000e-01 : f32
    %8 = vector.broadcast %cst_6 : f32 to vector<32x256xf32>
    %9 = arith.mulf %8, %7 : vector<32x256xf32>
    %cst_7 = arith.constant 4.471500e-02 : f32
    %10 = vector.broadcast %cst_7 : f32 to vector<32x256xf32>
    %11 = arith.mulf %10, %7 : vector<32x256xf32>
    %12 = arith.mulf %11, %7 : vector<32x256xf32>
    %13 = arith.mulf %12, %7 : vector<32x256xf32>
    %14 = arith.addf %7, %13 : vector<32x256xf32>
    %cst_8 = arith.constant 0.797884583 : f32
    %15 = vector.broadcast %cst_8 : f32 to vector<32x256xf32>
    %16 = arith.mulf %15, %14 : vector<32x256xf32>
    %17 = math.tanh %16 : vector<32x256xf32>
    %cst_9 = arith.constant 1.000000e+00 : f32
    %18 = vector.broadcast %cst_9 : f32 to vector<32x256xf32>
    %19 = arith.addf %18, %17 : vector<32x256xf32>
    %20 = arith.mulf %9, %19 : vector<32x256xf32>
    %21 = arith.truncf %20 : vector<32x256xf32> to vector<32x256xbf16>
    %c0_10 = arith.constant 0 : index
    %c0_11 = arith.constant 0 : index
    %c0_12 = arith.constant 0 : index
    %22 = vector.load %arg8[%c0_10, %c0_11, %c0_12] : memref<1x32x256xbf16, #tpu.memory_space<vmem>>, vector<1x32x256xbf16>
    %23 = vector.shape_cast %22 : vector<1x32x256xbf16> to vector<32x256xbf16>
    %24 = vector.shape_cast %21 : vector<32x256xbf16> to vector<1x32x256xbf16>
    tpu.vector_store %arg8[%c0_10, %c0_11, %c0_12], %24 {strides = array<i32>} : memref<1x32x256xbf16, #tpu.memory_space<vmem>>, vector<1x32x256xbf16>,
    %c0_13 = arith.constant 0 : index
    %c0_14 = arith.constant 0 : index
    %25 = vector.load %arg5[%c0_13, %c0_14] : memref<32x1xf32, #tpu.memory_space<vmem>>, vector<32x1xf32>
    %c0_15 = arith.constant 0 : index
    %c0_16 = arith.constant 0 : index
    %26 = vector.load %arg6[%c0_15, %c0_16] : memref<32x1xf32, #tpu.memory_space<vmem>>, vector<32x1xf32>
    %cst_17 = arith.constant dense<0.000000e+00> : vector<256xf32>
    %27 = vector.multi_reduction <add>, %20, %cst_17 [0] : vector<32x256xf32> to vector<256xf32>
    %28 = vector.shape_cast %27 : vector<256xf32> to vector<1x256xf32>
    %cst_18 = arith.constant 3.200000e+01 : f32
    %29 = vector.broadcast %cst_18 : f32 to vector<1x256xf32>
    %30 = arith.divf %28, %29 : vector<1x256xf32>
    %31 = vector.broadcast %30 : vector<1x256xf32> to vector<32x256xf32>
    %32 = arith.subf %20, %31 : vector<32x256xf32>
    %33 = arith.mulf %32, %32 : vector<32x256xf32>
    %cst_19 = arith.constant dense<0.000000e+00> : vector<256xf32>
    %34 = vector.multi_reduction <add>, %33, %cst_19 [0] : vector<32x256xf32> to vector<256xf32>
    %35 = vector.shape_cast %34 : vector<256xf32> to vector<1x256xf32>
    %cst_20 = arith.constant 3.200000e+01 : f32
    %36 = vector.broadcast %cst_20 : f32 to vector<1x256xf32>
    %37 = arith.divf %35, %36 : vector<1x256xf32>
    %cst_21 = arith.constant 9.99999997E-7 : f32
    %38 = vector.broadcast %cst_21 : f32 to vector<1x256xf32>
    %39 = arith.addf %37, %38 : vector<1x256xf32>
    %40 = math.rsqrt %39 : vector<1x256xf32>
    %41 = vector.broadcast %40 : vector<1x256xf32> to vector<32x256xf32>
    %42 = arith.mulf %32, %41 : vector<32x256xf32>
    %43 = vector.broadcast %25 : vector<32x1xf32> to vector<32x256xf32>
    %44 = arith.mulf %42, %43 : vector<32x256xf32>
    %45 = vector.broadcast %26 : vector<32x1xf32> to vector<32x256xf32>
    %46 = arith.addf %44, %45 : vector<32x256xf32>
    %47 = arith.truncf %46 : vector<32x256xf32> to vector<32x256xbf16>
    %c0_22 = arith.constant 0 : index
    %c0_23 = arith.constant 0 : index
    %c0_24 = arith.constant 0 : index
    %48 = vector.load %arg9[%c0_22, %c0_23, %c0_24] : memref<1x32x256xbf16, #tpu.memory_space<vmem>>, vector<1x32x256xbf16>
    %49 = vector.shape_cast %48 : vector<1x32x256xbf16> to vector<32x256xbf16>
    %50 = vector.shape_cast %47 : vector<32x256xbf16> to vector<1x32x256xbf16>
    tpu.vector_store %arg9[%c0_22, %c0_23, %c0_24], %50 {strides = array<i32>} : memref<1x32x256xbf16, #tpu.memory_space<vmem>>, vector<1x32x256xbf16>,
    %c0_25 = arith.constant 0 : index
    %c0_26 = arith.constant 0 : index
    %51 = vector.load %arg7[%c0_25, %c0_26] : memref<128x32xbf16, #tpu.memory_space<vmem>>, vector<128x32xbf16>
    %cst_27 = arith.constant dense<0.000000e+00> : vector<128x256xf32>
    %52 = tpu.matmul %51, %47, %cst_27 {dimension_numbers = #tpu.dot_dimension_numbers<[1], [0], [0], [1], [0, 0, 1, 1], [], []>} : vector<128x32xbf16>, vector<32x256xbf16>, vector<128x256xf32> -> vector<128x256xf32>
    %53 = vector.extract_strided_slice %52 {offsets = [0, 0], sizes = [64, 256], strides = [1, 1]} : vector<128x256xf32> to vector<64x256xf32>
    %54 = arith.truncf %53 : vector<64x256xf32> to vector<64x256xbf16>
    %c0_28 = arith.constant 0 : index
    %c0_29 = arith.constant 0 : index
    %c0_30 = arith.constant 0 : index
    %55 = vector.load %arg10[%c0_28, %c0_29, %c0_30] : memref<1x64x256xbf16, #tpu.memory_space<vmem>>, vector<1x64x256xbf16>
    %56 = vector.shape_cast %55 : vector<1x64x256xbf16> to vector<64x256xbf16>
    %57 = vector.shape_cast %54 : vector<64x256xbf16> to vector<1x64x256xbf16>
    tpu.vector_store %arg10[%c0_28, %c0_29, %c0_30], %57 {strides = array<i32>} : memref<1x64x256xbf16, #tpu.memory_space<vmem>>, vector<1x64x256xbf16>,
    %58 = vector.extract_strided_slice %52 {offsets = [64, 0], sizes = [64, 256], strides = [1, 1]} : vector<128x256xf32> to vector<64x256xf32>
    %59 = arith.truncf %58 : vector<64x256xf32> to vector<64x256xbf16>
    %c0_31 = arith.constant 0 : index
    %c0_32 = arith.constant 0 : index
    %c0_33 = arith.constant 0 : index
    %60 = vector.load %arg11[%c0_31, %c0_32, %c0_33] : memref<1x64x256xbf16, #tpu.memory_space<vmem>>, vector<1x64x256xbf16>
    %61 = vector.shape_cast %60 : vector<1x64x256xbf16> to vector<64x256xbf16>
    %62 = vector.shape_cast %59 : vector<64x256xbf16> to vector<1x64x256xbf16>
    tpu.vector_store %arg11[%c0_31, %c0_32, %c0_33], %62 {strides = array<i32>} : memref<1x64x256xbf16, #tpu.memory_space<vmem>>, vector<1x64x256xbf16>,
    return
  }
  func.func @transform_0(%arg0: i32, %arg1: i32) -> (i32, i32, i32) {
    %c0_i32 = arith.constant 0 : i32
    %c0_i32_0 = arith.constant 0 : i32
    return %arg0, %c0_i32, %arg1 : i32, i32, i32
  }
  func.func @transform_1(%arg0: i32, %arg1: i32) -> (i32, i32) {
    %c0_i32 = arith.constant 0 : i32
    %c0_i32_0 = arith.constant 0 : i32
    %c0_i32_1 = arith.constant 0 : i32
    return %c0_i32, %c0_i32_0 : i32, i32
  }
  func.func @transform_2(%arg0: i32, %arg1: i32) -> (i32, i32) {
    %c0_i32 = arith.constant 0 : i32
    %c0_i32_0 = arith.constant 0 : i32
    %c0_i32_1 = arith.constant 0 : i32
    return %c0_i32, %c0_i32_0 : i32, i32
  }
  func.func @transform_3(%arg0: i32, %arg1: i32) -> (i32, i32) {
    %c0_i32 = arith.constant 0 : i32
    %c0_i32_0 = arith.constant 0 : i32
    %c0_i32_1 = arith.constant 0 : i32
    return %c0_i32, %c0_i32_0 : i32, i32
  }
  func.func @transform_4(%arg0: i32, %arg1: i32) -> (i32, i32) {
    %c0_i32 = arith.constant 0 : i32
    %c0_i32_0 = arith.constant 0 : i32
    %c0_i32_1 = arith.constant 0 : i32
    return %c0_i32, %c0_i32_0 : i32, i32
  }
  func.func @transform_5(%arg0: i32, %arg1: i32) -> (i32, i32) {
    %c0_i32 = arith.constant 0 : i32
    %c0_i32_0 = arith.constant 0 : i32
    %c0_i32_1 = arith.constant 0 : i32
    return %c0_i32, %c0_i32_0 : i32, i32
  }
  func.func @transform_6(%arg0: i32, %arg1: i32) -> (i32, i32, i32) {
    %c0_i32 = arith.constant 0 : i32
    %c0_i32_0 = arith.constant 0 : i32
    return %arg0, %c0_i32, %arg1 : i32, i32, i32
  }
  func.func @transform_7(%arg0: i32, %arg1: i32) -> (i32, i32, i32) {
    %c0_i32 = arith.constant 0 : i32
    %c0_i32_0 = arith.constant 0 : i32
    return %arg0, %c0_i32, %arg1 : i32, i32, i32
  }
  func.func @transform_8(%arg0: i32, %arg1: i32) -> (i32, i32, i32) {
    %c0_i32 = arith.constant 0 : i32
    %c0_i32_0 = arith.constant 0 : i32
    return %arg0, %c0_i32, %arg1 : i32, i32, i32
  }
  func.func @transform_9(%arg0: i32, %arg1: i32) -> (i32, i32, i32) {
    %c0_i32 = arith.constant 0 : i32
    %c0_i32_0 = arith.constant 0 : i32
    return %arg0, %c0_i32, %arg1 : i32, i32, i32
  }
}

module attributes {stable_mosaic.version = 11 : i64} {
  func.func @_cross_attn_kernel(%arg0: i32, %arg1: memref<1x32x256xbf16, #tpu.memory_space<vmem>>, %arg2: memref<1x32x256xbf16, #tpu.memory_space<vmem>>, %arg3: memref<64x32xbf16, #tpu.memory_space<vmem>>, %arg4: memref<128x256xbf16, #tpu.memory_space<vmem>>, %arg5: memref<128x256xbf16, #tpu.memory_space<vmem>>, %arg6: memref<32x64xbf16, #tpu.memory_space<vmem>>, %arg7: memref<32x1xf32, #tpu.memory_space<vmem>>, %arg8: memref<32x1xf32, #tpu.memory_space<vmem>>, %arg9: memref<4x32xbf16, #tpu.memory_space<vmem>>, %arg10: memref<4x1xf32, #tpu.memory_space<vmem>>, %arg11: memref<1x4x256xf32, #tpu.memory_space<vmem>>) attributes {dimension_semantics = [#tpu.dimension_semantics<parallel>], iteration_bounds = array<i64: 2>, scalar_prefetch = 0 : i64, scratch_operands = 0 : i64, tpu.core_type = #tpu.core_type<tc>, window_params = [{transform_indices = @transform_0, window_bounds = array<i64: 1, 32, 256>}, {transform_indices = @transform_1, window_bounds = array<i64: 1, 32, 256>}, {pipeline_mode = #tpu.pipeline_mode<synchronous>, transform_indices = @transform_2, window_bounds = array<i64: 64, 32>}, {pipeline_mode = #tpu.pipeline_mode<synchronous>, transform_indices = @transform_3, window_bounds = array<i64: 128, 256>}, {pipeline_mode = #tpu.pipeline_mode<synchronous>, transform_indices = @transform_4, window_bounds = array<i64: 128, 256>}, {pipeline_mode = #tpu.pipeline_mode<synchronous>, transform_indices = @transform_5, window_bounds = array<i64: 32, 64>}, {pipeline_mode = #tpu.pipeline_mode<synchronous>, transform_indices = @transform_6, window_bounds = array<i64: 32, 1>}, {pipeline_mode = #tpu.pipeline_mode<synchronous>, transform_indices = @transform_7, window_bounds = array<i64: 32, 1>}, {pipeline_mode = #tpu.pipeline_mode<synchronous>, transform_indices = @transform_8, window_bounds = array<i64: 4, 32>}, {pipeline_mode = #tpu.pipeline_mode<synchronous>, transform_indices = @transform_9, window_bounds = array<i64: 4, 1>}, {transform_indices = @transform_10, window_bounds = array<i64: 1, 4, 256>}]} {
    %c0 = arith.constant 0 : index
    %c0_0 = arith.constant 0 : index
    %c0_1 = arith.constant 0 : index
    %0 = vector.load %arg1[%c0, %c0_0, %c0_1] : memref<1x32x256xbf16, #tpu.memory_space<vmem>>, vector<1x32x256xbf16>
    %1 = vector.shape_cast %0 : vector<1x32x256xbf16> to vector<32x256xbf16>
    %c0_2 = arith.constant 0 : index
    %c0_3 = arith.constant 0 : index
    %2 = vector.load %arg3[%c0_2, %c0_3] : memref<64x32xbf16, #tpu.memory_space<vmem>>, vector<64x32xbf16>
    %cst = arith.constant dense<0.000000e+00> : vector<64x256xf32>
    %3 = tpu.matmul %2, %1, %cst {dimension_numbers = #tpu.dot_dimension_numbers<[1], [0], [0], [1], [0, 0, 1, 1], [], []>} : vector<64x32xbf16>, vector<32x256xbf16>, vector<64x256xf32> -> vector<64x256xf32>
    %4 = arith.truncf %3 : vector<64x256xf32> to vector<64x256xbf16>
    %c0_4 = arith.constant 0 : index
    %c0_5 = arith.constant 0 : index
    %5 = vector.load %arg4[%c0_4, %c0_5] : memref<128x256xbf16, #tpu.memory_space<vmem>>, vector<128x256xbf16>
    %cst_6 = arith.constant dense<0.000000e+00> : vector<64x128xf32>
    %6 = tpu.matmul %4, %5, %cst_6 {dimension_numbers = #tpu.dot_dimension_numbers<[1], [1], [0], [0], [0, 0, 1, 0], [], []>} : vector<64x256xbf16>, vector<128x256xbf16>, vector<64x128xf32> -> vector<64x128xf32>
    %cst_7 = arith.constant dense<0.000000e+00> : vector<64xf32>
    %7 = vector.multi_reduction <add>, %6, %cst_7 [1] : vector<64x128xf32> to vector<64xf32>
    %8 = vector.shape_cast %7 : vector<64xf32> to vector<64x1xf32>
    %cst_8 = arith.constant 1.280000e+02 : f32
    %9 = vector.broadcast %cst_8 : f32 to vector<64x1xf32>
    %10 = arith.divf %8, %9 : vector<64x1xf32>
    %cst_9 = arith.constant dense<0.000000e+00> : vector<1xf32>
    %11 = vector.multi_reduction <add>, %10, %cst_9 [0] : vector<64x1xf32> to vector<1xf32>
    %12 = vector.shape_cast %11 : vector<1xf32> to vector<1x1xf32>
    %cst_10 = arith.constant 6.400000e+01 : f32
    %13 = vector.broadcast %cst_10 : f32 to vector<1x1xf32>
    %14 = arith.divf %12, %13 : vector<1x1xf32>
    %15 = vector.broadcast %14 : vector<1x1xf32> to vector<64x128xf32>
    %16 = arith.subf %6, %15 : vector<64x128xf32>
    %17 = arith.mulf %16, %16 : vector<64x128xf32>
    %cst_11 = arith.constant dense<0.000000e+00> : vector<64xf32>
    %18 = vector.multi_reduction <add>, %17, %cst_11 [1] : vector<64x128xf32> to vector<64xf32>
    %19 = vector.shape_cast %18 : vector<64xf32> to vector<64x1xf32>
    %cst_12 = arith.constant 1.280000e+02 : f32
    %20 = vector.broadcast %cst_12 : f32 to vector<64x1xf32>
    %21 = arith.divf %19, %20 : vector<64x1xf32>
    %cst_13 = arith.constant dense<0.000000e+00> : vector<1xf32>
    %22 = vector.multi_reduction <add>, %21, %cst_13 [0] : vector<64x1xf32> to vector<1xf32>
    %23 = vector.shape_cast %22 : vector<1xf32> to vector<1x1xf32>
    %cst_14 = arith.constant 6.400000e+01 : f32
    %24 = vector.broadcast %cst_14 : f32 to vector<1x1xf32>
    %25 = arith.divf %23, %24 : vector<1x1xf32>
    %cst_15 = arith.constant 9.99999974E-6 : f32
    %26 = vector.broadcast %cst_15 : f32 to vector<1x1xf32>
    %27 = arith.addf %25, %26 : vector<1x1xf32>
    %28 = math.rsqrt %27 : vector<1x1xf32>
    %29 = vector.broadcast %28 : vector<1x1xf32> to vector<64x128xf32>
    %30 = arith.mulf %16, %29 : vector<64x128xf32>
    %cst_16 = arith.constant dense<0xFF800000> : vector<64xf32>
    %31 = vector.multi_reduction <maximumf>, %30, %cst_16 [1] : vector<64x128xf32> to vector<64xf32>
    %32 = vector.shape_cast %31 : vector<64xf32> to vector<64x1xf32>
    %33 = vector.broadcast %32 : vector<64x1xf32> to vector<64x128xf32>
    %34 = arith.subf %30, %33 : vector<64x128xf32>
    %35 = math.exp %34 : vector<64x128xf32>
    %cst_17 = arith.constant dense<0.000000e+00> : vector<64xf32>
    %36 = vector.multi_reduction <add>, %35, %cst_17 [1] : vector<64x128xf32> to vector<64xf32>
    %37 = vector.shape_cast %36 : vector<64xf32> to vector<64x1xf32>
    %38 = tpu.reciprocal %37 {approx = true} : vector<64x1xf32> -> vector<64x1xf32>
    %39 = vector.broadcast %38 : vector<64x1xf32> to vector<64x128xf32>
    %40 = arith.mulf %35, %39 : vector<64x128xf32>
    %41 = arith.truncf %40 : vector<64x128xf32> to vector<64x128xbf16>
    %c0_18 = arith.constant 0 : index
    %c0_19 = arith.constant 0 : index
    %42 = vector.load %arg5[%c0_18, %c0_19] : memref<128x256xbf16, #tpu.memory_space<vmem>>, vector<128x256xbf16>
    %cst_20 = arith.constant dense<0.000000e+00> : vector<64x256xf32>
    %43 = tpu.matmul %41, %42, %cst_20 {dimension_numbers = #tpu.dot_dimension_numbers<[1], [0], [0], [1], [0, 0, 1, 1], [], []>} : vector<64x128xbf16>, vector<128x256xbf16>, vector<64x256xf32> -> vector<64x256xf32>
    %c0_21 = arith.constant 0 : index
    %c0_22 = arith.constant 0 : index
    %44 = vector.load %arg6[%c0_21, %c0_22] : memref<32x64xbf16, #tpu.memory_space<vmem>>, vector<32x64xbf16>
    %45 = arith.truncf %43 : vector<64x256xf32> to vector<64x256xbf16>
    %cst_23 = arith.constant dense<0.000000e+00> : vector<32x256xf32>
    %46 = tpu.matmul %44, %45, %cst_23 {dimension_numbers = #tpu.dot_dimension_numbers<[1], [0], [0], [1], [0, 0, 1, 1], [], []>} : vector<32x64xbf16>, vector<64x256xbf16>, vector<32x256xf32> -> vector<32x256xf32>
    %c0_24 = arith.constant 0 : index
    %c0_25 = arith.constant 0 : index
    %c0_26 = arith.constant 0 : index
    %47 = vector.load %arg2[%c0_24, %c0_25, %c0_26] : memref<1x32x256xbf16, #tpu.memory_space<vmem>>, vector<1x32x256xbf16>
    %48 = vector.shape_cast %47 : vector<1x32x256xbf16> to vector<32x256xbf16>
    %c0_27 = arith.constant 0 : index
    %c0_28 = arith.constant 0 : index
    %49 = vector.load %arg7[%c0_27, %c0_28] : memref<32x1xf32, #tpu.memory_space<vmem>>, vector<32x1xf32>
    %c0_29 = arith.constant 0 : index
    %c0_30 = arith.constant 0 : index
    %50 = vector.load %arg8[%c0_29, %c0_30] : memref<32x1xf32, #tpu.memory_space<vmem>>, vector<32x1xf32>
    %c0_31 = arith.constant 0 : index
    %c0_32 = arith.constant 0 : index
    %51 = vector.load %arg9[%c0_31, %c0_32] : memref<4x32xbf16, #tpu.memory_space<vmem>>, vector<4x32xbf16>
    %c0_33 = arith.constant 0 : index
    %c0_34 = arith.constant 0 : index
    %52 = vector.load %arg10[%c0_33, %c0_34] : memref<4x1xf32, #tpu.memory_space<vmem>>, vector<4x1xf32>
    %53 = arith.extf %48 : vector<32x256xbf16> to vector<32x256xf32>
    %54 = arith.addf %46, %53 : vector<32x256xf32>
    %cst_35 = arith.constant dense<0.000000e+00> : vector<256xf32>
    %55 = vector.multi_reduction <add>, %54, %cst_35 [0] : vector<32x256xf32> to vector<256xf32>
    %56 = vector.shape_cast %55 : vector<256xf32> to vector<1x256xf32>
    %cst_36 = arith.constant 3.200000e+01 : f32
    %57 = vector.broadcast %cst_36 : f32 to vector<1x256xf32>
    %58 = arith.divf %56, %57 : vector<1x256xf32>
    %59 = vector.broadcast %58 : vector<1x256xf32> to vector<32x256xf32>
    %60 = arith.subf %54, %59 : vector<32x256xf32>
    %61 = arith.mulf %60, %60 : vector<32x256xf32>
    %cst_37 = arith.constant dense<0.000000e+00> : vector<256xf32>
    %62 = vector.multi_reduction <add>, %61, %cst_37 [0] : vector<32x256xf32> to vector<256xf32>
    %63 = vector.shape_cast %62 : vector<256xf32> to vector<1x256xf32>
    %cst_38 = arith.constant 3.200000e+01 : f32
    %64 = vector.broadcast %cst_38 : f32 to vector<1x256xf32>
    %65 = arith.divf %63, %64 : vector<1x256xf32>
    %cst_39 = arith.constant 9.99999997E-7 : f32
    %66 = vector.broadcast %cst_39 : f32 to vector<1x256xf32>
    %67 = arith.addf %65, %66 : vector<1x256xf32>
    %68 = math.rsqrt %67 : vector<1x256xf32>
    %69 = vector.broadcast %68 : vector<1x256xf32> to vector<32x256xf32>
    %70 = arith.mulf %60, %69 : vector<32x256xf32>
    %71 = vector.broadcast %49 : vector<32x1xf32> to vector<32x256xf32>
    %72 = arith.mulf %70, %71 : vector<32x256xf32>
    %73 = vector.broadcast %50 : vector<32x1xf32> to vector<32x256xf32>
    %74 = arith.addf %72, %73 : vector<32x256xf32>
    %75 = arith.truncf %74 : vector<32x256xf32> to vector<32x256xbf16>
    %cst_40 = arith.constant dense<0.000000e+00> : vector<4x256xf32>
    %76 = tpu.matmul %51, %75, %cst_40 {dimension_numbers = #tpu.dot_dimension_numbers<[1], [0], [0], [1], [0, 0, 1, 1], [], []>} : vector<4x32xbf16>, vector<32x256xbf16>, vector<4x256xf32> -> vector<4x256xf32>
    %77 = vector.broadcast %52 : vector<4x1xf32> to vector<4x256xf32>
    %78 = arith.addf %76, %77 : vector<4x256xf32>
    %cst_41 = arith.constant 5.000000e-01 : f32
    %79 = vector.broadcast %cst_41 : f32 to vector<4x256xf32>
    %80 = arith.mulf %79, %78 : vector<4x256xf32>
    %cst_42 = arith.constant 4.471500e-02 : f32
    %81 = vector.broadcast %cst_42 : f32 to vector<4x256xf32>
    %82 = arith.mulf %81, %78 : vector<4x256xf32>
    %83 = arith.mulf %82, %78 : vector<4x256xf32>
    %84 = arith.mulf %83, %78 : vector<4x256xf32>
    %85 = arith.addf %78, %84 : vector<4x256xf32>
    %cst_43 = arith.constant 0.797884583 : f32
    %86 = vector.broadcast %cst_43 : f32 to vector<4x256xf32>
    %87 = arith.mulf %86, %85 : vector<4x256xf32>
    %88 = math.tanh %87 : vector<4x256xf32>
    %cst_44 = arith.constant 1.000000e+00 : f32
    %89 = vector.broadcast %cst_44 : f32 to vector<4x256xf32>
    %90 = arith.addf %89, %88 : vector<4x256xf32>
    %91 = arith.mulf %80, %90 : vector<4x256xf32>
    %c0_45 = arith.constant 0 : index
    %c0_46 = arith.constant 0 : index
    %c0_47 = arith.constant 0 : index
    %92 = vector.load %arg11[%c0_45, %c0_46, %c0_47] : memref<1x4x256xf32, #tpu.memory_space<vmem>>, vector<1x4x256xf32>
    %93 = vector.shape_cast %92 : vector<1x4x256xf32> to vector<4x256xf32>
    %94 = vector.shape_cast %91 : vector<4x256xf32> to vector<1x4x256xf32>
    tpu.vector_store %arg11[%c0_45, %c0_46, %c0_47], %94 {strides = array<i32>} : memref<1x4x256xf32, #tpu.memory_space<vmem>>, vector<1x4x256xf32>,
    return
  }
  func.func @transform_0(%arg0: i32) -> (i32, i32, i32) {
    %c0_i32 = arith.constant 0 : i32
    %c0_i32_0 = arith.constant 0 : i32
    %c0_i32_1 = arith.constant 0 : i32
    return %arg0, %c0_i32, %c0_i32_0 : i32, i32, i32
  }
  func.func @transform_1(%arg0: i32) -> (i32, i32, i32) {
    %c0_i32 = arith.constant 0 : i32
    %c0_i32_0 = arith.constant 0 : i32
    %c0_i32_1 = arith.constant 0 : i32
    return %arg0, %c0_i32, %c0_i32_0 : i32, i32, i32
  }
  func.func @transform_2(%arg0: i32) -> (i32, i32) {
    %c0_i32 = arith.constant 0 : i32
    %c0_i32_0 = arith.constant 0 : i32
    %c0_i32_1 = arith.constant 0 : i32
    return %c0_i32, %c0_i32_0 : i32, i32
  }
  func.func @transform_3(%arg0: i32) -> (i32, i32) {
    %c0_i32 = arith.constant 0 : i32
    %c0_i32_0 = arith.constant 0 : i32
    %c0_i32_1 = arith.constant 0 : i32
    return %c0_i32, %c0_i32_0 : i32, i32
  }
  func.func @transform_4(%arg0: i32) -> (i32, i32) {
    %c0_i32 = arith.constant 0 : i32
    %c0_i32_0 = arith.constant 0 : i32
    %c0_i32_1 = arith.constant 0 : i32
    return %c0_i32, %c0_i32_0 : i32, i32
  }
  func.func @transform_5(%arg0: i32) -> (i32, i32) {
    %c0_i32 = arith.constant 0 : i32
    %c0_i32_0 = arith.constant 0 : i32
    %c0_i32_1 = arith.constant 0 : i32
    return %c0_i32, %c0_i32_0 : i32, i32
  }
  func.func @transform_6(%arg0: i32) -> (i32, i32) {
    %c0_i32 = arith.constant 0 : i32
    %c0_i32_0 = arith.constant 0 : i32
    %c0_i32_1 = arith.constant 0 : i32
    return %c0_i32, %c0_i32_0 : i32, i32
  }
  func.func @transform_7(%arg0: i32) -> (i32, i32) {
    %c0_i32 = arith.constant 0 : i32
    %c0_i32_0 = arith.constant 0 : i32
    %c0_i32_1 = arith.constant 0 : i32
    return %c0_i32, %c0_i32_0 : i32, i32
  }
  func.func @transform_8(%arg0: i32) -> (i32, i32) {
    %c0_i32 = arith.constant 0 : i32
    %c0_i32_0 = arith.constant 0 : i32
    %c0_i32_1 = arith.constant 0 : i32
    return %c0_i32, %c0_i32_0 : i32, i32
  }
  func.func @transform_9(%arg0: i32) -> (i32, i32) {
    %c0_i32 = arith.constant 0 : i32
    %c0_i32_0 = arith.constant 0 : i32
    %c0_i32_1 = arith.constant 0 : i32
    return %c0_i32, %c0_i32_0 : i32, i32
  }
  func.func @transform_10(%arg0: i32) -> (i32, i32, i32) {
    %c0_i32 = arith.constant 0 : i32
    %c0_i32_0 = arith.constant 0 : i32
    %c0_i32_1 = arith.constant 0 : i32
    return %arg0, %c0_i32, %c0_i32_0 : i32, i32, i32
  }
}

module attributes {stable_mosaic.version = 11 : i64} {
  func.func @_self_attn_kernel(%arg0: i32, %arg1: memref<1x32x256xbf16, #tpu.memory_space<vmem>>, %arg2: memref<1x32x256xbf16, #tpu.memory_space<vmem>>, %arg3: memref<192x32xbf16, #tpu.memory_space<vmem>>, %arg4: memref<32x64xbf16, #tpu.memory_space<vmem>>, %arg5: memref<32x1xf32, #tpu.memory_space<vmem>>, %arg6: memref<32x1xf32, #tpu.memory_space<vmem>>, %arg7: memref<4x32xbf16, #tpu.memory_space<vmem>>, %arg8: memref<4x1xf32, #tpu.memory_space<vmem>>, %arg9: memref<1x4x256xf32, #tpu.memory_space<vmem>>) attributes {dimension_semantics = [#tpu.dimension_semantics<parallel>], iteration_bounds = array<i64: 2>, scalar_prefetch = 0 : i64, scratch_operands = 0 : i64, tpu.core_type = #tpu.core_type<tc>, window_params = [{transform_indices = @transform_0, window_bounds = array<i64: 1, 32, 256>}, {transform_indices = @transform_1, window_bounds = array<i64: 1, 32, 256>}, {pipeline_mode = #tpu.pipeline_mode<synchronous>, transform_indices = @transform_2, window_bounds = array<i64: 192, 32>}, {pipeline_mode = #tpu.pipeline_mode<synchronous>, transform_indices = @transform_3, window_bounds = array<i64: 32, 64>}, {pipeline_mode = #tpu.pipeline_mode<synchronous>, transform_indices = @transform_4, window_bounds = array<i64: 32, 1>}, {pipeline_mode = #tpu.pipeline_mode<synchronous>, transform_indices = @transform_5, window_bounds = array<i64: 32, 1>}, {pipeline_mode = #tpu.pipeline_mode<synchronous>, transform_indices = @transform_6, window_bounds = array<i64: 4, 32>}, {pipeline_mode = #tpu.pipeline_mode<synchronous>, transform_indices = @transform_7, window_bounds = array<i64: 4, 1>}, {transform_indices = @transform_8, window_bounds = array<i64: 1, 4, 256>}]} {
    %c0 = arith.constant 0 : index
    %c0_0 = arith.constant 0 : index
    %c0_1 = arith.constant 0 : index
    %0 = vector.load %arg1[%c0, %c0_0, %c0_1] : memref<1x32x256xbf16, #tpu.memory_space<vmem>>, vector<1x32x256xbf16>
    %1 = vector.shape_cast %0 : vector<1x32x256xbf16> to vector<32x256xbf16>
    %c0_2 = arith.constant 0 : index
    %c0_3 = arith.constant 0 : index
    %2 = vector.load %arg3[%c0_2, %c0_3] : memref<192x32xbf16, #tpu.memory_space<vmem>>, vector<192x32xbf16>
    %cst = arith.constant dense<0.000000e+00> : vector<192x256xf32>
    %3 = tpu.matmul %2, %1, %cst {dimension_numbers = #tpu.dot_dimension_numbers<[1], [0], [0], [1], [0, 0, 1, 1], [], []>} : vector<192x32xbf16>, vector<32x256xbf16>, vector<192x256xf32> -> vector<192x256xf32>
    %4 = vector.extract_strided_slice %3 {offsets = [0, 0], sizes = [32, 256], strides = [1, 1]} : vector<192x256xf32> to vector<32x256xf32>
    %5 = arith.truncf %4 : vector<32x256xf32> to vector<32x256xbf16>
    %6 = vector.extract_strided_slice %3 {offsets = [64, 0], sizes = [32, 256], strides = [1, 1]} : vector<192x256xf32> to vector<32x256xf32>
    %7 = arith.truncf %6 : vector<32x256xf32> to vector<32x256xbf16>
    %8 = vector.extract_strided_slice %3 {offsets = [128, 0], sizes = [32, 256], strides = [1, 1]} : vector<192x256xf32> to vector<32x256xf32>
    %9 = arith.truncf %8 : vector<32x256xf32> to vector<32x256xbf16>
    %cst_4 = arith.constant dense<0.000000e+00> : vector<32x32xf32>
    %10 = tpu.matmul %5, %7, %cst_4 {dimension_numbers = #tpu.dot_dimension_numbers<[1], [1], [0], [0], [0, 0, 1, 0], [], []>} : vector<32x256xbf16>, vector<32x256xbf16>, vector<32x32xf32> -> vector<32x32xf32>
    %cst_5 = arith.constant dense<0.000000e+00> : vector<32xf32>
    %11 = vector.multi_reduction <add>, %10, %cst_5 [1] : vector<32x32xf32> to vector<32xf32>
    %12 = vector.shape_cast %11 : vector<32xf32> to vector<32x1xf32>
    %cst_6 = arith.constant 3.200000e+01 : f32
    %13 = vector.broadcast %cst_6 : f32 to vector<32x1xf32>
    %14 = arith.divf %12, %13 : vector<32x1xf32>
    %cst_7 = arith.constant dense<0.000000e+00> : vector<1xf32>
    %15 = vector.multi_reduction <add>, %14, %cst_7 [0] : vector<32x1xf32> to vector<1xf32>
    %16 = vector.shape_cast %15 : vector<1xf32> to vector<1x1xf32>
    %cst_8 = arith.constant 3.200000e+01 : f32
    %17 = vector.broadcast %cst_8 : f32 to vector<1x1xf32>
    %18 = arith.divf %16, %17 : vector<1x1xf32>
    %19 = vector.broadcast %18 : vector<1x1xf32> to vector<32x32xf32>
    %20 = arith.subf %10, %19 : vector<32x32xf32>
    %21 = arith.mulf %20, %20 : vector<32x32xf32>
    %cst_9 = arith.constant dense<0.000000e+00> : vector<32xf32>
    %22 = vector.multi_reduction <add>, %21, %cst_9 [1] : vector<32x32xf32> to vector<32xf32>
    %23 = vector.shape_cast %22 : vector<32xf32> to vector<32x1xf32>
    %cst_10 = arith.constant 3.200000e+01 : f32
    %24 = vector.broadcast %cst_10 : f32 to vector<32x1xf32>
    %25 = arith.divf %23, %24 : vector<32x1xf32>
    %cst_11 = arith.constant dense<0.000000e+00> : vector<1xf32>
    %26 = vector.multi_reduction <add>, %25, %cst_11 [0] : vector<32x1xf32> to vector<1xf32>
    %27 = vector.shape_cast %26 : vector<1xf32> to vector<1x1xf32>
    %cst_12 = arith.constant 3.200000e+01 : f32
    %28 = vector.broadcast %cst_12 : f32 to vector<1x1xf32>
    %29 = arith.divf %27, %28 : vector<1x1xf32>
    %cst_13 = arith.constant 9.99999974E-6 : f32
    %30 = vector.broadcast %cst_13 : f32 to vector<1x1xf32>
    %31 = arith.addf %29, %30 : vector<1x1xf32>
    %32 = math.rsqrt %31 : vector<1x1xf32>
    %33 = vector.broadcast %32 : vector<1x1xf32> to vector<32x32xf32>
    %34 = arith.mulf %20, %33 : vector<32x32xf32>
    %cst_14 = arith.constant dense<0xFF800000> : vector<32xf32>
    %35 = vector.multi_reduction <maximumf>, %34, %cst_14 [1] : vector<32x32xf32> to vector<32xf32>
    %36 = vector.shape_cast %35 : vector<32xf32> to vector<32x1xf32>
    %37 = vector.broadcast %36 : vector<32x1xf32> to vector<32x32xf32>
    %38 = arith.subf %34, %37 : vector<32x32xf32>
    %39 = math.exp %38 : vector<32x32xf32>
    %cst_15 = arith.constant dense<0.000000e+00> : vector<32xf32>
    %40 = vector.multi_reduction <add>, %39, %cst_15 [1] : vector<32x32xf32> to vector<32xf32>
    %41 = vector.shape_cast %40 : vector<32xf32> to vector<32x1xf32>
    %42 = tpu.reciprocal %41 {approx = true} : vector<32x1xf32> -> vector<32x1xf32>
    %43 = vector.broadcast %42 : vector<32x1xf32> to vector<32x32xf32>
    %44 = arith.mulf %39, %43 : vector<32x32xf32>
    %45 = arith.truncf %44 : vector<32x32xf32> to vector<32x32xbf16>
    %cst_16 = arith.constant dense<0.000000e+00> : vector<32x256xf32>
    %46 = tpu.matmul %45, %9, %cst_16 {dimension_numbers = #tpu.dot_dimension_numbers<[1], [0], [0], [1], [0, 0, 1, 1], [], []>} : vector<32x32xbf16>, vector<32x256xbf16>, vector<32x256xf32> -> vector<32x256xf32>
    %47 = vector.extract_strided_slice %3 {offsets = [32, 0], sizes = [32, 256], strides = [1, 1]} : vector<192x256xf32> to vector<32x256xf32>
    %48 = arith.truncf %47 : vector<32x256xf32> to vector<32x256xbf16>
    %49 = vector.extract_strided_slice %3 {offsets = [96, 0], sizes = [32, 256], strides = [1, 1]} : vector<192x256xf32> to vector<32x256xf32>
    %50 = arith.truncf %49 : vector<32x256xf32> to vector<32x256xbf16>
    %51 = vector.extract_strided_slice %3 {offsets = [160, 0], sizes = [32, 256], strides = [1, 1]} : vector<192x256xf32> to vector<32x256xf32>
    %52 = arith.truncf %51 : vector<32x256xf32> to vector<32x256xbf16>
    %cst_17 = arith.constant dense<0.000000e+00> : vector<32x32xf32>
    %53 = tpu.matmul %48, %50, %cst_17 {dimension_numbers = #tpu.dot_dimension_numbers<[1], [1], [0], [0], [0, 0, 1, 0], [], []>} : vector<32x256xbf16>, vector<32x256xbf16>, vector<32x32xf32> -> vector<32x32xf32>
    %cst_18 = arith.constant dense<0.000000e+00> : vector<32xf32>
    %54 = vector.multi_reduction <add>, %53, %cst_18 [1] : vector<32x32xf32> to vector<32xf32>
    %55 = vector.shape_cast %54 : vector<32xf32> to vector<32x1xf32>
    %cst_19 = arith.constant 3.200000e+01 : f32
    %56 = vector.broadcast %cst_19 : f32 to vector<32x1xf32>
    %57 = arith.divf %55, %56 : vector<32x1xf32>
    %cst_20 = arith.constant dense<0.000000e+00> : vector<1xf32>
    %58 = vector.multi_reduction <add>, %57, %cst_20 [0] : vector<32x1xf32> to vector<1xf32>
    %59 = vector.shape_cast %58 : vector<1xf32> to vector<1x1xf32>
    %cst_21 = arith.constant 3.200000e+01 : f32
    %60 = vector.broadcast %cst_21 : f32 to vector<1x1xf32>
    %61 = arith.divf %59, %60 : vector<1x1xf32>
    %62 = vector.broadcast %61 : vector<1x1xf32> to vector<32x32xf32>
    %63 = arith.subf %53, %62 : vector<32x32xf32>
    %64 = arith.mulf %63, %63 : vector<32x32xf32>
    %cst_22 = arith.constant dense<0.000000e+00> : vector<32xf32>
    %65 = vector.multi_reduction <add>, %64, %cst_22 [1] : vector<32x32xf32> to vector<32xf32>
    %66 = vector.shape_cast %65 : vector<32xf32> to vector<32x1xf32>
    %cst_23 = arith.constant 3.200000e+01 : f32
    %67 = vector.broadcast %cst_23 : f32 to vector<32x1xf32>
    %68 = arith.divf %66, %67 : vector<32x1xf32>
    %cst_24 = arith.constant dense<0.000000e+00> : vector<1xf32>
    %69 = vector.multi_reduction <add>, %68, %cst_24 [0] : vector<32x1xf32> to vector<1xf32>
    %70 = vector.shape_cast %69 : vector<1xf32> to vector<1x1xf32>
    %cst_25 = arith.constant 3.200000e+01 : f32
    %71 = vector.broadcast %cst_25 : f32 to vector<1x1xf32>
    %72 = arith.divf %70, %71 : vector<1x1xf32>
    %cst_26 = arith.constant 9.99999974E-6 : f32
    %73 = vector.broadcast %cst_26 : f32 to vector<1x1xf32>
    %74 = arith.addf %72, %73 : vector<1x1xf32>
    %75 = math.rsqrt %74 : vector<1x1xf32>
    %76 = vector.broadcast %75 : vector<1x1xf32> to vector<32x32xf32>
    %77 = arith.mulf %63, %76 : vector<32x32xf32>
    %cst_27 = arith.constant dense<0xFF800000> : vector<32xf32>
    %78 = vector.multi_reduction <maximumf>, %77, %cst_27 [1] : vector<32x32xf32> to vector<32xf32>
    %79 = vector.shape_cast %78 : vector<32xf32> to vector<32x1xf32>
    %80 = vector.broadcast %79 : vector<32x1xf32> to vector<32x32xf32>
    %81 = arith.subf %77, %80 : vector<32x32xf32>
    %82 = math.exp %81 : vector<32x32xf32>
    %cst_28 = arith.constant dense<0.000000e+00> : vector<32xf32>
    %83 = vector.multi_reduction <add>, %82, %cst_28 [1] : vector<32x32xf32> to vector<32xf32>
    %84 = vector.shape_cast %83 : vector<32xf32> to vector<32x1xf32>
    %85 = tpu.reciprocal %84 {approx = true} : vector<32x1xf32> -> vector<32x1xf32>
    %86 = vector.broadcast %85 : vector<32x1xf32> to vector<32x32xf32>
    %87 = arith.mulf %82, %86 : vector<32x32xf32>
    %88 = arith.truncf %87 : vector<32x32xf32> to vector<32x32xbf16>
    %cst_29 = arith.constant dense<0.000000e+00> : vector<32x256xf32>
    %89 = tpu.matmul %88, %52, %cst_29 {dimension_numbers = #tpu.dot_dimension_numbers<[1], [0], [0], [1], [0, 0, 1, 1], [], []>} : vector<32x32xbf16>, vector<32x256xbf16>, vector<32x256xf32> -> vector<32x256xf32>
    %90 = tpu.concatenate %46, %89 in 0 : vector<32x256xf32>, vector<32x256xf32> -> vector<64x256xf32>
    %91 = arith.truncf %90 : vector<64x256xf32> to vector<64x256xbf16>
    %c0_30 = arith.constant 0 : index
    %c0_31 = arith.constant 0 : index
    %92 = vector.load %arg4[%c0_30, %c0_31] : memref<32x64xbf16, #tpu.memory_space<vmem>>, vector<32x64xbf16>
    %cst_32 = arith.constant dense<0.000000e+00> : vector<32x256xf32>
    %93 = tpu.matmul %92, %91, %cst_32 {dimension_numbers = #tpu.dot_dimension_numbers<[1], [0], [0], [1], [0, 0, 1, 1], [], []>} : vector<32x64xbf16>, vector<64x256xbf16>, vector<32x256xf32> -> vector<32x256xf32>
    %c0_33 = arith.constant 0 : index
    %c0_34 = arith.constant 0 : index
    %c0_35 = arith.constant 0 : index
    %94 = vector.load %arg2[%c0_33, %c0_34, %c0_35] : memref<1x32x256xbf16, #tpu.memory_space<vmem>>, vector<1x32x256xbf16>
    %95 = vector.shape_cast %94 : vector<1x32x256xbf16> to vector<32x256xbf16>
    %c0_36 = arith.constant 0 : index
    %c0_37 = arith.constant 0 : index
    %96 = vector.load %arg5[%c0_36, %c0_37] : memref<32x1xf32, #tpu.memory_space<vmem>>, vector<32x1xf32>
    %c0_38 = arith.constant 0 : index
    %c0_39 = arith.constant 0 : index
    %97 = vector.load %arg6[%c0_38, %c0_39] : memref<32x1xf32, #tpu.memory_space<vmem>>, vector<32x1xf32>
    %c0_40 = arith.constant 0 : index
    %c0_41 = arith.constant 0 : index
    %98 = vector.load %arg7[%c0_40, %c0_41] : memref<4x32xbf16, #tpu.memory_space<vmem>>, vector<4x32xbf16>
    %c0_42 = arith.constant 0 : index
    %c0_43 = arith.constant 0 : index
    %99 = vector.load %arg8[%c0_42, %c0_43] : memref<4x1xf32, #tpu.memory_space<vmem>>, vector<4x1xf32>
    %100 = arith.extf %95 : vector<32x256xbf16> to vector<32x256xf32>
    %101 = arith.addf %93, %100 : vector<32x256xf32>
    %cst_44 = arith.constant dense<0.000000e+00> : vector<256xf32>
    %102 = vector.multi_reduction <add>, %101, %cst_44 [0] : vector<32x256xf32> to vector<256xf32>
    %103 = vector.shape_cast %102 : vector<256xf32> to vector<1x256xf32>
    %cst_45 = arith.constant 3.200000e+01 : f32
    %104 = vector.broadcast %cst_45 : f32 to vector<1x256xf32>
    %105 = arith.divf %103, %104 : vector<1x256xf32>
    %106 = vector.broadcast %105 : vector<1x256xf32> to vector<32x256xf32>
    %107 = arith.subf %101, %106 : vector<32x256xf32>
    %108 = arith.mulf %107, %107 : vector<32x256xf32>
    %cst_46 = arith.constant dense<0.000000e+00> : vector<256xf32>
    %109 = vector.multi_reduction <add>, %108, %cst_46 [0] : vector<32x256xf32> to vector<256xf32>
    %110 = vector.shape_cast %109 : vector<256xf32> to vector<1x256xf32>
    %cst_47 = arith.constant 3.200000e+01 : f32
    %111 = vector.broadcast %cst_47 : f32 to vector<1x256xf32>
    %112 = arith.divf %110, %111 : vector<1x256xf32>
    %cst_48 = arith.constant 9.99999997E-7 : f32
    %113 = vector.broadcast %cst_48 : f32 to vector<1x256xf32>
    %114 = arith.addf %112, %113 : vector<1x256xf32>
    %115 = math.rsqrt %114 : vector<1x256xf32>
    %116 = vector.broadcast %115 : vector<1x256xf32> to vector<32x256xf32>
    %117 = arith.mulf %107, %116 : vector<32x256xf32>
    %118 = vector.broadcast %96 : vector<32x1xf32> to vector<32x256xf32>
    %119 = arith.mulf %117, %118 : vector<32x256xf32>
    %120 = vector.broadcast %97 : vector<32x1xf32> to vector<32x256xf32>
    %121 = arith.addf %119, %120 : vector<32x256xf32>
    %122 = arith.truncf %121 : vector<32x256xf32> to vector<32x256xbf16>
    %cst_49 = arith.constant dense<0.000000e+00> : vector<4x256xf32>
    %123 = tpu.matmul %98, %122, %cst_49 {dimension_numbers = #tpu.dot_dimension_numbers<[1], [0], [0], [1], [0, 0, 1, 1], [], []>} : vector<4x32xbf16>, vector<32x256xbf16>, vector<4x256xf32> -> vector<4x256xf32>
    %124 = vector.broadcast %99 : vector<4x1xf32> to vector<4x256xf32>
    %125 = arith.addf %123, %124 : vector<4x256xf32>
    %cst_50 = arith.constant 5.000000e-01 : f32
    %126 = vector.broadcast %cst_50 : f32 to vector<4x256xf32>
    %127 = arith.mulf %126, %125 : vector<4x256xf32>
    %cst_51 = arith.constant 4.471500e-02 : f32
    %128 = vector.broadcast %cst_51 : f32 to vector<4x256xf32>
    %129 = arith.mulf %128, %125 : vector<4x256xf32>
    %130 = arith.mulf %129, %125 : vector<4x256xf32>
    %131 = arith.mulf %130, %125 : vector<4x256xf32>
    %132 = arith.addf %125, %131 : vector<4x256xf32>
    %cst_52 = arith.constant 0.797884583 : f32
    %133 = vector.broadcast %cst_52 : f32 to vector<4x256xf32>
    %134 = arith.mulf %133, %132 : vector<4x256xf32>
    %135 = math.tanh %134 : vector<4x256xf32>
    %cst_53 = arith.constant 1.000000e+00 : f32
    %136 = vector.broadcast %cst_53 : f32 to vector<4x256xf32>
    %137 = arith.addf %136, %135 : vector<4x256xf32>
    %138 = arith.mulf %127, %137 : vector<4x256xf32>
    %c0_54 = arith.constant 0 : index
    %c0_55 = arith.constant 0 : index
    %c0_56 = arith.constant 0 : index
    %139 = vector.load %arg9[%c0_54, %c0_55, %c0_56] : memref<1x4x256xf32, #tpu.memory_space<vmem>>, vector<1x4x256xf32>
    %140 = vector.shape_cast %139 : vector<1x4x256xf32> to vector<4x256xf32>
    %141 = vector.shape_cast %138 : vector<4x256xf32> to vector<1x4x256xf32>
    tpu.vector_store %arg9[%c0_54, %c0_55, %c0_56], %141 {strides = array<i32>} : memref<1x4x256xf32, #tpu.memory_space<vmem>>, vector<1x4x256xf32>,
    return
  }
  func.func @transform_0(%arg0: i32) -> (i32, i32, i32) {
    %c0_i32 = arith.constant 0 : i32
    %c0_i32_0 = arith.constant 0 : i32
    %c0_i32_1 = arith.constant 0 : i32
    return %arg0, %c0_i32, %c0_i32_0 : i32, i32, i32
  }
  func.func @transform_1(%arg0: i32) -> (i32, i32, i32) {
    %c0_i32 = arith.constant 0 : i32
    %c0_i32_0 = arith.constant 0 : i32
    %c0_i32_1 = arith.constant 0 : i32
    return %arg0, %c0_i32, %c0_i32_0 : i32, i32, i32
  }
  func.func @transform_2(%arg0: i32) -> (i32, i32) {
    %c0_i32 = arith.constant 0 : i32
    %c0_i32_0 = arith.constant 0 : i32
    %c0_i32_1 = arith.constant 0 : i32
    return %c0_i32, %c0_i32_0 : i32, i32
  }
  func.func @transform_3(%arg0: i32) -> (i32, i32) {
    %c0_i32 = arith.constant 0 : i32
    %c0_i32_0 = arith.constant 0 : i32
    %c0_i32_1 = arith.constant 0 : i32
    return %c0_i32, %c0_i32_0 : i32, i32
  }
  func.func @transform_4(%arg0: i32) -> (i32, i32) {
    %c0_i32 = arith.constant 0 : i32
    %c0_i32_0 = arith.constant 0 : i32
    %c0_i32_1 = arith.constant 0 : i32
    return %c0_i32, %c0_i32_0 : i32, i32
  }
  func.func @transform_5(%arg0: i32) -> (i32, i32) {
    %c0_i32 = arith.constant 0 : i32
    %c0_i32_0 = arith.constant 0 : i32
    %c0_i32_1 = arith.constant 0 : i32
    return %c0_i32, %c0_i32_0 : i32, i32
  }
  func.func @transform_6(%arg0: i32) -> (i32, i32) {
    %c0_i32 = arith.constant 0 : i32
    %c0_i32_0 = arith.constant 0 : i32
    %c0_i32_1 = arith.constant 0 : i32
    return %c0_i32, %c0_i32_0 : i32, i32
  }
  func.func @transform_7(%arg0: i32) -> (i32, i32) {
    %c0_i32 = arith.constant 0 : i32
    %c0_i32_0 = arith.constant 0 : i32
    %c0_i32_1 = arith.constant 0 : i32
    return %c0_i32, %c0_i32_0 : i32, i32
  }
  func.func @transform_8(%arg0: i32) -> (i32, i32, i32) {
    %c0_i32 = arith.constant 0 : i32
    %c0_i32_0 = arith.constant 0 : i32
    %c0_i32_1 = arith.constant 0 : i32
    return %arg0, %c0_i32, %c0_i32_0 : i32, i32, i32
  }
}

</mosaic_0001>

<llo_original>
// kernel: _allspark_forward_full.3
$region0: #{_allspark_forward_full.3}
  #allocation0 [shape = 'u32[]', space=smem, size = 0x4, offset = 0x4, fixed_abs, tag = 'smem constant byte address 0x4 - core index']
  #allocation1 [shape = 'u32[144,128]{1,0:T(1,128)}', space=vmem, size = 0x12000, scoped, tag = 'internal scratch']
  %s0 = inlined_call_operand.vmem [shape: f32[2,4,256], index: 0, kind: input, shape index: {}]
  %s1 = inlined_call_operand.vmem [shape: bf16[32,4], index: 1, kind: input, shape index: {}]
  %s2 = inlined_call_operand.vmem [shape: f32[32,1], index: 2, kind: input, shape index: {}]
  %s3 = inlined_call_operand.vmem [shape: f32[32,1], index: 3, kind: input, shape index: {}]
  %s4 = inlined_call_operand.vmem [shape: f32[32,1], index: 4, kind: input, shape index: {}]
  %s5 = inlined_call_operand.vmem [shape: bf16[128,32], index: 5, kind: input, shape index: {}]
  %s6 = inlined_call_operand.vmem [shape: bf16[2,32,256], index: 6, kind: output, shape index: {0}]
  %s7 = inlined_call_operand.vmem [shape: bf16[2,32,256], index: 7, kind: output, shape index: {1}]
  %s8 = inlined_call_operand.vmem [shape: bf16[2,64,256], index: 8, kind: output, shape index: {2}]
  %s9 = inlined_call_operand.vmem [shape: bf16[2,64,256], index: 9, kind: output, shape index: {3}]
  %10 = xla_tuple %s6, %s7, %s8, %s9
  %s11 = sld [smem:[#allocation0]]
  $region81: #{_allspark_forward_full.3} parent=0
    _
  %s13 = ssub.s32 1, %s11
  %s14 = scalar_select 0, %s13, %s11
  loop: start=0, step=1, limit=4
  $region2: #{_allspark_forward_full.3} parent=0 // loop_pre_header
    _
  $region3: #{_allspark_forward_full.3} parent=0 // loop_header
    %s16 = sphi 0, %s20
    %p17 = scmp.ge.s32.totalorder %s16, 4
    %s23 = sphi 0, %s35
    %s24 = sphi 0, %s31
    %s25 = sphi 0, %s23
    %s26 = sphi 0, %s24
    %s27 = sphi 0, %s25
    %s28 = sphi 0, %s26
    %s40 = sphi 0, %s42
    %s43 = sphi 0, %s40
    %s44 = sphi 0, %s43
    %s60 = sphi 0, %s44
    %s64 = sphi 0, %s64
    %s66 = sphi 0, %s64
    %s67 = sphi 0, %s66
    %s81 = sphi 0, %s67
    %s85 = sphi 0, %s85
    %s87 = sphi 0, %s85
    %s88 = sphi 0, %s87
    %s102 = sphi 0, %s88
    %s106 = sphi 0, %s106
    %s108 = sphi 0, %s106
    %s109 = sphi 0, %s108
    %s123 = sphi 0, %s109
    %s127 = sphi 0, %s127
    %s129 = sphi 0, %s127
    %s130 = sphi 0, %s129
    %s144 = sphi 0, %s130
    %s148 = sphi 0, %s148
    %s150 = sphi 0, %s148
    %s151 = sphi 0, %s150
    %s165 = sphi 0, %s151
    %s173 = sphi 0, %s175
    %s176 = sphi 0, %s173
    %s177 = sphi 0, %s176
    %s193 = sphi 0, %s177
    %s201 = sphi 0, %s203
    %s204 = sphi 0, %s201
    %s205 = sphi 0, %s204
    %s221 = sphi 0, %s205
    %s229 = sphi 0, %s231
    %s232 = sphi 0, %s229
    %s233 = sphi 0, %s232
    %s249 = sphi 0, %s233
    %s257 = sphi 0, %s259
    %s260 = sphi 0, %s257
    %s261 = sphi 0, %s260
    %s277 = sphi 0, %s261
  $region4: #{_allspark_forward_full.3} parent=0 // loop_header_branch
    %19 = sbr.rel (%p17) target = $region8
  $region5: #{_allspark_forward_full.3} parent=0 // loop_body
    %s21 = ssub.s32 %s16, 1
    %s22 = ssub.s32 %s16, 2
    %s29 = sadd.s32 1, %s24
    %p30 = scmp.ge.s32.totalorder %s29, 1
    %s31 = scalar_select %p30, 0, %s29
    %s32 = sadd.s32 1, %s23
    %s33 = scalar_select %p30, %s32, %s23
    %p34 = scmp.ge.s32.totalorder %s33, 2
    %s35 = scalar_select %p34, 0, %s33
    %s36 = ssub.s32 %s23, %s35
    %s37 = ssub.s32 %s24, %s31
    %s38 = sor.u32 %s36, %s37
    %p39 = scmp.eq.s32.totalorder %s38, 0
    %s41 = sadd.s32 %s40, 1
    %s42 = scalar_select %p39, %s40, %s41
    %p45 = pneg %p39
    %p46 = scmp.eq.s32.totalorder %s16, 1
    %p47 = por %p45, %p46
    %p48 = scmp.ne.s32.totalorder %s40, %s43
    %p49 = scmp.eq.s32.totalorder %s16, 0
    %p50 = por %p48, %p49
    %p51 = scmp.ne.s32.totalorder %s40, %s43
    %p52 = scmp.eq.s32.totalorder %s21, 1
    %p53 = por %p51, %p52
    %p54 = scmp.ne.s32.totalorder %s43, %s44
    %p55 = scmp.eq.s32.totalorder %s21, 0
    %p56 = por %p54, %p55
    %p57 = scmp.ne.s32.totalorder %s43, %s44
    %p58 = scmp.eq.s32.totalorder %s22, 1
    %p59 = por %p57, %p58
    %p61 = scmp.ne.s32.totalorder %s44, %s60
    %p62 = scmp.eq.s32.totalorder %s22, 0
    %p63 = por %p61, %p62
    %s65 = sadd.s32 %s64, 1
    %p68 = scmp.eq.s32.totalorder %s16, 1
    %p69 = scmp.ne.s32.totalorder %s64, %s66
    %p70 = scmp.eq.s32.totalorder %s16, 0
    %p71 = por %p69, %p70
    %p72 = scmp.ne.s32.totalorder %s64, %s66
    %p73 = scmp.eq.s32.totalorder %s21, 1
    %p74 = por %p72, %p73
    %p75 = scmp.ne.s32.totalorder %s66, %s67
    %p76 = scmp.eq.s32.totalorder %s21, 0
    %p77 = por %p75, %p76
    %p78 = scmp.ne.s32.totalorder %s66, %s67
    %p79 = scmp.eq.s32.totalorder %s22, 1
    %p80 = por %p78, %p79
    %p82 = scmp.ne.s32.totalorder %s67, %s81
    %p83 = scmp.eq.s32.totalorder %s22, 0
    %p84 = por %p82, %p83
    %s86 = sadd.s32 %s85, 1
    %p89 = scmp.eq.s32.totalorder %s16, 1
    %p90 = scmp.ne.s32.totalorder %s85, %s87
    %p91 = scmp.eq.s32.totalorder %s16, 0
    %p92 = por %p90, %p91
    %p93 = scmp.ne.s32.totalorder %s85, %s87
    %p94 = scmp.eq.s32.totalorder %s21, 1
    %p95 = por %p93, %p94
    %p96 = scmp.ne.s32.totalorder %s87, %s88
    %p97 = scmp.eq.s32.totalorder %s21, 0
    %p98 = por %p96, %p97
    %p99 = scmp.ne.s32.totalorder %s87, %s88
    %p100 = scmp.eq.s32.totalorder %s22, 1
    %p101 = por %p99, %p100
    %p103 = scmp.ne.s32.totalorder %s88, %s102
    %p104 = scmp.eq.s32.totalorder %s22, 0
    %p105 = por %p103, %p104
    %s107 = sadd.s32 %s106, 1
    %p110 = scmp.eq.s32.totalorder %s16, 1
    %p111 = scmp.ne.s32.totalorder %s106, %s108
    %p112 = scmp.eq.s32.totalorder %s16, 0
    %p113 = por %p111, %p112
    %p114 = scmp.ne.s32.totalorder %s106, %s108
    %p115 = scmp.eq.s32.totalorder %s21, 1
    %p116 = por %p114, %p115
    %p117 = scmp.ne.s32.totalorder %s108, %s109
    %p118 = scmp.eq.s32.totalorder %s21, 0
    %p119 = por %p117, %p118
    %p120 = scmp.ne.s32.totalorder %s108, %s109
    %p121 = scmp.eq.s32.totalorder %s22, 1
    %p122 = por %p120, %p121
    %p124 = scmp.ne.s32.totalorder %s109, %s123
    %p125 = scmp.eq.s32.totalorder %s22, 0
    %p126 = por %p124, %p125
    %s128 = sadd.s32 %s127, 1
    %p131 = scmp.eq.s32.totalorder %s16, 1
    %p132 = scmp.ne.s32.totalorder %s127, %s129
    %p133 = scmp.eq.s32.totalorder %s16, 0
    %p134 = por %p132, %p133
    %p135 = scmp.ne.s32.totalorder %s127, %s129
    %p136 = scmp.eq.s32.totalorder %s21, 1
    %p137 = por %p135, %p136
    %p138 = scmp.ne.s32.totalorder %s129, %s130
    %p139 = scmp.eq.s32.totalorder %s21, 0
    %p140 = por %p138, %p139
    %p141 = scmp.ne.s32.totalorder %s129, %s130
    %p142 = scmp.eq.s32.totalorder %s22, 1
    %p143 = por %p141, %p142
    %p145 = scmp.ne.s32.totalorder %s130, %s144
    %p146 = scmp.eq.s32.totalorder %s22, 0
    %p147 = por %p145, %p146
    %s149 = sadd.s32 %s148, 1
    %p152 = scmp.eq.s32.totalorder %s16, 1
    %p153 = scmp.ne.s32.totalorder %s148, %s150
    %p154 = scmp.eq.s32.totalorder %s16, 0
    %p155 = por %p153, %p154
    %p156 = scmp.ne.s32.totalorder %s148, %s150
    %p157 = scmp.eq.s32.totalorder %s21, 1
    %p158 = por %p156, %p157
    %p159 = scmp.ne.s32.totalorder %s150, %s151
    %p160 = scmp.eq.s32.totalorder %s21, 0
    %p161 = por %p159, %p160
    %p162 = scmp.ne.s32.totalorder %s150, %s151
    %p163 = scmp.eq.s32.totalorder %s22, 1
    %p164 = por %p162, %p163
    %p166 = scmp.ne.s32.totalorder %s151, %s165
    %p167 = scmp.eq.s32.totalorder %s22, 0
    %p168 = por %p166, %p167
    %s169 = ssub.s32 %s23, %s35
    %s170 = ssub.s32 %s24, %s31
    %s171 = sor.u32 %s169, %s170
    %p172 = scmp.eq.s32.totalorder %s171, 0
    %s174 = sadd.s32 %s173, 1
    %s175 = scalar_select %p172, %s173, %s174
    %p178 = pneg %p172
    %p179 = scmp.eq.s32.totalorder %s16, 1
    %p180 = por %p178, %p179
    %p181 = scmp.ne.s32.totalorder %s173, %s176
    %p182 = scmp.eq.s32.totalorder %s16, 0
    %p183 = por %p181, %p182
    %p184 = scmp.ne.s32.totalorder %s173, %s176
    %p185 = scmp.eq.s32.totalorder %s21, 1
    %p186 = por %p184, %p185
    %p187 = scmp.ne.s32.totalorder %s176, %s177
    %p188 = scmp.eq.s32.totalorder %s21, 0
    %p189 = por %p187, %p188
    %p190 = scmp.ne.s32.totalorder %s176, %s177
    %p191 = scmp.eq.s32.totalorder %s22, 1
    %p192 = por %p190, %p191
    %p194 = scmp.ne.s32.totalorder %s177, %s193
    %p195 = scmp.eq.s32.totalorder %s22, 0
    %p196 = por %p194, %p195
    %s197 = ssub.s32 %s23, %s35
    %s198 = ssub.s32 %s24, %s31
    %s199 = sor.u32 %s197, %s198
    %p200 = scmp.eq.s32.totalorder %s199, 0
    %s202 = sadd.s32 %s201, 1
    %s203 = scalar_select %p200, %s201, %s202
    %p206 = pneg %p200
    %p207 = scmp.eq.s32.totalorder %s16, 1
    %p208 = por %p206, %p207
    %p209 = scmp.ne.s32.totalorder %s201, %s204
    %p210 = scmp.eq.s32.totalorder %s16, 0
    %p211 = por %p209, %p210
    %p212 = scmp.ne.s32.totalorder %s201, %s204
    %p213 = scmp.eq.s32.totalorder %s21, 1
    %p214 = por %p212, %p213
    %p215 = scmp.ne.s32.totalorder %s204, %s205
    %p216 = scmp.eq.s32.totalorder %s21, 0
    %p217 = por %p215, %p216
    %p218 = scmp.ne.s32.totalorder %s204, %s205
    %p219 = scmp.eq.s32.totalorder %s22, 1
    %p220 = por %p218, %p219
    %p222 = scmp.ne.s32.totalorder %s205, %s221
    %p223 = scmp.eq.s32.totalorder %s22, 0
    %p224 = por %p222, %p223
    %s225 = ssub.s32 %s23, %s35
    %s226 = ssub.s32 %s24, %s31
    %s227 = sor.u32 %s225, %s226
    %p228 = scmp.eq.s32.totalorder %s227, 0
    %s230 = sadd.s32 %s229, 1
    %s231 = scalar_select %p228, %s229, %s230
    %p234 = pneg %p228
    %p235 = scmp.eq.s32.totalorder %s16, 1
    %p236 = por %p234, %p235
    %p237 = scmp.ne.s32.totalorder %s229, %s232
    %p238 = scmp.eq.s32.totalorder %s16, 0
    %p239 = por %p237, %p238
    %p240 = scmp.ne.s32.totalorder %s229, %s232
    %p241 = scmp.eq.s32.totalorder %s21, 1
    %p242 = por %p240, %p241
    %p243 = scmp.ne.s32.totalorder %s232, %s233
    %p244 = scmp.eq.s32.totalorder %s21, 0
    %p245 = por %p243, %p244
    %p246 = scmp.ne.s32.totalorder %s232, %s233
    %p247 = scmp.eq.s32.totalorder %s22, 1
    %p248 = por %p246, %p247
    %p250 = scmp.ne.s32.totalorder %s233, %s249
    %p251 = scmp.eq.s32.totalorder %s22, 0
    %p252 = por %p250, %p251
    %s253 = ssub.s32 %s23, %s35
    %s254 = ssub.s32 %s24, %s31
    %s255 = sor.u32 %s253, %s254
    %p256 = scmp.eq.s32.totalorder %s255, 0
    %s258 = sadd.s32 %s257, 1
    %s259 = scalar_select %p256, %s257, %s258
    %p262 = pneg %p256
    %p263 = scmp.eq.s32.totalorder %s16, 1
    %p264 = por %p262, %p263
    %p265 = scmp.ne.s32.totalorder %s257, %s260
    %p266 = scmp.eq.s32.totalorder %s16, 0
    %p267 = por %p265, %p266
    %p268 = scmp.ne.s32.totalorder %s257, %s260
    %p269 = scmp.eq.s32.totalorder %s21, 1
    %p270 = por %p268, %p269
    %p271 = scmp.ne.s32.totalorder %s260, %s261
    %p272 = scmp.eq.s32.totalorder %s21, 0
    %p273 = por %p271, %p272
    %p274 = scmp.ne.s32.totalorder %s260, %s261
    %p275 = scmp.eq.s32.totalorder %s22, 1
    %p276 = por %p274, %p275
    %p278 = scmp.ne.s32.totalorder %s261, %s277
    %p279 = scmp.eq.s32.totalorder %s22, 0
    %p280 = por %p278, %p279
    %p281 = scmp.le.s32.totalorder 1, %s16
    %p282 = scmp.lt.s32.totalorder %s16, 3
    %p283 = pnand %p281, %p282
    %p284 = pneg %p283
    // Predicated region
    $region9: #{_allspark_forward_full.3} parent=5 // pred_check
      _
    $region10: #{_allspark_forward_full.3} parent=5 // pred_check_branch
      %286 = sbr.rel (%p283) target = $region12
    $region11: #{_allspark_forward_full.3} parent=5 // pred_region
      %s287 = ssub.s32 %s16, 1
      // Predicated region
      $region13: #{_allspark_forward_full.3} parent=11 // pred_check
        %p288 = pneg %p77
      $region14: #{_allspark_forward_full.3} parent=11 // pred_check_branch
        %290 = sbr.rel (%p288) target = $region16
      $region15: #{_allspark_forward_full.3} parent=11 // pred_region
        _
      $region16: #{_allspark_forward_full.3} parent=11 // pred_fallthru
        _
      // Predicated region
      $region17: #{_allspark_forward_full.3} parent=11 // pred_check
        %p291 = pneg %p98
      $region18: #{_allspark_forward_full.3} parent=11 // pred_check_branch
        %293 = sbr.rel (%p291) target = $region20
      $region19: #{_allspark_forward_full.3} parent=11 // pred_region
        _
      $region20: #{_allspark_forward_full.3} parent=11 // pred_fallthru
        _
      // Predicated region
      $region21: #{_allspark_forward_full.3} parent=11 // pred_check
        %p294 = pneg %p119
      $region22: #{_allspark_forward_full.3} parent=11 // pred_check_branch
        %296 = sbr.rel (%p294) target = $region24
      $region23: #{_allspark_forward_full.3} parent=11 // pred_region
        _
      $region24: #{_allspark_forward_full.3} parent=11 // pred_fallthru
        _
      // Predicated region
      $region25: #{_allspark_forward_full.3} parent=11 // pred_check
        %p297 = pneg %p140
      $region26: #{_allspark_forward_full.3} parent=11 // pred_check_branch
        %299 = sbr.rel (%p297) target = $region28
      $region27: #{_allspark_forward_full.3} parent=11 // pred_region
        _
      $region28: #{_allspark_forward_full.3} parent=11 // pred_fallthru
        _
      // Predicated region
      $region29: #{_allspark_forward_full.3} parent=11 // pred_check
        %p300 = pneg %p161
      $region30: #{_allspark_forward_full.3} parent=11 // pred_check_branch
        %302 = sbr.rel (%p300) target = $region32
      $region31: #{_allspark_forward_full.3} parent=11 // pred_region
        _
      $region32: #{_allspark_forward_full.3} parent=11 // pred_fallthru
        _
    $region12: #{_allspark_forward_full.3} parent=5 // pred_fallthru
      _
    %p303 = scmp.lt.s32.totalorder %s16, 2
    // Predicated region
    $region33: #{_allspark_forward_full.3} parent=5 // pred_check
      %p304 = pneg %p303
    $region34: #{_allspark_forward_full.3} parent=5 // pred_check_branch
      %306 = sbr.rel (%p304) target = $region36
    $region35: #{_allspark_forward_full.3} parent=5 // pred_region
      // Predicated region
      $region37: #{_allspark_forward_full.3} parent=35 // pred_check
        %p307 = pneg %p50
      $region38: #{_allspark_forward_full.3} parent=35 // pred_check_branch
        %309 = sbr.rel (%p307) target = $region40
      $region39: #{_allspark_forward_full.3} parent=35 // pred_region
        %s310 = smul.u32 2, %s24
        %p311 = scmp.lt.s32.totalorder %s23, 1
        %s312 = scalar_select %p311, %s23, 1
        %p313 = scmp.lt.s32.totalorder %s310, 1
        %s314 = scalar_select %p313, %s310, 1
        %s315 = smul.addr %s312, 2
        %s316 = sadd.s32 %s314, %s315
        %s317 = smul.addr %s316, 4
        %s318 = scalar_lea.vmem %s0, %s317
        %s319 = smul.u32 2, %s24
      $region40: #{_allspark_forward_full.3} parent=35 // pred_fallthru
        _
    $region36: #{_allspark_forward_full.3} parent=5 // pred_fallthru
      _
    %p320 = scmp.le.s32.totalorder 1, %s16
    %p321 = scmp.lt.s32.totalorder %s16, 3
    %p322 = pnand %p320, %p321
    %p323 = pneg %p322
    // Predicated region
    $region41: #{_allspark_forward_full.3} parent=5 // pred_check
      _
    $region42: #{_allspark_forward_full.3} parent=5 // pred_check_branch
      %325 = sbr.rel (%p322) target = $region44
    $region43: #{_allspark_forward_full.3} parent=5 // pred_region
      %s326 = ssub.s32 %s16, 1
      %s327 = smul.u32 2, %s26
      %p328 = scmp.lt.s32.totalorder %s25, 1
      %s329 = scalar_select %p328, %s25, 1
      %p330 = scmp.lt.s32.totalorder %s327, 1
      %s331 = scalar_select %p330, %s327, 1
      %s332 = smul.addr %s329, 2
      %s333 = sadd.s32 %s331, %s332
      %s334 = smul.addr %s333, 4
      %s335 = scalar_lea.vmem %s0, %s334
      %p336 = pneg %p56
      %p337 = pneg %p53
      %p338 = pneg %p77
      %p339 = pneg %p74
      %p340 = pneg %p98
      %p341 = pneg %p95
      %p342 = pneg %p119
      %p343 = pneg %p116
      %p344 = pneg %p140
      %p345 = pneg %p137
      %p346 = pneg %p161
      %p347 = pneg %p158
      %p348 = pneg %p189
      %p349 = pneg %p186
      %s350 = smul.u32 2, %s26
      %p351 = scmp.lt.s32.totalorder %s25, 1
      %s352 = scalar_select %p351, %s25, 1
      %p353 = scmp.lt.s32.totalorder %s350, 1
      %s354 = scalar_select %p353, %s350, 1
      %s355 = smul.addr %s352, 8
      %s356 = sadd.s32 %s354, %s355
      %s357 = smul.addr %s356, 4
      %s358 = scalar_lea.vmem %s6, %s357
      %p359 = pneg %p217
      %p360 = pneg %p214
      %s361 = smul.u32 2, %s26
      %p362 = scmp.lt.s32.totalorder %s25, 1
      %s363 = scalar_select %p362, %s25, 1
      %p364 = scmp.lt.s32.totalorder %s361, 1
      %s365 = scalar_select %p364, %s361, 1
      %s366 = smul.addr %s363, 8
      %s367 = sadd.s32 %s365, %s366
      %s368 = smul.addr %s367, 4
      %s369 = scalar_lea.vmem %s7, %s368
      %p370 = pneg %p245
      %p371 = pneg %p242
      %s372 = smul.u32 2, %s26
      %p373 = scmp.lt.s32.totalorder %s25, 1
      %s374 = scalar_select %p373, %s25, 1
      %p375 = scmp.lt.s32.totalorder %s372, 1
      %s376 = scalar_select %p375, %s372, 1
      %s377 = smul.addr %s374, 16
      %s378 = sadd.s32 %s376, %s377
      %s379 = smul.addr %s378, 4
      %s380 = scalar_lea.vmem %s8, %s379
      %p381 = pneg %p273
      %p382 = pneg %p270
      %s383 = smul.u32 2, %s26
      %p384 = scmp.lt.s32.totalorder %s25, 1
      %s385 = scalar_select %p384, %s25, 1
      %p386 = scmp.lt.s32.totalorder %s383, 1
      %s387 = scalar_select %p386, %s383, 1
      %s388 = smul.addr %s385, 16
      %s389 = sadd.s32 %s387, %s388
      %s390 = smul.addr %s389, 4
      %s391 = scalar_lea.vmem %s9, %s390
      %s392 = smul.u32 2, %s26
      %p393 = scmp.lt.s32.totalorder %s25, 1
      %s394 = scalar_select %p393, %s25, 1
      %p395 = scmp.lt.s32.totalorder %s392, 1
      %s396 = scalar_select %p395, %s392, 1
      %s397 = smul.addr %s394, 2
      %s398 = sadd.s32 %s396, %s397
      %s399 = smul.addr %s398, 4
      %s400 = scalar_lea.vmem %s0, %s399
      %s401 = smul.u32 2, %s26
      %s402 = smul.u32 2, %s26
      %p403 = scmp.lt.s32.totalorder %s25, 1
      %s404 = scalar_select %p403, %s25, 1
      %p405 = scmp.lt.s32.totalorder %s402, 1
      %s406 = scalar_select %p405, %s402, 1
      %s407 = smul.addr %s404, 8
      %s408 = sadd.s32 %s406, %s407
      %s409 = smul.addr %s408, 4
      %s410 = scalar_lea.vmem %s6, %s409
      %s411 = smul.u32 2, %s26
      %s412 = smul.u32 2, %s26
      %p413 = scmp.lt.s32.totalorder %s25, 1
      %s414 = scalar_select %p413, %s25, 1
      %p415 = scmp.lt.s32.totalorder %s412, 1
      %s416 = scalar_select %p415, %s412, 1
      %s417 = smul.addr %s414, 8
      %s418 = sadd.s32 %s416, %s417
      %s419 = smul.addr %s418, 4
      %s420 = scalar_lea.vmem %s7, %s419
      %s421 = smul.u32 2, %s26
      %s422 = smul.u32 2, %s26
      %p423 = scmp.lt.s32.totalorder %s25, 1
      %s424 = scalar_select %p423, %s25, 1
      %p425 = scmp.lt.s32.totalorder %s422, 1
      %s426 = scalar_select %p425, %s422, 1
      %s427 = smul.addr %s424, 16
      %s428 = sadd.s32 %s426, %s427
      %s429 = smul.addr %s428, 4
      %s430 = scalar_lea.vmem %s8, %s429
      %s431 = smul.u32 2, %s26
      %s432 = smul.u32 2, %s26
      %p433 = scmp.lt.s32.totalorder %s25, 1
      %s434 = scalar_select %p433, %s25, 1
      %p435 = scmp.lt.s32.totalorder %s432, 1
      %s436 = scalar_select %p435, %s432, 1
      %s437 = smul.addr %s434, 16
      %s438 = sadd.s32 %s436, %s437
      %s439 = smul.addr %s438, 4
      %s440 = scalar_lea.vmem %s9, %s439
      %s441 = smul.u32 2, %s26
      %v443 = vld [vmem:[%s400] sm:$0xff]
      %v445 = vcombine.high %v443, %v443
      %v447 = vpack.c.bf16 %v443, %v443
      %v448 = vpack.c.bf16 %v445, %v445
      %v449 = vld [vmem:[%s1] sm:$0xf]
      %v450 = vld [vmem:[%s1 + $0x4] sm:$0xf]
      %v451 = vld [vmem:[%s1 + $0x8] sm:$0xf]
      %v452 = vld [vmem:[%s1 + $0xc] sm:$0xf]
      %v453 = vld [vmem:[%s2] sm:$0xff]
      %v454 = vld [vmem:[%s2 + $0x8] sm:$0xff]
      %v455 = vld [vmem:[%s2 + $0x10] sm:$0xff]
      %v456 = vld [vmem:[%s2 + $0x18] sm:$0xff]
      %458 = vset.pattern.permute.xlu0 0
      %459 = vperm.xlu0 %458, %v453
      %v460 = vpop.permute.xlu0 %459
      %463 = vset.pattern.permute.xlu0 0
      %464 = vperm.xlu0 %463, %v454
      %v465 = vpop.permute.xlu0 %464
      %468 = vset.pattern.permute.xlu0 0
      %469 = vperm.xlu0 %468, %v455
      %v470 = vpop.permute.xlu0 %469
      %473 = vset.pattern.permute.xlu0 0
      %474 = vperm.xlu0 %473, %v456
      %v475 = vpop.permute.xlu0 %474
      %v481 = vunpack.c.l.b16 %v449
      %v482 = vunpack.c.l.b16 %v450
      %v483 = vunpack.c.l.b16 %v451
      %v484 = vunpack.c.l.b16 %v452
      %v485 = vpack.c.b16 %v482, %v481
      %v486 = vpack.c.b16 %v484, %v483
      %vm487 = vcmask 31744
      %v489 = vsel %vm487, %v485, 0
      %v492 = vsel %vm487, %v486, 0
      %vm494 = vcmask 1041408
      %v496 = vsel %vm494, %v447, 0
      %v499 = vsel %vm494, %v448, 0
      %501 = vmatprep.subr.bf16.mxu0 %v499
      %502 = vmatpush1.bf16.msra.mxu0 %v496
      %503 = vmatprep.subr.bf16.mxu0 0
      %504 = vmatpush1.bf16.msra.mxu0 0
      %505 = vmatprep.subr.bf16.mxu0 0
      %506 = vmatpush1.bf16.msra.mxu0 0
      %507 = vmatprep.subr.bf16.mxu0 0
      %508 = vmatpush1.bf16.msra.mxu0 0
      %509 = vmatprep.subr.bf16.mxu0 0
      %510 = vmatpush1.bf16.msra.mxu0 0
      %511 = vmatprep.subr.bf16.mxu0 0
      %512 = vmatpush1.bf16.msra.mxu0 0
      %513 = vmatprep.subr.bf16.mxu0 0
      %514 = vmatpush1.bf16.msra.mxu0 0
      %515 = vmatprep.subr.bf16.mxu0 0
      %516 = vmatpush1.bf16.msra.mxu0 0
      %517 = vmatprep.subr.bf16.mxu0 0
      %518 = vmatpush1.bf16.msra.mxu0 0
      %519 = vmatprep.subr.bf16.mxu0 0
      %520 = vmatpush1.bf16.msra.mxu0 0
      %521 = vmatprep.subr.bf16.mxu0 0
      %522 = vmatpush1.bf16.msra.mxu0 0
      %523 = vmatprep.subr.bf16.mxu0 0
      %524 = vmatpush1.bf16.msra.mxu0 0
      %525 = vmatprep.subr.bf16.mxu0 0
      %526 = vmatpush1.bf16.msra.mxu0 0
      %527 = vmatprep.subr.bf16.mxu0 0
      %528 = vmatpush1.bf16.msra.mxu0 0
      %529 = vmatprep.subr.bf16.mxu0 0
      %530 = vmatpush1.bf16.msra.mxu0 0
      %531 = vmatprep.subr.bf16.mxu0 0
      %532 = vmatpush1.bf16.msra.mxu0 0
      %533 = vmatprep.mubr.bf16.mxu0 0
      %534 = vmatmul.mubr.bf16.gmra.mrb[0].mxu0 %v489
      %v535 = vpop.f32.mrb[0].mxu0
      %v536 = vadd.f32 %v460, %v535
      %v537 = vpop.f32.mrb[0].mxu0
      %v538 = vadd.f32 %v460, %v537
      %v539 = vpop.f32.mrb[0].mxu0
      %v540 = vadd.f32 %v465, %v539
      %v541 = vpop.f32.mrb[0].mxu0
      %v542 = vadd.f32 %v465, %v541
      %543 = vmatprep.mubr.bf16.mxu0 0
      %544 = vmatmul.mubr.bf16.gmra.mrb[0].mxu0 %v492
      %v545 = vpop.f32.mrb[0].mxu0
      %v546 = vadd.f32 %v470, %v545
      %v547 = vpop.f32.mrb[0].mxu0
      %v548 = vadd.f32 %v470, %v547
      %v549 = vpop.f32.mrb[0].mxu0
      %v550 = vadd.f32 %v475, %v549
      %v551 = vpop.f32.mrb[0].mxu0
      %v552 = vadd.f32 %v475, %v551
      %553 = vdwg.mxu0
      %v554 = vmul.f32 %v536, 0.5
      %v555 = vmul.f32 %v538, 0.5
      %v556 = vmul.f32 %v540, 0.5
      %v557 = vmul.f32 %v542, 0.5
      %v558 = vmul.f32 %v546, 0.5
      %v559 = vmul.f32 %v548, 0.5
      %v560 = vmul.f32 %v550, 0.5
      %v561 = vmul.f32 %v552, 0.5
      %v562 = vmul.f32 %v536, 0.044715
      %v563 = vmul.f32 %v538, 0.044715
      %v564 = vmul.f32 %v540, 0.044715
      %v565 = vmul.f32 %v542, 0.044715
      %v566 = vmul.f32 %v546, 0.044715
      %v567 = vmul.f32 %v548, 0.044715
      %v568 = vmul.f32 %v550, 0.044715
      %v569 = vmul.f32 %v552, 0.044715
      %v570 = vmul.f32 %v562, %v536
      %v571 = vmul.f32 %v563, %v538
      %v572 = vmul.f32 %v564, %v540
      %v573 = vmul.f32 %v565, %v542
      %v574 = vmul.f32 %v566, %v546
      %v575 = vmul.f32 %v567, %v548
      %v576 = vmul.f32 %v568, %v550
      %v577 = vmul.f32 %v569, %v552
      %v578 = vmul.f32 %v570, %v536
      %v579 = vmul.f32 %v571, %v538
      %v580 = vmul.f32 %v572, %v540
      %v581 = vmul.f32 %v573, %v542
      %v582 = vmul.f32 %v574, %v546
      %v583 = vmul.f32 %v575, %v548
      %v584 = vmul.f32 %v576, %v550
      %v585 = vmul.f32 %v577, %v552
      %v586 = vadd.f32 %v536, %v578
      %v587 = vadd.f32 %v538, %v579
      %v588 = vadd.f32 %v540, %v580
      %v589 = vadd.f32 %v542, %v581
      %v590 = vadd.f32 %v546, %v582
      %v591 = vadd.f32 %v548, %v583
      %v592 = vadd.f32 %v550, %v584
      %v593 = vadd.f32 %v552, %v585
      %v594 = vmul.f32 %v586, 0.7978846
      %v595 = vmul.f32 %v587, 0.7978846
      %v596 = vmul.f32 %v588, 0.7978846
      %v597 = vmul.f32 %v589, 0.7978846
      %v598 = vmul.f32 %v590, 0.7978846
      %v599 = vmul.f32 %v591, 0.7978846
      %v600 = vmul.f32 %v592, 0.7978846
      %v601 = vmul.f32 %v593, 0.7978846
      %v602 = vtanh.pop %v594
      %v603 = vtanh.pop %v595
      %v604 = vtanh.pop %v596
      %v605 = vtanh.pop %v597
      %v606 = vtanh.pop %v598
      %v607 = vtanh.pop %v599
      %v608 = vtanh.pop %v600
      %v609 = vtanh.pop %v601
      %v610 = vadd.f32 %v602, 1.0
      %v611 = vadd.f32 %v603, 1.0
      %v612 = vadd.f32 %v604, 1.0
      %v613 = vadd.f32 %v605, 1.0
      %v614 = vadd.f32 %v606, 1.0
      %v615 = vadd.f32 %v607, 1.0
      %v616 = vadd.f32 %v608, 1.0
      %v617 = vadd.f32 %v609, 1.0
      %v618 = vmul.f32 %v554, %v610
      %v619 = vmul.f32 %v555, %v611
      %v620 = vmul.f32 %v556, %v612
      %v621 = vmul.f32 %v557, %v613
      %v622 = vmul.f32 %v558, %v614
      %v623 = vmul.f32 %v559, %v615
      %v624 = vmul.f32 %v560, %v616
      %v625 = vmul.f32 %v561, %v617
      %v626 = vpack.c.bf16 %v620, %v618
      %v627 = vpack.c.bf16 %v621, %v619
      %v628 = vpack.c.bf16 %v624, %v622
      %v629 = vpack.c.bf16 %v625, %v623
      %v634 = vunpack.c.l.b16 %v626
      %v635 = vunpack.c.l.b16 %v627
      %v636 = vunpack.c.h.b16 %v626
      %v637 = vunpack.c.h.b16 %v627
      %v638 = vunpack.c.l.b16 %v628
      %v639 = vunpack.c.l.b16 %v629
      %v640 = vunpack.c.h.b16 %v628
      %v641 = vunpack.c.h.b16 %v629
      %v642 = vpack.c.b16 %v635, %v634
      %v643 = vpack.c.b16 %v637, %v636
      %v644 = vpack.c.b16 %v639, %v638
      %v645 = vpack.c.b16 %v641, %v640
      %650 = vst [vmem:[%s410] sm:$0xff] %v642
      %651 = vst [vmem:[%s410 + $0x8] sm:$0xff] %v643
      %652 = vst [vmem:[%s410 + $0x10] sm:$0xff] %v644
      %653 = vst [vmem:[%s410 + $0x18] sm:$0xff] %v645
      %v654 = vld [vmem:[%s3] sm:$0xff]
      %v655 = vld [vmem:[%s3 + $0x8] sm:$0xff]
      %v656 = vld [vmem:[%s3 + $0x10] sm:$0xff]
      %v657 = vld [vmem:[%s3 + $0x18] sm:$0xff]
      %v658 = vld [vmem:[%s4] sm:$0xff]
      %v659 = vld [vmem:[%s4 + $0x8] sm:$0xff]
      %v660 = vld [vmem:[%s4 + $0x10] sm:$0xff]
      %v661 = vld [vmem:[%s4 + $0x18] sm:$0xff]
      %v662 = vadd.f32 %v618, %v620
      %v663 = vadd.f32 %v662, %v622
      %v664 = vadd.f32 %v663, %v624
      %v665 = vrot.slane %v664, 4
      %v666 = vadd.f32 %v664, %v665
      %v667 = vrot.slane %v666, 2
      %v668 = vadd.f32 %v666, %v667
      %v669 = vrot.slane %v668, 1
      %v670 = vadd.f32 %v668, %v669
      %v671 = vadd.f32 %v619, %v621
      %v672 = vadd.f32 %v671, %v623
      %v673 = vadd.f32 %v672, %v625
      %v674 = vrot.slane %v673, 4
      %v675 = vadd.f32 %v673, %v674
      %v676 = vrot.slane %v675, 2
      %v677 = vadd.f32 %v675, %v676
      %v678 = vrot.slane %v677, 1
      %v679 = vadd.f32 %v677, %v678
      %v680 = vrcp.pop 32.0
      %v681 = vmul.f32 %v670, %v680
      %v682 = vmul.f32 %v679, %v680
      %v683 = vsub.f32 %v618, %v681
      %v684 = vsub.f32 %v619, %v682
      %v685 = vsub.f32 %v620, %v681
      %v686 = vsub.f32 %v621, %v682
      %v687 = vsub.f32 %v622, %v681
      %v688 = vsub.f32 %v623, %v682
      %v689 = vsub.f32 %v624, %v681
      %v690 = vsub.f32 %v625, %v682
      %v691 = vmul.f32 %v683, %v683
      %v692 = vmul.f32 %v684, %v684
      %v693 = vmul.f32 %v685, %v685
      %v694 = vmul.f32 %v686, %v686
      %v695 = vmul.f32 %v687, %v687
      %v696 = vmul.f32 %v688, %v688
      %v697 = vmul.f32 %v689, %v689
      %v698 = vmul.f32 %v690, %v690
      %v699 = vadd.f32 %v691, %v693
      %v700 = vadd.f32 %v699, %v695
      %v701 = vadd.f32 %v700, %v697
      %v702 = vrot.slane %v701, 4
      %v703 = vadd.f32 %v701, %v702
      %v704 = vrot.slane %v703, 2
      %v705 = vadd.f32 %v703, %v704
      %v706 = vrot.slane %v705, 1
      %v707 = vadd.f32 %v705, %v706
      %v708 = vadd.f32 %v692, %v694
      %v709 = vadd.f32 %v708, %v696
      %v710 = vadd.f32 %v709, %v698
      %v711 = vrot.slane %v710, 4
      %v712 = vadd.f32 %v710, %v711
      %v713 = vrot.slane %v712, 2
      %v714 = vadd.f32 %v712, %v713
      %v715 = vrot.slane %v714, 1
      %v716 = vadd.f32 %v714, %v715
      %v717 = vmul.f32 %v707, %v680
      %v718 = vmul.f32 %v716, %v680
      %v719 = vadd.f32 %v717, 1e-06
      %v720 = vadd.f32 %v718, 1e-06
      %v721 = vrsqrt.pop %v719
      %v722 = vrsqrt.pop %v720
      %v723 = vmul.f32 %v683, %v721
      %v724 = vmul.f32 %v684, %v722
      %v725 = vmul.f32 %v685, %v721
      %v726 = vmul.f32 %v686, %v722
      %v727 = vmul.f32 %v687, %v721
      %v728 = vmul.f32 %v688, %v722
      %v729 = vmul.f32 %v689, %v721
      %v730 = vmul.f32 %v690, %v722
      %732 = vset.pattern.permute.xlu0 0
      %733 = vperm.xlu0 %732, %v654
      %v734 = vpop.permute.xlu0 %733
      %737 = vset.pattern.permute.xlu0 0
      %738 = vperm.xlu0 %737, %v655
      %v739 = vpop.permute.xlu0 %738
      %742 = vset.pattern.permute.xlu0 0
      %743 = vperm.xlu0 %742, %v656
      %v744 = vpop.permute.xlu0 %743
      %747 = vset.pattern.permute.xlu0 0
      %748 = vperm.xlu0 %747, %v657
      %v749 = vpop.permute.xlu0 %748
      %v751 = vmul.f32 %v723, %v734
      %v752 = vmul.f32 %v724, %v734
      %v753 = vmul.f32 %v725, %v739
      %v754 = vmul.f32 %v726, %v739
      %v755 = vmul.f32 %v727, %v744
      %v756 = vmul.f32 %v728, %v744
      %v757 = vmul.f32 %v729, %v749
      %v758 = vmul.f32 %v730, %v749
      %760 = vset.pattern.permute.xlu0 0
      %761 = vperm.xlu0 %760, %v658
      %v762 = vpop.permute.xlu0 %761
      %765 = vset.pattern.permute.xlu0 0
      %766 = vperm.xlu0 %765, %v659
      %v767 = vpop.permute.xlu0 %766
      %770 = vset.pattern.permute.xlu0 0
      %771 = vperm.xlu0 %770, %v660
      %v772 = vpop.permute.xlu0 %771
      %775 = vset.pattern.permute.xlu0 0
      %776 = vperm.xlu0 %775, %v661
      %v777 = vpop.permute.xlu0 %776
      %v779 = vadd.f32 %v751, %v762
      %v780 = vadd.f32 %v752, %v762
      %v781 = vadd.f32 %v753, %v767
      %v782 = vadd.f32 %v754, %v767
      %v783 = vadd.f32 %v755, %v772
      %v784 = vadd.f32 %v756, %v772
      %v785 = vadd.f32 %v757, %v777
      %v786 = vadd.f32 %v758, %v777
      %v787 = vpack.c.bf16 %v781, %v779
      %v788 = vpack.c.bf16 %v782, %v780
      %v789 = vpack.c.bf16 %v785, %v783
      %v790 = vpack.c.bf16 %v786, %v784
      %v795 = vunpack.c.l.b16 %v787
      %v796 = vunpack.c.l.b16 %v788
      %v797 = vunpack.c.h.b16 %v787
      %v798 = vunpack.c.h.b16 %v788
      %v799 = vunpack.c.l.b16 %v789
      %v800 = vunpack.c.l.b16 %v790
      %v801 = vunpack.c.h.b16 %v789
      %v802 = vunpack.c.h.b16 %v790
      %v803 = vpack.c.b16 %v796, %v795
      %v804 = vpack.c.b16 %v798, %v797
      %v805 = vpack.c.b16 %v800, %v799
      %v806 = vpack.c.b16 %v802, %v801
      %811 = vst [vmem:[%s420] sm:$0xff] %v803
      %812 = vst [vmem:[%s420 + $0x8] sm:$0xff] %v804
      %813 = vst [vmem:[%s420 + $0x10] sm:$0xff] %v805
      %814 = vst [vmem:[%s420 + $0x18] sm:$0xff] %v806
      %v815 = vld [vmem:[%s5] sm:$0xf]
      %v816 = vld [vmem:[%s5 + $0x4] sm:$0xf]
      %v817 = vld [vmem:[%s5 + $0x8] sm:$0xf]
      %v818 = vld [vmem:[%s5 + $0xc] sm:$0xf]
      %v819 = vld [vmem:[%s5 + $0x10] sm:$0xf]
      %v820 = vld [vmem:[%s5 + $0x14] sm:$0xf]
      %v821 = vld [vmem:[%s5 + $0x18] sm:$0xf]
      %v822 = vld [vmem:[%s5 + $0x1c] sm:$0xf]
      %v823 = vld [vmem:[%s5 + $0x20] sm:$0xf]
      %v824 = vld [vmem:[%s5 + $0x24] sm:$0xf]
      %v825 = vld [vmem:[%s5 + $0x28] sm:$0xf]
      %v826 = vld [vmem:[%s5 + $0x2c] sm:$0xf]
      %v827 = vld [vmem:[%s5 + $0x30] sm:$0xf]
      %v828 = vld [vmem:[%s5 + $0x34] sm:$0xf]
      %v829 = vld [vmem:[%s5 + $0x38] sm:$0xf]
      %v830 = vld [vmem:[%s5 + $0x3c] sm:$0xf]
      %v847 = vunpack.c.l.b16 %v815
      %v848 = vunpack.c.l.b16 %v816
      %v849 = vunpack.c.l.b16 %v817
      %v850 = vunpack.c.l.b16 %v818
      %v851 = vunpack.c.l.b16 %v819
      %v852 = vunpack.c.l.b16 %v820
      %v853 = vunpack.c.l.b16 %v821
      %v854 = vunpack.c.l.b16 %v822
      %v855 = vunpack.c.l.b16 %v823
      %v856 = vunpack.c.l.b16 %v824
      %v857 = vunpack.c.l.b16 %v825
      %v858 = vunpack.c.l.b16 %v826
      %v859 = vunpack.c.l.b16 %v827
      %v860 = vunpack.c.l.b16 %v828
      %v861 = vunpack.c.l.b16 %v829
      %v862 = vunpack.c.l.b16 %v830
      %v863 = vpack.c.b16 %v848, %v847
      %v864 = vpack.c.b16 %v850, %v849
      %v865 = vpack.c.b16 %v852, %v851
      %v866 = vpack.c.b16 %v854, %v853
      %v867 = vpack.c.b16 %v856, %v855
      %v868 = vpack.c.b16 %v858, %v857
      %v869 = vpack.c.b16 %v860, %v859
      %v870 = vpack.c.b16 %v862, %v861
      %vm871 = vcmask 261120
      %v873 = vsel %vm871, %v863, 0
      %v876 = vsel %vm871, %v864, 0
      %v879 = vsel %vm871, %v865, 0
      %v882 = vsel %vm871, %v866, 0
      %v885 = vsel %vm871, %v867, 0
      %v888 = vsel %vm871, %v868, 0
      %v891 = vsel %vm871, %v869, 0
      %v894 = vsel %vm871, %v870, 0
      %896 = vmatprep.subr.bf16.mxu0 %v788
      %897 = vmatpush1.bf16.msra.mxu0 %v787
      %898 = vmatprep.subr.bf16.mxu0 %v790
      %899 = vmatpush1.bf16.msra.mxu0 %v789
      %900 = vmatprep.subr.bf16.mxu0 0
      %901 = vmatpush1.bf16.msra.mxu0 0
      %902 = vmatprep.subr.bf16.mxu0 0
      %903 = vmatpush1.bf16.msra.mxu0 0
      %904 = vmatprep.subr.bf16.mxu0 0
      %905 = vmatpush1.bf16.msra.mxu0 0
      %906 = vmatprep.subr.bf16.mxu0 0
      %907 = vmatpush1.bf16.msra.mxu0 0
      %908 = vmatprep.subr.bf16.mxu0 0
      %909 = vmatpush1.bf16.msra.mxu0 0
      %910 = vmatprep.subr.bf16.mxu0 0
      %911 = vmatpush1.bf16.msra.mxu0 0
      %912 = vmatprep.subr.bf16.mxu0 0
      %913 = vmatpush1.bf16.msra.mxu0 0
      %914 = vmatprep.subr.bf16.mxu0 0
      %915 = vmatpush1.bf16.msra.mxu0 0
      %916 = vmatprep.subr.bf16.mxu0 0
      %917 = vmatpush1.bf16.msra.mxu0 0
      %918 = vmatprep.subr.bf16.mxu0 0
      %919 = vmatpush1.bf16.msra.mxu0 0
      %920 = vmatprep.subr.bf16.mxu0 0
      %921 = vmatpush1.bf16.msra.mxu0 0
      %922 = vmatprep.subr.bf16.mxu0 0
      %923 = vmatpush1.bf16.msra.mxu0 0
      %924 = vmatprep.subr.bf16.mxu0 0
      %925 = vmatpush1.bf16.msra.mxu0 0
      %926 = vmatprep.subr.bf16.mxu0 0
      %927 = vmatpush1.bf16.msra.mxu0 0
      %928 = vmatprep.mubr.bf16.mxu0 0
      %929 = vmatmul.mubr.bf16.gmra.mrb[0].mxu0 %v873
      %v930 = vpop.f32.mrb[0].mxu0
      %v931 = vadd.f32 0.0, %v930
      %v932 = vpop.f32.mrb[0].mxu0
      %v933 = vadd.f32 0.0, %v932
      %v934 = vpop.f32.mrb[0].mxu0
      %v935 = vadd.f32 0.0, %v934
      %v936 = vpop.f32.mrb[0].mxu0
      %v937 = vadd.f32 0.0, %v936
      %938 = vmatprep.mubr.bf16.mxu0 0
      %939 = vmatmul.mubr.bf16.gmra.mrb[0].mxu0 %v876
      %v940 = vpop.f32.mrb[0].mxu0
      %v941 = vadd.f32 0.0, %v940
      %v942 = vpop.f32.mrb[0].mxu0
      %v943 = vadd.f32 0.0, %v942
      %v944 = vpop.f32.mrb[0].mxu0
      %v945 = vadd.f32 0.0, %v944
      %v946 = vpop.f32.mrb[0].mxu0
      %v947 = vadd.f32 0.0, %v946
      %948 = vmatprep.mubr.bf16.mxu0 0
      %949 = vmatmul.mubr.bf16.gmra.mrb[0].mxu0 %v879
      %v950 = vpop.f32.mrb[0].mxu0
      %v951 = vadd.f32 0.0, %v950
      %v952 = vpop.f32.mrb[0].mxu0
      %v953 = vadd.f32 0.0, %v952
      %v954 = vpop.f32.mrb[0].mxu0
      %v955 = vadd.f32 0.0, %v954
      %v956 = vpop.f32.mrb[0].mxu0
      %v957 = vadd.f32 0.0, %v956
      %958 = vmatprep.mubr.bf16.mxu0 0
      %959 = vmatmul.mubr.bf16.gmra.mrb[0].mxu0 %v882
      %v960 = vpop.f32.mrb[0].mxu0
      %v961 = vadd.f32 0.0, %v960
      %v962 = vpop.f32.mrb[0].mxu0
      %v963 = vadd.f32 0.0, %v962
      %v964 = vpop.f32.mrb[0].mxu0
      %v965 = vadd.f32 0.0, %v964
      %v966 = vpop.f32.mrb[0].mxu0
      %v967 = vadd.f32 0.0, %v966
      %968 = vmatprep.mubr.bf16.mxu0 0
      %969 = vmatmul.mubr.bf16.gmra.mrb[0].mxu0 %v885
      %v970 = vpop.f32.mrb[0].mxu0
      %v971 = vadd.f32 0.0, %v970
      %v972 = vpop.f32.mrb[0].mxu0
      %v973 = vadd.f32 0.0, %v972
      %v974 = vpop.f32.mrb[0].mxu0
      %v975 = vadd.f32 0.0, %v974
      %v976 = vpop.f32.mrb[0].mxu0
      %v977 = vadd.f32 0.0, %v976
      %978 = vmatprep.mubr.bf16.mxu0 0
      %979 = vmatmul.mubr.bf16.gmra.mrb[0].mxu0 %v888
      %v980 = vpop.f32.mrb[0].mxu0
      %v981 = vadd.f32 0.0, %v980
      %v982 = vpop.f32.mrb[0].mxu0
      %v983 = vadd.f32 0.0, %v982
      %v984 = vpop.f32.mrb[0].mxu0
      %v985 = vadd.f32 0.0, %v984
      %v986 = vpop.f32.mrb[0].mxu0
      %v987 = vadd.f32 0.0, %v986
      %988 = vmatprep.mubr.bf16.mxu0 0
      %989 = vmatmul.mubr.bf16.gmra.mrb[0].mxu0 %v891
      %v990 = vpop.f32.mrb[0].mxu0
      %v991 = vadd.f32 0.0, %v990
      %v992 = vpop.f32.mrb[0].mxu0
      %v993 = vadd.f32 0.0, %v992
      %v994 = vpop.f32.mrb[0].mxu0
      %v995 = vadd.f32 0.0, %v994
      %v996 = vpop.f32.mrb[0].mxu0
      %v997 = vadd.f32 0.0, %v996
      %998 = vmatprep.mubr.bf16.mxu0 0
      %999 = vmatmul.mubr.bf16.gmra.mrb[0].mxu0 %v894
      %v1000 = vpop.f32.mrb[0].mxu0
      %v1001 = vadd.f32 0.0, %v1000
      %v1002 = vpop.f32.mrb[0].mxu0
      %v1003 = vadd.f32 0.0, %v1002
      %v1004 = vpop.f32.mrb[0].mxu0
      %v1005 = vadd.f32 0.0, %v1004
      %v1006 = vpop.f32.mrb[0].mxu0
      %v1007 = vadd.f32 0.0, %v1006
      %1008 = vdwg.mxu0
      %v1009 = vpack.c.bf16 %v935, %v931
      %v1010 = vpack.c.bf16 %v937, %v933
      %v1011 = vpack.c.bf16 %v945, %v941
      %v1012 = vpack.c.bf16 %v947, %v943
      %v1013 = vpack.c.bf16 %v955, %v951
      %v1014 = vpack.c.bf16 %v957, %v953
      %v1015 = vpack.c.bf16 %v965, %v961
      %v1016 = vpack.c.bf16 %v967, %v963
      %v1025 = vunpack.c.l.b16 %v1009
      %v1026 = vunpack.c.l.b16 %v1010
      %v1027 = vunpack.c.h.b16 %v1009
      %v1028 = vunpack.c.h.b16 %v1010
      %v1029 = vunpack.c.l.b16 %v1011
      %v1030 = vunpack.c.l.b16 %v1012
      %v1031 = vunpack.c.h.b16 %v1011
      %v1032 = vunpack.c.h.b16 %v1012
      %v1033 = vunpack.c.l.b16 %v1013
      %v1034 = vunpack.c.l.b16 %v1014
      %v1035 = vunpack.c.h.b16 %v1013
      %v1036 = vunpack.c.h.b16 %v1014
      %v1037 = vunpack.c.l.b16 %v1015
      %v1038 = vunpack.c.l.b16 %v1016
      %v1039 = vunpack.c.h.b16 %v1015
      %v1040 = vunpack.c.h.b16 %v1016
      %v1041 = vpack.c.b16 %v1026, %v1025
      %v1042 = vpack.c.b16 %v1028, %v1027
      %v1043 = vpack.c.b16 %v1030, %v1029
      %v1044 = vpack.c.b16 %v1032, %v1031
      %v1045 = vpack.c.b16 %v1034, %v1033
      %v1046 = vpack.c.b16 %v1036, %v1035
      %v1047 = vpack.c.b16 %v1038, %v1037
      %v1048 = vpack.c.b16 %v1040, %v1039
      %1057 = vst [vmem:[%s430] sm:$0xff] %v1041
      %1058 = vst [vmem:[%s430 + $0x8] sm:$0xff] %v1042
      %1059 = vst [vmem:[%s430 + $0x10] sm:$0xff] %v1043
      %1060 = vst [vmem:[%s430 + $0x18] sm:$0xff] %v1044
      %1061 = vst [vmem:[%s430 + $0x20] sm:$0xff] %v1045
      %1062 = vst [vmem:[%s430 + $0x28] sm:$0xff] %v1046
      %1063 = vst [vmem:[%s430 + $0x30] sm:$0xff] %v1047
      %1064 = vst [vmem:[%s430 + $0x38] sm:$0xff] %v1048
      %v1065 = vpack.c.bf16 %v975, %v971
      %v1066 = vpack.c.bf16 %v977, %v973
      %v1067 = vpack.c.bf16 %v985, %v981
      %v1068 = vpack.c.bf16 %v987, %v983
      %v1069 = vpack.c.bf16 %v995, %v991
      %v1070 = vpack.c.bf16 %v997, %v993
      %v1071 = vpack.c.bf16 %v1005, %v1001
      %v1072 = vpack.c.bf16 %v1007, %v1003
      %v1081 = vunpack.c.l.b16 %v1065
      %v1082 = vunpack.c.l.b16 %v1066
      %v1083 = vunpack.c.h.b16 %v1065
      %v1084 = vunpack.c.h.b16 %v1066
      %v1085 = vunpack.c.l.b16 %v1067
      %v1086 = vunpack.c.l.b16 %v1068
      %v1087 = vunpack.c.h.b16 %v1067
      %v1088 = vunpack.c.h.b16 %v1068
      %v1089 = vunpack.c.l.b16 %v1069
      %v1090 = vunpack.c.l.b16 %v1070
      %v1091 = vunpack.c.h.b16 %v1069
      %v1092 = vunpack.c.h.b16 %v1070
      %v1093 = vunpack.c.l.b16 %v1071
      %v1094 = vunpack.c.l.b16 %v1072
      %v1095 = vunpack.c.h.b16 %v1071
      %v1096 = vunpack.c.h.b16 %v1072
      %v1097 = vpack.c.b16 %v1082, %v1081
      %v1098 = vpack.c.b16 %v1084, %v1083
      %v1099 = vpack.c.b16 %v1086, %v1085
      %v1100 = vpack.c.b16 %v1088, %v1087
      %v1101 = vpack.c.b16 %v1090, %v1089
      %v1102 = vpack.c.b16 %v1092, %v1091
      %v1103 = vpack.c.b16 %v1094, %v1093
      %v1104 = vpack.c.b16 %v1096, %v1095
      %1113 = vst [vmem:[%s440] sm:$0xff] %v1097
      %1114 = vst [vmem:[%s440 + $0x8] sm:$0xff] %v1098
      %1115 = vst [vmem:[%s440 + $0x10] sm:$0xff] %v1099
      %1116 = vst [vmem:[%s440 + $0x18] sm:$0xff] %v1100
      %1117 = vst [vmem:[%s440 + $0x20] sm:$0xff] %v1101
      %1118 = vst [vmem:[%s440 + $0x28] sm:$0xff] %v1102
      %1119 = vst [vmem:[%s440 + $0x30] sm:$0xff] %v1103
      %1120 = vst [vmem:[%s440 + $0x38] sm:$0xff] %v1104
      %s1121 = smul.u32 2, %s26
      %p1122 = scmp.lt.s32.totalorder %s25, 1
      %s1123 = scalar_select %p1122, %s25, 1
      %p1124 = scmp.lt.s32.totalorder %s1121, 1
      %s1125 = scalar_select %p1124, %s1121, 1
      %s1126 = smul.addr %s1123, 8
      %s1127 = sadd.s32 %s1125, %s1126
      %s1128 = smul.addr %s1127, 4
      %s1129 = scalar_lea.vmem %s6, %s1128
      %s1130 = smul.u32 2, %s26
      %p1131 = scmp.lt.s32.totalorder %s25, 1
      %s1132 = scalar_select %p1131, %s25, 1
      %p1133 = scmp.lt.s32.totalorder %s1130, 1
      %s1134 = scalar_select %p1133, %s1130, 1
      %s1135 = smul.addr %s1132, 8
      %s1136 = sadd.s32 %s1134, %s1135
      %s1137 = smul.addr %s1136, 4
      %s1138 = scalar_lea.vmem %s7, %s1137
      %s1139 = smul.u32 2, %s26
      %p1140 = scmp.lt.s32.totalorder %s25, 1
      %s1141 = scalar_select %p1140, %s25, 1
      %p1142 = scmp.lt.s32.totalorder %s1139, 1
      %s1143 = scalar_select %p1142, %s1139, 1
      %s1144 = smul.addr %s1141, 16
      %s1145 = sadd.s32 %s1143, %s1144
      %s1146 = smul.addr %s1145, 4
      %s1147 = scalar_lea.vmem %s8, %s1146
      %s1148 = smul.u32 2, %s26
      %p1149 = scmp.lt.s32.totalorder %s25, 1
      %s1150 = scalar_select %p1149, %s25, 1
      %p1151 = scmp.lt.s32.totalorder %s1148, 1
      %s1152 = scalar_select %p1151, %s1148, 1
      %s1153 = smul.addr %s1150, 16
      %s1154 = sadd.s32 %s1152, %s1153
      %s1155 = smul.addr %s1154, 4
      %s1156 = scalar_lea.vmem %s9, %s1155
      // Predicated region
      $region45: #{_allspark_forward_full.3} parent=43 // pred_check
        %p1157 = pneg %p186
      $region46: #{_allspark_forward_full.3} parent=43 // pred_check_branch
        %1159 = sbr.rel (%p1157) target = $region48
      $region47: #{_allspark_forward_full.3} parent=43 // pred_region
        %s1160 = smul.u32 2, %s26
      $region48: #{_allspark_forward_full.3} parent=43 // pred_fallthru
        _
      // Predicated region
      $region49: #{_allspark_forward_full.3} parent=43 // pred_check
        %p1161 = pneg %p214
      $region50: #{_allspark_forward_full.3} parent=43 // pred_check_branch
        %1163 = sbr.rel (%p1161) target = $region52
      $region51: #{_allspark_forward_full.3} parent=43 // pred_region
        %s1164 = smul.u32 2, %s26
      $region52: #{_allspark_forward_full.3} parent=43 // pred_fallthru
        _
      // Predicated region
      $region53: #{_allspark_forward_full.3} parent=43 // pred_check
        %p1165 = pneg %p242
      $region54: #{_allspark_forward_full.3} parent=43 // pred_check_branch
        %1167 = sbr.rel (%p1165) target = $region56
      $region55: #{_allspark_forward_full.3} parent=43 // pred_region
        %s1168 = smul.u32 2, %s26
      $region56: #{_allspark_forward_full.3} parent=43 // pred_fallthru
        _
      // Predicated region
      $region57: #{_allspark_forward_full.3} parent=43 // pred_check
        %p1169 = pneg %p270
      $region58: #{_allspark_forward_full.3} parent=43 // pred_check_branch
        %1171 = sbr.rel (%p1169) target = $region60
      $region59: #{_allspark_forward_full.3} parent=43 // pred_region
        %s1172 = smul.u32 2, %s26
      $region60: #{_allspark_forward_full.3} parent=43 // pred_fallthru
        _
    $region44: #{_allspark_forward_full.3} parent=5 // pred_fallthru
      _
    %p1173 = scmp.le.s32.totalorder 2, %s16
    // Predicated region
    $region61: #{_allspark_forward_full.3} parent=5 // pred_check
      %p1174 = pneg %p1173
    $region62: #{_allspark_forward_full.3} parent=5 // pred_check_branch
      %1176 = sbr.rel (%p1174) target = $region64
    $region63: #{_allspark_forward_full.3} parent=5 // pred_region
      %s1177 = ssub.s32 %s16, 2
      // Predicated region
      $region65: #{_allspark_forward_full.3} parent=63 // pred_check
        %p1178 = pneg %p192
      $region66: #{_allspark_forward_full.3} parent=63 // pred_check_branch
        %1180 = sbr.rel (%p1178) target = $region68
      $region67: #{_allspark_forward_full.3} parent=63 // pred_region
        %s1181 = smul.u32 2, %s28
        %p1182 = scmp.lt.s32.totalorder %s27, 1
        %s1183 = scalar_select %p1182, %s27, 1
        %p1184 = scmp.lt.s32.totalorder %s1181, 1
        %s1185 = scalar_select %p1184, %s1181, 1
        %s1186 = smul.addr %s1183, 8
        %s1187 = sadd.s32 %s1185, %s1186
        %s1188 = smul.addr %s1187, 4
        %s1189 = scalar_lea.vmem %s6, %s1188
      $region68: #{_allspark_forward_full.3} parent=63 // pred_fallthru
        _
      // Predicated region
      $region69: #{_allspark_forward_full.3} parent=63 // pred_check
        %p1190 = pneg %p220
      $region70: #{_allspark_forward_full.3} parent=63 // pred_check_branch
        %1192 = sbr.rel (%p1190) target = $region72
      $region71: #{_allspark_forward_full.3} parent=63 // pred_region
        %s1193 = smul.u32 2, %s28
        %p1194 = scmp.lt.s32.totalorder %s27, 1
        %s1195 = scalar_select %p1194, %s27, 1
        %p1196 = scmp.lt.s32.totalorder %s1193, 1
        %s1197 = scalar_select %p1196, %s1193, 1
        %s1198 = smul.addr %s1195, 8
        %s1199 = sadd.s32 %s1197, %s1198
        %s1200 = smul.addr %s1199, 4
        %s1201 = scalar_lea.vmem %s7, %s1200
      $region72: #{_allspark_forward_full.3} parent=63 // pred_fallthru
        _
      // Predicated region
      $region73: #{_allspark_forward_full.3} parent=63 // pred_check
        %p1202 = pneg %p248
      $region74: #{_allspark_forward_full.3} parent=63 // pred_check_branch
        %1204 = sbr.rel (%p1202) target = $region76
      $region75: #{_allspark_forward_full.3} parent=63 // pred_region
        %s1205 = smul.u32 2, %s28
        %p1206 = scmp.lt.s32.totalorder %s27, 1
        %s1207 = scalar_select %p1206, %s27, 1
        %p1208 = scmp.lt.s32.totalorder %s1205, 1
        %s1209 = scalar_select %p1208, %s1205, 1
        %s1210 = smul.addr %s1207, 16
        %s1211 = sadd.s32 %s1209, %s1210
        %s1212 = smul.addr %s1211, 4
        %s1213 = scalar_lea.vmem %s8, %s1212
      $region76: #{_allspark_forward_full.3} parent=63 // pred_fallthru
        _
      // Predicated region
      $region77: #{_allspark_forward_full.3} parent=63 // pred_check
        %p1214 = pneg %p276
      $region78: #{_allspark_forward_full.3} parent=63 // pred_check_branch
        %1216 = sbr.rel (%p1214) target = $region80
      $region79: #{_allspark_forward_full.3} parent=63 // pred_region
        %s1217 = smul.u32 2, %s28
        %p1218 = scmp.lt.s32.totalorder %s27, 1
        %s1219 = scalar_select %p1218, %s27, 1
        %p1220 = scmp.lt.s32.totalorder %s1217, 1
        %s1221 = scalar_select %p1220, %s1217, 1
        %s1222 = smul.addr %s1219, 16
        %s1223 = sadd.s32 %s1221, %s1222
        %s1224 = smul.addr %s1223, 4
        %s1225 = scalar_lea.vmem %s9, %s1224
      $region80: #{_allspark_forward_full.3} parent=63 // pred_fallthru
        _
    $region64: #{_allspark_forward_full.3} parent=5 // pred_fallthru
      _
  $region6: #{_allspark_forward_full.3} parent=0 // loop_footer
    %s20 = sadd.s32 1, %s16
  $region7: #{_allspark_forward_full.3} parent=0 // loop_footer_branch
    %15 = sbr.rel target = $region3
  $region8: #{_allspark_forward_full.3} parent=0 // loop_exit
    _

// kernel: _allspark_forward_full.5
$region0: #{_allspark_forward_full.5}
  #allocation0 [shape = 'u32[]', space=smem, size = 0x4, offset = 0x4, fixed_abs, tag = 'smem constant byte address 0x4 - core index']
  #allocation1 [shape = 'u32[144,128]{1,0:T(1,128)}', space=vmem, size = 0x12000, scoped, tag = 'internal scratch']
  %s0 = inlined_call_operand.vmem [shape: bf16[2,32,256], index: 0, kind: input, shape index: {}]
  %s1 = inlined_call_operand.vmem [shape: bf16[2,32,256], index: 1, kind: input, shape index: {}]
  %s2 = inlined_call_operand.vmem [shape: bf16[64,32], index: 2, kind: input, shape index: {}]
  %s3 = inlined_call_operand.vmem [shape: bf16[128,256], index: 3, kind: input, shape index: {}]
  %s4 = inlined_call_operand.vmem [shape: bf16[128,256], index: 4, kind: input, shape index: {}]
  %s5 = inlined_call_operand.vmem [shape: bf16[32,64], index: 5, kind: input, shape index: {}]
  %s6 = inlined_call_operand.vmem [shape: f32[32,1], index: 6, kind: input, shape index: {}]
  %s7 = inlined_call_operand.vmem [shape: f32[32,1], index: 7, kind: input, shape index: {}]
  %s8 = inlined_call_operand.vmem [shape: bf16[4,32], index: 8, kind: input, shape index: {}]
  %s9 = inlined_call_operand.vmem [shape: f32[4,1], index: 9, kind: input, shape index: {}]
  %s10 = inlined_call_operand.vmem [shape: f32[2,4,256], index: 10, kind: output, shape index: {}]
  %s11 = sld [smem:[#allocation0]]
  $region73: #{_allspark_forward_full.5} parent=0
    _
  %s13 = ssub.s32 1, %s11
  %s14 = scalar_select 0, %s13, %s11
  loop: start=0, step=1, limit=4
  $region2: #{_allspark_forward_full.5} parent=0 // loop_pre_header
    _
  $region3: #{_allspark_forward_full.5} parent=0 // loop_header
    %s16 = sphi 0, %s20
    %p17 = scmp.ge.s32.totalorder %s16, 4
    %s26 = sphi 0, %s28
    %s29 = sphi 0, %s26
    %s30 = sphi 0, %s29
    %s46 = sphi 0, %s30
    %s52 = sphi 0, %s54
    %s55 = sphi 0, %s52
    %s56 = sphi 0, %s55
    %s72 = sphi 0, %s56
    %s76 = sphi 0, %s76
    %s78 = sphi 0, %s76
    %s79 = sphi 0, %s78
    %s93 = sphi 0, %s79
    %s97 = sphi 0, %s97
    %s99 = sphi 0, %s97
    %s100 = sphi 0, %s99
    %s114 = sphi 0, %s100
    %s118 = sphi 0, %s118
    %s120 = sphi 0, %s118
    %s121 = sphi 0, %s120
    %s135 = sphi 0, %s121
    %s139 = sphi 0, %s139
    %s141 = sphi 0, %s139
    %s142 = sphi 0, %s141
    %s156 = sphi 0, %s142
    %s160 = sphi 0, %s160
    %s162 = sphi 0, %s160
    %s163 = sphi 0, %s162
    %s177 = sphi 0, %s163
    %s181 = sphi 0, %s181
    %s183 = sphi 0, %s181
    %s184 = sphi 0, %s183
    %s198 = sphi 0, %s184
    %s202 = sphi 0, %s202
    %s204 = sphi 0, %s202
    %s205 = sphi 0, %s204
    %s219 = sphi 0, %s205
    %s223 = sphi 0, %s223
    %s225 = sphi 0, %s223
    %s226 = sphi 0, %s225
    %s240 = sphi 0, %s226
    %s246 = sphi 0, %s248
    %s249 = sphi 0, %s246
    %s250 = sphi 0, %s249
    %s266 = sphi 0, %s250
  $region4: #{_allspark_forward_full.5} parent=0 // loop_header_branch
    %19 = sbr.rel (%p17) target = $region8
  $region5: #{_allspark_forward_full.5} parent=0 // loop_body
    %s21 = ssub.s32 %s16, 1
    %s22 = ssub.s32 %s16, 2
    %s23 = sadd.s32 %s16, 1
    %s24 = ssub.s32 %s16, %s23
    %p25 = scmp.eq.s32.totalorder %s24, 0
    %s27 = sadd.s32 %s26, 1
    %s28 = scalar_select %p25, %s26, %s27
    %p31 = pneg %p25
    %p32 = scmp.eq.s32.totalorder %s16, 1
    %p33 = por %p31, %p32
    %p34 = scmp.ne.s32.totalorder %s26, %s29
    %p35 = scmp.eq.s32.totalorder %s16, 0
    %p36 = por %p34, %p35
    %p37 = scmp.ne.s32.totalorder %s26, %s29
    %p38 = scmp.eq.s32.totalorder %s21, 1
    %p39 = por %p37, %p38
    %p40 = scmp.ne.s32.totalorder %s29, %s30
    %p41 = scmp.eq.s32.totalorder %s21, 0
    %p42 = por %p40, %p41
    %p43 = scmp.ne.s32.totalorder %s29, %s30
    %p44 = scmp.eq.s32.totalorder %s22, 1
    %p45 = por %p43, %p44
    %p47 = scmp.ne.s32.totalorder %s30, %s46
    %p48 = scmp.eq.s32.totalorder %s22, 0
    %p49 = por %p47, %p48
    %s50 = ssub.s32 %s16, %s23
    %p51 = scmp.eq.s32.totalorder %s50, 0
    %s53 = sadd.s32 %s52, 1
    %s54 = scalar_select %p51, %s52, %s53
    %p57 = pneg %p51
    %p58 = scmp.eq.s32.totalorder %s16, 1
    %p59 = por %p57, %p58
    %p60 = scmp.ne.s32.totalorder %s52, %s55
    %p61 = scmp.eq.s32.totalorder %s16, 0
    %p62 = por %p60, %p61
    %p63 = scmp.ne.s32.totalorder %s52, %s55
    %p64 = scmp.eq.s32.totalorder %s21, 1
    %p65 = por %p63, %p64
    %p66 = scmp.ne.s32.totalorder %s55, %s56
    %p67 = scmp.eq.s32.totalorder %s21, 0
    %p68 = por %p66, %p67
    %p69 = scmp.ne.s32.totalorder %s55, %s56
    %p70 = scmp.eq.s32.totalorder %s22, 1
    %p71 = por %p69, %p70
    %p73 = scmp.ne.s32.totalorder %s56, %s72
    %p74 = scmp.eq.s32.totalorder %s22, 0
    %p75 = por %p73, %p74
    %s77 = sadd.s32 %s76, 1
    %p80 = scmp.eq.s32.totalorder %s16, 1
    %p81 = scmp.ne.s32.totalorder %s76, %s78
    %p82 = scmp.eq.s32.totalorder %s16, 0
    %p83 = por %p81, %p82
    %p84 = scmp.ne.s32.totalorder %s76, %s78
    %p85 = scmp.eq.s32.totalorder %s21, 1
    %p86 = por %p84, %p85
    %p87 = scmp.ne.s32.totalorder %s78, %s79
    %p88 = scmp.eq.s32.totalorder %s21, 0
    %p89 = por %p87, %p88
    %p90 = scmp.ne.s32.totalorder %s78, %s79
    %p91 = scmp.eq.s32.totalorder %s22, 1
    %p92 = por %p90, %p91
    %p94 = scmp.ne.s32.totalorder %s79, %s93
    %p95 = scmp.eq.s32.totalorder %s22, 0
    %p96 = por %p94, %p95
    %s98 = sadd.s32 %s97, 1
    %p101 = scmp.eq.s32.totalorder %s16, 1
    %p102 = scmp.ne.s32.totalorder %s97, %s99
    %p103 = scmp.eq.s32.totalorder %s16, 0
    %p104 = por %p102, %p103
    %p105 = scmp.ne.s32.totalorder %s97, %s99
    %p106 = scmp.eq.s32.totalorder %s21, 1
    %p107 = por %p105, %p106
    %p108 = scmp.ne.s32.totalorder %s99, %s100
    %p109 = scmp.eq.s32.totalorder %s21, 0
    %p110 = por %p108, %p109
    %p111 = scmp.ne.s32.totalorder %s99, %s100
    %p112 = scmp.eq.s32.totalorder %s22, 1
    %p113 = por %p111, %p112
    %p115 = scmp.ne.s32.totalorder %s100, %s114
    %p116 = scmp.eq.s32.totalorder %s22, 0
    %p117 = por %p115, %p116
    %s119 = sadd.s32 %s118, 1
    %p122 = scmp.eq.s32.totalorder %s16, 1
    %p123 = scmp.ne.s32.totalorder %s118, %s120
    %p124 = scmp.eq.s32.totalorder %s16, 0
    %p125 = por %p123, %p124
    %p126 = scmp.ne.s32.totalorder %s118, %s120
    %p127 = scmp.eq.s32.totalorder %s21, 1
    %p128 = por %p126, %p127
    %p129 = scmp.ne.s32.totalorder %s120, %s121
    %p130 = scmp.eq.s32.totalorder %s21, 0
    %p131 = por %p129, %p130
    %p132 = scmp.ne.s32.totalorder %s120, %s121
    %p133 = scmp.eq.s32.totalorder %s22, 1
    %p134 = por %p132, %p133
    %p136 = scmp.ne.s32.totalorder %s121, %s135
    %p137 = scmp.eq.s32.totalorder %s22, 0
    %p138 = por %p136, %p137
    %s140 = sadd.s32 %s139, 1
    %p143 = scmp.eq.s32.totalorder %s16, 1
    %p144 = scmp.ne.s32.totalorder %s139, %s141
    %p145 = scmp.eq.s32.totalorder %s16, 0
    %p146 = por %p144, %p145
    %p147 = scmp.ne.s32.totalorder %s139, %s141
    %p148 = scmp.eq.s32.totalorder %s21, 1
    %p149 = por %p147, %p148
    %p150 = scmp.ne.s32.totalorder %s141, %s142
    %p151 = scmp.eq.s32.totalorder %s21, 0
    %p152 = por %p150, %p151
    %p153 = scmp.ne.s32.totalorder %s141, %s142
    %p154 = scmp.eq.s32.totalorder %s22, 1
    %p155 = por %p153, %p154
    %p157 = scmp.ne.s32.totalorder %s142, %s156
    %p158 = scmp.eq.s32.totalorder %s22, 0
    %p159 = por %p157, %p158
    %s161 = sadd.s32 %s160, 1
    %p164 = scmp.eq.s32.totalorder %s16, 1
    %p165 = scmp.ne.s32.totalorder %s160, %s162
    %p166 = scmp.eq.s32.totalorder %s16, 0
    %p167 = por %p165, %p166
    %p168 = scmp.ne.s32.totalorder %s160, %s162
    %p169 = scmp.eq.s32.totalorder %s21, 1
    %p170 = por %p168, %p169
    %p171 = scmp.ne.s32.totalorder %s162, %s163
    %p172 = scmp.eq.s32.totalorder %s21, 0
    %p173 = por %p171, %p172
    %p174 = scmp.ne.s32.totalorder %s162, %s163
    %p175 = scmp.eq.s32.totalorder %s22, 1
    %p176 = por %p174, %p175
    %p178 = scmp.ne.s32.totalorder %s163, %s177
    %p179 = scmp.eq.s32.totalorder %s22, 0
    %p180 = por %p178, %p179
    %s182 = sadd.s32 %s181, 1
    %p185 = scmp.eq.s32.totalorder %s16, 1
    %p186 = scmp.ne.s32.totalorder %s181, %s183
    %p187 = scmp.eq.s32.totalorder %s16, 0
    %p188 = por %p186, %p187
    %p189 = scmp.ne.s32.totalorder %s181, %s183
    %p190 = scmp.eq.s32.totalorder %s21, 1
    %p191 = por %p189, %p190
    %p192 = scmp.ne.s32.totalorder %s183, %s184
    %p193 = scmp.eq.s32.totalorder %s21, 0
    %p194 = por %p192, %p193
    %p195 = scmp.ne.s32.totalorder %s183, %s184
    %p196 = scmp.eq.s32.totalorder %s22, 1
    %p197 = por %p195, %p196
    %p199 = scmp.ne.s32.totalorder %s184, %s198
    %p200 = scmp.eq.s32.totalorder %s22, 0
    %p201 = por %p199, %p200
    %s203 = sadd.s32 %s202, 1
    %p206 = scmp.eq.s32.totalorder %s16, 1
    %p207 = scmp.ne.s32.totalorder %s202, %s204
    %p208 = scmp.eq.s32.totalorder %s16, 0
    %p209 = por %p207, %p208
    %p210 = scmp.ne.s32.totalorder %s202, %s204
    %p211 = scmp.eq.s32.totalorder %s21, 1
    %p212 = por %p210, %p211
    %p213 = scmp.ne.s32.totalorder %s204, %s205
    %p214 = scmp.eq.s32.totalorder %s21, 0
    %p215 = por %p213, %p214
    %p216 = scmp.ne.s32.totalorder %s204, %s205
    %p217 = scmp.eq.s32.totalorder %s22, 1
    %p218 = por %p216, %p217
    %p220 = scmp.ne.s32.totalorder %s205, %s219
    %p221 = scmp.eq.s32.totalorder %s22, 0
    %p222 = por %p220, %p221
    %s224 = sadd.s32 %s223, 1
    %p227 = scmp.eq.s32.totalorder %s16, 1
    %p228 = scmp.ne.s32.totalorder %s223, %s225
    %p229 = scmp.eq.s32.totalorder %s16, 0
    %p230 = por %p228, %p229
    %p231 = scmp.ne.s32.totalorder %s223, %s225
    %p232 = scmp.eq.s32.totalorder %s21, 1
    %p233 = por %p231, %p232
    %p234 = scmp.ne.s32.totalorder %s225, %s226
    %p235 = scmp.eq.s32.totalorder %s21, 0
    %p236 = por %p234, %p235
    %p237 = scmp.ne.s32.totalorder %s225, %s226
    %p238 = scmp.eq.s32.totalorder %s22, 1
    %p239 = por %p237, %p238
    %p241 = scmp.ne.s32.totalorder %s226, %s240
    %p242 = scmp.eq.s32.totalorder %s22, 0
    %p243 = por %p241, %p242
    %s244 = ssub.s32 %s16, %s23
    %p245 = scmp.eq.s32.totalorder %s244, 0
    %s247 = sadd.s32 %s246, 1
    %s248 = scalar_select %p245, %s246, %s247
    %p251 = pneg %p245
    %p252 = scmp.eq.s32.totalorder %s16, 1
    %p253 = por %p251, %p252
    %p254 = scmp.ne.s32.totalorder %s246, %s249
    %p255 = scmp.eq.s32.totalorder %s16, 0
    %p256 = por %p254, %p255
    %p257 = scmp.ne.s32.totalorder %s246, %s249
    %p258 = scmp.eq.s32.totalorder %s21, 1
    %p259 = por %p257, %p258
    %p260 = scmp.ne.s32.totalorder %s249, %s250
    %p261 = scmp.eq.s32.totalorder %s21, 0
    %p262 = por %p260, %p261
    %p263 = scmp.ne.s32.totalorder %s249, %s250
    %p264 = scmp.eq.s32.totalorder %s22, 1
    %p265 = por %p263, %p264
    %p267 = scmp.ne.s32.totalorder %s250, %s266
    %p268 = scmp.eq.s32.totalorder %s22, 0
    %p269 = por %p267, %p268
    %p270 = scmp.le.s32.totalorder 1, %s16
    %p271 = scmp.lt.s32.totalorder %s16, 3
    %p272 = pnand %p270, %p271
    %p273 = pneg %p272
    // Predicated region
    $region9: #{_allspark_forward_full.5} parent=5 // pred_check
      _
    $region10: #{_allspark_forward_full.5} parent=5 // pred_check_branch
      %275 = sbr.rel (%p272) target = $region12
    $region11: #{_allspark_forward_full.5} parent=5 // pred_region
      %s276 = ssub.s32 %s16, 1
      // Predicated region
      $region13: #{_allspark_forward_full.5} parent=11 // pred_check
        %p277 = pneg %p89
      $region14: #{_allspark_forward_full.5} parent=11 // pred_check_branch
        %279 = sbr.rel (%p277) target = $region16
      $region15: #{_allspark_forward_full.5} parent=11 // pred_region
        _
      $region16: #{_allspark_forward_full.5} parent=11 // pred_fallthru
        _
      // Predicated region
      $region17: #{_allspark_forward_full.5} parent=11 // pred_check
        %p280 = pneg %p110
      $region18: #{_allspark_forward_full.5} parent=11 // pred_check_branch
        %282 = sbr.rel (%p280) target = $region20
      $region19: #{_allspark_forward_full.5} parent=11 // pred_region
        _
      $region20: #{_allspark_forward_full.5} parent=11 // pred_fallthru
        _
      // Predicated region
      $region21: #{_allspark_forward_full.5} parent=11 // pred_check
        %p283 = pneg %p131
      $region22: #{_allspark_forward_full.5} parent=11 // pred_check_branch
        %285 = sbr.rel (%p283) target = $region24
      $region23: #{_allspark_forward_full.5} parent=11 // pred_region
        _
      $region24: #{_allspark_forward_full.5} parent=11 // pred_fallthru
        _
      // Predicated region
      $region25: #{_allspark_forward_full.5} parent=11 // pred_check
        %p286 = pneg %p152
      $region26: #{_allspark_forward_full.5} parent=11 // pred_check_branch
        %288 = sbr.rel (%p286) target = $region28
      $region27: #{_allspark_forward_full.5} parent=11 // pred_region
        _
      $region28: #{_allspark_forward_full.5} parent=11 // pred_fallthru
        _
      // Predicated region
      $region29: #{_allspark_forward_full.5} parent=11 // pred_check
        %p289 = pneg %p173
      $region30: #{_allspark_forward_full.5} parent=11 // pred_check_branch
        %291 = sbr.rel (%p289) target = $region32
      $region31: #{_allspark_forward_full.5} parent=11 // pred_region
        _
      $region32: #{_allspark_forward_full.5} parent=11 // pred_fallthru
        _
      // Predicated region
      $region33: #{_allspark_forward_full.5} parent=11 // pred_check
        %p292 = pneg %p194
      $region34: #{_allspark_forward_full.5} parent=11 // pred_check_branch
        %294 = sbr.rel (%p292) target = $region36
      $region35: #{_allspark_forward_full.5} parent=11 // pred_region
        _
      $region36: #{_allspark_forward_full.5} parent=11 // pred_fallthru
        _
      // Predicated region
      $region37: #{_allspark_forward_full.5} parent=11 // pred_check
        %p295 = pneg %p215
      $region38: #{_allspark_forward_full.5} parent=11 // pred_check_branch
        %297 = sbr.rel (%p295) target = $region40
      $region39: #{_allspark_forward_full.5} parent=11 // pred_region
        _
      $region40: #{_allspark_forward_full.5} parent=11 // pred_fallthru
        _
      // Predicated region
      $region41: #{_allspark_forward_full.5} parent=11 // pred_check
        %p298 = pneg %p236
      $region42: #{_allspark_forward_full.5} parent=11 // pred_check_branch
        %300 = sbr.rel (%p298) target = $region44
      $region43: #{_allspark_forward_full.5} parent=11 // pred_region
        _
      $region44: #{_allspark_forward_full.5} parent=11 // pred_fallthru
        _
    $region12: #{_allspark_forward_full.5} parent=5 // pred_fallthru
      _
    %p301 = scmp.lt.s32.totalorder %s16, 2
    // Predicated region
    $region45: #{_allspark_forward_full.5} parent=5 // pred_check
      %p302 = pneg %p301
    $region46: #{_allspark_forward_full.5} parent=5 // pred_check_branch
      %304 = sbr.rel (%p302) target = $region48
    $region47: #{_allspark_forward_full.5} parent=5 // pred_region
      // Predicated region
      $region49: #{_allspark_forward_full.5} parent=47 // pred_check
        %p305 = pneg %p36
      $region50: #{_allspark_forward_full.5} parent=47 // pred_check_branch
        %307 = sbr.rel (%p305) target = $region52
      $region51: #{_allspark_forward_full.5} parent=47 // pred_region
        %p308 = scmp.lt.s32.totalorder %s16, 1
        %s309 = scalar_select %p308, %s16, 1
        %s310 = smul.addr %s309, 8
        %s311 = smul.addr %s310, 4
        %s312 = scalar_lea.vmem %s0, %s311
      $region52: #{_allspark_forward_full.5} parent=47 // pred_fallthru
        _
      // Predicated region
      $region53: #{_allspark_forward_full.5} parent=47 // pred_check
        %p313 = pneg %p62
      $region54: #{_allspark_forward_full.5} parent=47 // pred_check_branch
        %315 = sbr.rel (%p313) target = $region56
      $region55: #{_allspark_forward_full.5} parent=47 // pred_region
        %p316 = scmp.lt.s32.totalorder %s16, 1
        %s317 = scalar_select %p316, %s16, 1
        %s318 = smul.addr %s317, 8
        %s319 = smul.addr %s318, 4
        %s320 = scalar_lea.vmem %s1, %s319
      $region56: #{_allspark_forward_full.5} parent=47 // pred_fallthru
        _
    $region48: #{_allspark_forward_full.5} parent=5 // pred_fallthru
      _
    %p321 = scmp.le.s32.totalorder 1, %s16
    %p322 = scmp.lt.s32.totalorder %s16, 3
    %p323 = pnand %p321, %p322
    %p324 = pneg %p323
    // Predicated region
    $region57: #{_allspark_forward_full.5} parent=5 // pred_check
      _
    $region58: #{_allspark_forward_full.5} parent=5 // pred_check_branch
      %326 = sbr.rel (%p323) target = $region60
    $region59: #{_allspark_forward_full.5} parent=5 // pred_region
      %s327 = ssub.s32 %s16, 1
      %p328 = scmp.lt.s32.totalorder %s21, 1
      %s329 = scalar_select %p328, %s21, 1
      %s330 = smul.addr %s329, 8
      %s331 = smul.addr %s330, 4
      %s332 = scalar_lea.vmem %s0, %s331
      %p333 = pneg %p42
      %p334 = pneg %p39
      %p335 = scmp.lt.s32.totalorder %s21, 1
      %s336 = scalar_select %p335, %s21, 1
      %s337 = smul.addr %s336, 8
      %s338 = smul.addr %s337, 4
      %s339 = scalar_lea.vmem %s1, %s338
      %p340 = pneg %p68
      %p341 = pneg %p65
      %p342 = pneg %p89
      %p343 = pneg %p86
      %p344 = pneg %p110
      %p345 = pneg %p107
      %p346 = pneg %p131
      %p347 = pneg %p128
      %p348 = pneg %p152
      %p349 = pneg %p149
      %p350 = pneg %p173
      %p351 = pneg %p170
      %p352 = pneg %p194
      %p353 = pneg %p191
      %p354 = pneg %p215
      %p355 = pneg %p212
      %p356 = pneg %p236
      %p357 = pneg %p233
      %p358 = pneg %p262
      %p359 = pneg %p259
      %p360 = scmp.lt.s32.totalorder %s21, 1
      %s361 = scalar_select %p360, %s21, 1
      %s362 = smul.addr %s361, 2
      %s363 = smul.addr %s362, 4
      %s364 = scalar_lea.vmem %s10, %s363
      %p365 = scmp.lt.s32.totalorder %s21, 1
      %s366 = scalar_select %p365, %s21, 1
      %s367 = smul.addr %s366, 8
      %s368 = smul.addr %s367, 4
      %s369 = scalar_lea.vmem %s0, %s368
      %p370 = scmp.lt.s32.totalorder %s21, 1
      %s371 = scalar_select %p370, %s21, 1
      %s372 = smul.addr %s371, 8
      %s373 = smul.addr %s372, 4
      %s374 = scalar_lea.vmem %s1, %s373
      %p375 = scmp.lt.s32.totalorder %s21, 1
      %s376 = scalar_select %p375, %s21, 1
      %s377 = smul.addr %s376, 2
      %s378 = smul.addr %s377, 4
      %s379 = scalar_lea.vmem %s10, %s378
      %v381 = vld [vmem:[%s369] sm:$0xff]
      %v382 = vld [vmem:[%s369 + $0x8] sm:$0xff]
      %v383 = vld [vmem:[%s369 + $0x10] sm:$0xff]
      %v384 = vld [vmem:[%s369 + $0x18] sm:$0xff]
      %v385 = vld [vmem:[%s2] sm:$0xf]
      %v386 = vld [vmem:[%s2 + $0x4] sm:$0xf]
      %v387 = vld [vmem:[%s2 + $0x8] sm:$0xf]
      %v388 = vld [vmem:[%s2 + $0xc] sm:$0xf]
      %v389 = vld [vmem:[%s2 + $0x10] sm:$0xf]
      %v390 = vld [vmem:[%s2 + $0x14] sm:$0xf]
      %v391 = vld [vmem:[%s2 + $0x18] sm:$0xf]
      %v392 = vld [vmem:[%s2 + $0x1c] sm:$0xf]
      %v401 = vunpack.c.l.b16 %v385
      %v402 = vunpack.c.l.b16 %v386
      %v403 = vunpack.c.l.b16 %v387
      %v404 = vunpack.c.l.b16 %v388
      %v405 = vunpack.c.l.b16 %v389
      %v406 = vunpack.c.l.b16 %v390
      %v407 = vunpack.c.l.b16 %v391
      %v408 = vunpack.c.l.b16 %v392
      %v409 = vpack.c.b16 %v402, %v401
      %v410 = vpack.c.b16 %v404, %v403
      %v411 = vpack.c.b16 %v406, %v405
      %v412 = vpack.c.b16 %v408, %v407
      %v417 = vunpack.c.l.b16 %v381
      %v418 = vunpack.c.h.b16 %v381
      %v419 = vunpack.c.l.b16 %v382
      %v420 = vunpack.c.h.b16 %v382
      %v421 = vunpack.c.l.b16 %v383
      %v422 = vunpack.c.h.b16 %v383
      %v423 = vunpack.c.l.b16 %v384
      %v424 = vunpack.c.h.b16 %v384
      %v425 = vpack.c.b16 %v419, %v417
      %v426 = vpack.c.b16 %v420, %v418
      %v427 = vpack.c.b16 %v423, %v421
      %v428 = vpack.c.b16 %v424, %v422
      %vm433 = vcmask 261120
      %v435 = vsel %vm433, %v409, 0
      %v438 = vsel %vm433, %v410, 0
      %v441 = vsel %vm433, %v411, 0
      %v444 = vsel %vm433, %v412, 0
      %446 = vmatprep.subr.bf16.mxu0 %v426
      %447 = vmatpush1.bf16.msra.mxu0 %v425
      %448 = vmatprep.subr.bf16.mxu0 %v428
      %449 = vmatpush1.bf16.msra.mxu0 %v427
      %450 = vmatprep.subr.bf16.mxu0 0
      %451 = vmatpush1.bf16.msra.mxu0 0
      %452 = vmatprep.subr.bf16.mxu0 0
      %453 = vmatpush1.bf16.msra.mxu0 0
      %454 = vmatprep.subr.bf16.mxu0 0
      %455 = vmatpush1.bf16.msra.mxu0 0
      %456 = vmatprep.subr.bf16.mxu0 0
      %457 = vmatpush1.bf16.msra.mxu0 0
      %458 = vmatprep.subr.bf16.mxu0 0
      %459 = vmatpush1.bf16.msra.mxu0 0
      %460 = vmatprep.subr.bf16.mxu0 0
      %461 = vmatpush1.bf16.msra.mxu0 0
      %462 = vmatprep.subr.bf16.mxu0 0
      %463 = vmatpush1.bf16.msra.mxu0 0
      %464 = vmatprep.subr.bf16.mxu0 0
      %465 = vmatpush1.bf16.msra.mxu0 0
      %466 = vmatprep.subr.bf16.mxu0 0
      %467 = vmatpush1.bf16.msra.mxu0 0
      %468 = vmatprep.subr.bf16.mxu0 0
      %469 = vmatpush1.bf16.msra.mxu0 0
      %470 = vmatprep.subr.bf16.mxu0 0
      %471 = vmatpush1.bf16.msra.mxu0 0
      %472 = vmatprep.subr.bf16.mxu0 0
      %473 = vmatpush1.bf16.msra.mxu0 0
      %474 = vmatprep.subr.bf16.mxu0 0
      %475 = vmatpush1.bf16.msra.mxu0 0
      %476 = vmatprep.subr.bf16.mxu0 0
      %477 = vmatpush1.bf16.msra.mxu0 0
      %478 = vmatprep.mubr.bf16.mxu0 0
      %479 = vmatmul.mubr.bf16.gmra.mrb[0].mxu0 %v435
      %v480 = vpop.f32.mrb[0].mxu0
      %v481 = vadd.f32 0.0, %v480
      %v482 = vpop.f32.mrb[0].mxu0
      %v483 = vadd.f32 0.0, %v482
      %v484 = vpop.f32.mrb[0].mxu0
      %v485 = vadd.f32 0.0, %v484
      %v486 = vpop.f32.mrb[0].mxu0
      %v487 = vadd.f32 0.0, %v486
      %488 = vmatprep.mubr.bf16.mxu0 0
      %489 = vmatmul.mubr.bf16.gmra.mrb[0].mxu0 %v438
      %v490 = vpop.f32.mrb[0].mxu0
      %v491 = vadd.f32 0.0, %v490
      %v492 = vpop.f32.mrb[0].mxu0
      %v493 = vadd.f32 0.0, %v492
      %v494 = vpop.f32.mrb[0].mxu0
      %v495 = vadd.f32 0.0, %v494
      %v496 = vpop.f32.mrb[0].mxu0
      %v497 = vadd.f32 0.0, %v496
      %498 = vmatprep.mubr.bf16.mxu0 0
      %499 = vmatmul.mubr.bf16.gmra.mrb[0].mxu0 %v441
      %v500 = vpop.f32.mrb[0].mxu0
      %v501 = vadd.f32 0.0, %v500
      %v502 = vpop.f32.mrb[0].mxu0
      %v503 = vadd.f32 0.0, %v502
      %v504 = vpop.f32.mrb[0].mxu0
      %v505 = vadd.f32 0.0, %v504
      %v506 = vpop.f32.mrb[0].mxu0
      %v507 = vadd.f32 0.0, %v506
      %508 = vmatprep.mubr.bf16.mxu0 0
      %509 = vmatmul.mubr.bf16.gmra.mrb[0].mxu0 %v444
      %v510 = vpop.f32.mrb[0].mxu0
      %v511 = vadd.f32 0.0, %v510
      %v512 = vpop.f32.mrb[0].mxu0
      %v513 = vadd.f32 0.0, %v512
      %v514 = vpop.f32.mrb[0].mxu0
      %v515 = vadd.f32 0.0, %v514
      %v516 = vpop.f32.mrb[0].mxu0
      %v517 = vadd.f32 0.0, %v516
      %518 = vdwg.mxu0
      %v519 = vpack.c.bf16 %v485, %v481
      %v520 = vpack.c.bf16 %v487, %v483
      %v521 = vpack.c.bf16 %v495, %v491
      %v522 = vpack.c.bf16 %v497, %v493
      %v523 = vpack.c.bf16 %v505, %v501
      %v524 = vpack.c.bf16 %v507, %v503
      %v525 = vpack.c.bf16 %v515, %v511
      %v526 = vpack.c.bf16 %v517, %v513
      %v527 = vld [vmem:[%s3] sm:$0xff]
      %v528 = vld [vmem:[%s3 + $0x8] sm:$0xff]
      %v529 = vld [vmem:[%s3 + $0x10] sm:$0xff]
      %v530 = vld [vmem:[%s3 + $0x18] sm:$0xff]
      %v531 = vld [vmem:[%s3 + $0x20] sm:$0xff]
      %v532 = vld [vmem:[%s3 + $0x28] sm:$0xff]
      %v533 = vld [vmem:[%s3 + $0x30] sm:$0xff]
      %v534 = vld [vmem:[%s3 + $0x38] sm:$0xff]
      %v535 = vld [vmem:[%s3 + $0x40] sm:$0xff]
      %v536 = vld [vmem:[%s3 + $0x48] sm:$0xff]
      %v537 = vld [vmem:[%s3 + $0x50] sm:$0xff]
      %v538 = vld [vmem:[%s3 + $0x58] sm:$0xff]
      %v539 = vld [vmem:[%s3 + $0x60] sm:$0xff]
      %v540 = vld [vmem:[%s3 + $0x68] sm:$0xff]
      %v541 = vld [vmem:[%s3 + $0x70] sm:$0xff]
      %v542 = vld [vmem:[%s3 + $0x78] sm:$0xff]
      %v559 = vunpack.c.l.b16 %v527
      %v560 = vunpack.c.h.b16 %v527
      %v561 = vunpack.c.l.b16 %v528
      %v562 = vunpack.c.h.b16 %v528
      %v563 = vunpack.c.l.b16 %v529
      %v564 = vunpack.c.h.b16 %v529
      %v565 = vunpack.c.l.b16 %v530
      %v566 = vunpack.c.h.b16 %v530
      %v567 = vunpack.c.l.b16 %v531
      %v568 = vunpack.c.h.b16 %v531
      %v569 = vunpack.c.l.b16 %v532
      %v570 = vunpack.c.h.b16 %v532
      %v571 = vunpack.c.l.b16 %v533
      %v572 = vunpack.c.h.b16 %v533
      %v573 = vunpack.c.l.b16 %v534
      %v574 = vunpack.c.h.b16 %v534
      %v575 = vunpack.c.l.b16 %v535
      %v576 = vunpack.c.h.b16 %v535
      %v577 = vunpack.c.l.b16 %v536
      %v578 = vunpack.c.h.b16 %v536
      %v579 = vunpack.c.l.b16 %v537
      %v580 = vunpack.c.h.b16 %v537
      %v581 = vunpack.c.l.b16 %v538
      %v582 = vunpack.c.h.b16 %v538
      %v583 = vunpack.c.l.b16 %v539
      %v584 = vunpack.c.h.b16 %v539
      %v585 = vunpack.c.l.b16 %v540
      %v586 = vunpack.c.h.b16 %v540
      %v587 = vunpack.c.l.b16 %v541
      %v588 = vunpack.c.h.b16 %v541
      %v589 = vunpack.c.l.b16 %v542
      %v590 = vunpack.c.h.b16 %v542
      %v591 = vpack.c.b16 %v561, %v559
      %v592 = vpack.c.b16 %v562, %v560
      %v593 = vpack.c.b16 %v565, %v563
      %v594 = vpack.c.b16 %v566, %v564
      %v595 = vpack.c.b16 %v569, %v567
      %v596 = vpack.c.b16 %v570, %v568
      %v597 = vpack.c.b16 %v573, %v571
      %v598 = vpack.c.b16 %v574, %v572
      %v599 = vpack.c.b16 %v577, %v575
      %v600 = vpack.c.b16 %v578, %v576
      %v601 = vpack.c.b16 %v581, %v579
      %v602 = vpack.c.b16 %v582, %v580
      %v603 = vpack.c.b16 %v585, %v583
      %v604 = vpack.c.b16 %v586, %v584
      %v605 = vpack.c.b16 %v589, %v587
      %v606 = vpack.c.b16 %v590, %v588
      %623 = vmatprep.subr.bf16.mxu0 %v592
      %624 = vmatpush1.bf16.xpose.msra.mxu0 %v591
      %625 = vmatprep.subr.bf16.mxu0 %v594
      %626 = vmatpush1.bf16.xpose.msra.mxu0 %v593
      %627 = vmatprep.subr.bf16.mxu0 %v596
      %628 = vmatpush1.bf16.xpose.msra.mxu0 %v595
      %629 = vmatprep.subr.bf16.mxu0 %v598
      %630 = vmatpush1.bf16.xpose.msra.mxu0 %v597
      %631 = vmatprep.subr.bf16.mxu0 %v600
      %632 = vmatpush1.bf16.xpose.msra.mxu0 %v599
      %633 = vmatprep.subr.bf16.mxu0 %v602
      %634 = vmatpush1.bf16.xpose.msra.mxu0 %v601
      %635 = vmatprep.subr.bf16.mxu0 %v604
      %636 = vmatpush1.bf16.xpose.msra.mxu0 %v603
      %637 = vmatprep.subr.bf16.mxu0 %v606
      %638 = vmatpush1.bf16.xpose.msra.mxu0 %v605
      %639 = vmatprep.subr.bf16.mxu0 0
      %640 = vmatpush1.bf16.xpose.msra.mxu0 0
      %641 = vmatprep.subr.bf16.mxu0 0
      %642 = vmatpush1.bf16.xpose.msra.mxu0 0
      %643 = vmatprep.subr.bf16.mxu0 0
      %644 = vmatpush1.bf16.xpose.msra.mxu0 0
      %645 = vmatprep.subr.bf16.mxu0 0
      %646 = vmatpush1.bf16.xpose.msra.mxu0 0
      %647 = vmatprep.subr.bf16.mxu0 0
      %648 = vmatpush1.bf16.xpose.msra.mxu0 0
      %649 = vmatprep.subr.bf16.mxu0 0
      %650 = vmatpush1.bf16.xpose.msra.mxu0 0
      %651 = vmatprep.subr.bf16.mxu0 0
      %652 = vmatpush1.bf16.xpose.msra.mxu0 0
      %653 = vmatprep.subr.bf16.mxu0 0
      %654 = vmatpush1.bf16.xpose.msra.mxu0 0
      %655 = vmatprep.mubr.bf16.mxu0 %v520
      %656 = vmatmul.mubr.bf16.gmra.mrb[0].mxu0 %v519
      %v657 = vpop.f32.mrb[0].mxu0
      %v658 = vadd.f32 0.0, %v657
      %v659 = vpop.f32.mrb[0].mxu0
      %v660 = vpop.f32.mrb[0].mxu0
      %v661 = vadd.f32 0.0, %v660
      %v662 = vpop.f32.mrb[0].mxu0
      %663 = vmatprep.mubr.bf16.mxu0 %v522
      %664 = vmatmul.mubr.bf16.gmra.mrb[0].mxu0 %v521
      %v665 = vpop.f32.mrb[0].mxu0
      %v666 = vadd.f32 0.0, %v665
      %v667 = vpop.f32.mrb[0].mxu0
      %v668 = vpop.f32.mrb[0].mxu0
      %v669 = vadd.f32 0.0, %v668
      %v670 = vpop.f32.mrb[0].mxu0
      %671 = vmatprep.mubr.bf16.mxu0 %v524
      %672 = vmatmul.mubr.bf16.gmra.mrb[0].mxu0 %v523
      %v673 = vpop.f32.mrb[0].mxu0
      %v674 = vadd.f32 0.0, %v673
      %v675 = vpop.f32.mrb[0].mxu0
      %v676 = vpop.f32.mrb[0].mxu0
      %v677 = vadd.f32 0.0, %v676
      %v678 = vpop.f32.mrb[0].mxu0
      %679 = vmatprep.mubr.bf16.mxu0 %v526
      %680 = vmatmul.mubr.bf16.gmra.mrb[0].mxu0 %v525
      %v681 = vpop.f32.mrb[0].mxu0
      %v682 = vadd.f32 0.0, %v681
      %v683 = vpop.f32.mrb[0].mxu0
      %v684 = vpop.f32.mrb[0].mxu0
      %v685 = vadd.f32 0.0, %v684
      %v686 = vpop.f32.mrb[0].mxu0
      %687 = vdwg.mxu0
      %688 = vadd.xlane.f32.xlu0 %v658
      %v689 = vpop.xlane.xlu0 %688
      %690 = vadd.xlane.f32.xlu0 %v661
      %v691 = vpop.xlane.xlu0 %690
      %692 = vadd.xlane.f32.xlu0 %v666
      %v693 = vpop.xlane.xlu0 %692
      %694 = vadd.xlane.f32.xlu0 %v669
      %v695 = vpop.xlane.xlu0 %694
      %696 = vadd.xlane.f32.xlu0 %v674
      %v697 = vpop.xlane.xlu0 %696
      %698 = vadd.xlane.f32.xlu0 %v677
      %v699 = vpop.xlane.xlu0 %698
      %700 = vadd.xlane.f32.xlu0 %v682
      %v701 = vpop.xlane.xlu0 %700
      %702 = vadd.xlane.f32.xlu0 %v685
      %v703 = vpop.xlane.xlu0 %702
      %v704 = vrcp.pop 128.0
      %v705 = vmul.f32 %v689, %v704
      %v706 = vmul.f32 %v691, %v704
      %v707 = vmul.f32 %v693, %v704
      %v708 = vmul.f32 %v695, %v704
      %v709 = vmul.f32 %v697, %v704
      %v710 = vmul.f32 %v699, %v704
      %v711 = vmul.f32 %v701, %v704
      %v712 = vmul.f32 %v703, %v704
      %v713 = vadd.f32 %v705, %v706
      %v714 = vadd.f32 %v713, %v707
      %v715 = vadd.f32 %v714, %v708
      %v716 = vadd.f32 %v715, %v709
      %v717 = vadd.f32 %v716, %v710
      %v718 = vadd.f32 %v717, %v711
      %v719 = vadd.f32 %v718, %v712
      %v720 = vrot.slane %v719, 4
      %v721 = vadd.f32 %v719, %v720
      %v722 = vrot.slane %v721, 2
      %v723 = vadd.f32 %v721, %v722
      %v724 = vrot.slane %v723, 1
      %v725 = vadd.f32 %v723, %v724
      %v726 = vrcp.pop 64.0
      %v727 = vmul.f32 %v725, %v726
      %v728 = vsub.f32 %v658, %v727
      %v729 = vsub.f32 %v661, %v727
      %v730 = vsub.f32 %v666, %v727
      %v731 = vsub.f32 %v669, %v727
      %v732 = vsub.f32 %v674, %v727
      %v733 = vsub.f32 %v677, %v727
      %v734 = vsub.f32 %v682, %v727
      %v735 = vsub.f32 %v685, %v727
      %v736 = vmul.f32 %v728, %v728
      %v737 = vmul.f32 %v729, %v729
      %v738 = vmul.f32 %v730, %v730
      %v739 = vmul.f32 %v731, %v731
      %v740 = vmul.f32 %v732, %v732
      %v741 = vmul.f32 %v733, %v733
      %v742 = vmul.f32 %v734, %v734
      %v743 = vmul.f32 %v735, %v735
      %744 = vadd.xlane.f32.xlu0 %v736
      %v745 = vpop.xlane.xlu0 %744
      %746 = vadd.xlane.f32.xlu0 %v737
      %v747 = vpop.xlane.xlu0 %746
      %748 = vadd.xlane.f32.xlu0 %v738
      %v749 = vpop.xlane.xlu0 %748
      %750 = vadd.xlane.f32.xlu0 %v739
      %v751 = vpop.xlane.xlu0 %750
      %752 = vadd.xlane.f32.xlu0 %v740
      %v753 = vpop.xlane.xlu0 %752
      %754 = vadd.xlane.f32.xlu0 %v741
      %v755 = vpop.xlane.xlu0 %754
      %756 = vadd.xlane.f32.xlu0 %v742
      %v757 = vpop.xlane.xlu0 %756
      %758 = vadd.xlane.f32.xlu0 %v743
      %v759 = vpop.xlane.xlu0 %758
      %v760 = vmul.f32 %v745, %v704
      %v761 = vmul.f32 %v747, %v704
      %v762 = vmul.f32 %v749, %v704
      %v763 = vmul.f32 %v751, %v704
      %v764 = vmul.f32 %v753, %v704
      %v765 = vmul.f32 %v755, %v704
      %v766 = vmul.f32 %v757, %v704
      %v767 = vmul.f32 %v759, %v704
      %v768 = vadd.f32 %v760, %v761
      %v769 = vadd.f32 %v768, %v762
      %v770 = vadd.f32 %v769, %v763
      %v771 = vadd.f32 %v770, %v764
      %v772 = vadd.f32 %v771, %v765
      %v773 = vadd.f32 %v772, %v766
      %v774 = vadd.f32 %v773, %v767
      %v775 = vrot.slane %v774, 4
      %v776 = vadd.f32 %v774, %v775
      %v777 = vrot.slane %v776, 2
      %v778 = vadd.f32 %v776, %v777
      %v779 = vrot.slane %v778, 1
      %v780 = vadd.f32 %v778, %v779
      %v781 = vmul.f32 %v780, %v726
      %v782 = vadd.f32 %v781, 1e-05
      %v783 = vrsqrt.pop %v782
      %v784 = vmul.f32 %v728, %v783
      %v785 = vmul.f32 %v729, %v783
      %v786 = vmul.f32 %v730, %v783
      %v787 = vmul.f32 %v731, %v783
      %v788 = vmul.f32 %v732, %v783
      %v789 = vmul.f32 %v733, %v783
      %v790 = vmul.f32 %v734, %v783
      %v791 = vmul.f32 %v735, %v783
      %792 = vmax.xlane.f32.xlu0 %v784
      %v793 = vpop.xlane.xlu0 %792
      %794 = vmax.xlane.f32.xlu0 %v785
      %v795 = vpop.xlane.xlu0 %794
      %796 = vmax.xlane.f32.xlu0 %v786
      %v797 = vpop.xlane.xlu0 %796
      %798 = vmax.xlane.f32.xlu0 %v787
      %v799 = vpop.xlane.xlu0 %798
      %800 = vmax.xlane.f32.xlu0 %v788
      %v801 = vpop.xlane.xlu0 %800
      %802 = vmax.xlane.f32.xlu0 %v789
      %v803 = vpop.xlane.xlu0 %802
      %804 = vmax.xlane.f32.xlu0 %v790
      %v805 = vpop.xlane.xlu0 %804
      %806 = vmax.xlane.f32.xlu0 %v791
      %v807 = vpop.xlane.xlu0 %806
      %v808 = vsub.f32 %v784, %v793
      %v809 = vsub.f32 %v785, %v795
      %v810 = vsub.f32 %v786, %v797
      %v811 = vsub.f32 %v787, %v799
      %v812 = vsub.f32 %v788, %v801
      %v813 = vsub.f32 %v789, %v803
      %v814 = vsub.f32 %v790, %v805
      %v815 = vsub.f32 %v791, %v807
      %v816 = vmul.f32 %v808, 1.442695
      %v817 = vpow.pop %v816
      %v818 = vmul.f32 %v809, 1.442695
      %v819 = vpow.pop %v818
      %v820 = vmul.f32 %v810, 1.442695
      %v821 = vpow.pop %v820
      %v822 = vmul.f32 %v811, 1.442695
      %v823 = vpow.pop %v822
      %v824 = vmul.f32 %v812, 1.442695
      %v825 = vpow.pop %v824
      %v826 = vmul.f32 %v813, 1.442695
      %v827 = vpow.pop %v826
      %v828 = vmul.f32 %v814, 1.442695
      %v829 = vpow.pop %v828
      %v830 = vmul.f32 %v815, 1.442695
      %v831 = vpow.pop %v830
      %832 = vadd.xlane.f32.xlu0 %v817
      %v833 = vpop.xlane.xlu0 %832
      %834 = vadd.xlane.f32.xlu0 %v819
      %v835 = vpop.xlane.xlu0 %834
      %836 = vadd.xlane.f32.xlu0 %v821
      %v837 = vpop.xlane.xlu0 %836
      %838 = vadd.xlane.f32.xlu0 %v823
      %v839 = vpop.xlane.xlu0 %838
      %840 = vadd.xlane.f32.xlu0 %v825
      %v841 = vpop.xlane.xlu0 %840
      %842 = vadd.xlane.f32.xlu0 %v827
      %v843 = vpop.xlane.xlu0 %842
      %844 = vadd.xlane.f32.xlu0 %v829
      %v845 = vpop.xlane.xlu0 %844
      %846 = vadd.xlane.f32.xlu0 %v831
      %v847 = vpop.xlane.xlu0 %846
      %v848 = vrcp.pop %v833
      %v849 = vrcp.pop %v835
      %v850 = vrcp.pop %v837
      %v851 = vrcp.pop %v839
      %v852 = vrcp.pop %v841
      %v853 = vrcp.pop %v843
      %v854 = vrcp.pop %v845
      %v855 = vrcp.pop %v847
      %v856 = vmul.f32 %v817, %v848
      %v857 = vmul.f32 %v819, %v849
      %v858 = vmul.f32 %v821, %v850
      %v859 = vmul.f32 %v823, %v851
      %v860 = vmul.f32 %v825, %v852
      %v861 = vmul.f32 %v827, %v853
      %v862 = vmul.f32 %v829, %v854
      %v863 = vmul.f32 %v831, %v855
      %v864 = vpack.c.bf16 %v857, %v856
      %v865 = vpack.c.bf16 %v859, %v858
      %v866 = vpack.c.bf16 %v861, %v860
      %v867 = vpack.c.bf16 %v863, %v862
      %v868 = vld [vmem:[%s4] sm:$0xff]
      %v869 = vld [vmem:[%s4 + $0x8] sm:$0xff]
      %v870 = vld [vmem:[%s4 + $0x10] sm:$0xff]
      %v871 = vld [vmem:[%s4 + $0x18] sm:$0xff]
      %v872 = vld [vmem:[%s4 + $0x20] sm:$0xff]
      %v873 = vld [vmem:[%s4 + $0x28] sm:$0xff]
      %v874 = vld [vmem:[%s4 + $0x30] sm:$0xff]
      %v875 = vld [vmem:[%s4 + $0x38] sm:$0xff]
      %v876 = vld [vmem:[%s4 + $0x40] sm:$0xff]
      %v877 = vld [vmem:[%s4 + $0x48] sm:$0xff]
      %v878 = vld [vmem:[%s4 + $0x50] sm:$0xff]
      %v879 = vld [vmem:[%s4 + $0x58] sm:$0xff]
      %v880 = vld [vmem:[%s4 + $0x60] sm:$0xff]
      %v881 = vld [vmem:[%s4 + $0x68] sm:$0xff]
      %v882 = vld [vmem:[%s4 + $0x70] sm:$0xff]
      %v883 = vld [vmem:[%s4 + $0x78] sm:$0xff]
      %v900 = vunpack.c.l.b16 %v868
      %v901 = vunpack.c.h.b16 %v868
      %v902 = vunpack.c.l.b16 %v869
      %v903 = vunpack.c.h.b16 %v869
      %v904 = vunpack.c.l.b16 %v870
      %v905 = vunpack.c.h.b16 %v870
      %v906 = vunpack.c.l.b16 %v871
      %v907 = vunpack.c.h.b16 %v871
      %v908 = vunpack.c.l.b16 %v872
      %v909 = vunpack.c.h.b16 %v872
      %v910 = vunpack.c.l.b16 %v873
      %v911 = vunpack.c.h.b16 %v873
      %v912 = vunpack.c.l.b16 %v874
      %v913 = vunpack.c.h.b16 %v874
      %v914 = vunpack.c.l.b16 %v875
      %v915 = vunpack.c.h.b16 %v875
      %v916 = vunpack.c.l.b16 %v876
      %v917 = vunpack.c.h.b16 %v876
      %v918 = vunpack.c.l.b16 %v877
      %v919 = vunpack.c.h.b16 %v877
      %v920 = vunpack.c.l.b16 %v878
      %v921 = vunpack.c.h.b16 %v878
      %v922 = vunpack.c.l.b16 %v879
      %v923 = vunpack.c.h.b16 %v879
      %v924 = vunpack.c.l.b16 %v880
      %v925 = vunpack.c.h.b16 %v880
      %v926 = vunpack.c.l.b16 %v881
      %v927 = vunpack.c.h.b16 %v881
      %v928 = vunpack.c.l.b16 %v882
      %v929 = vunpack.c.h.b16 %v882
      %v930 = vunpack.c.l.b16 %v883
      %v931 = vunpack.c.h.b16 %v883
      %v932 = vpack.c.b16 %v902, %v900
      %v933 = vpack.c.b16 %v903, %v901
      %v934 = vpack.c.b16 %v906, %v904
      %v935 = vpack.c.b16 %v907, %v905
      %v936 = vpack.c.b16 %v910, %v908
      %v937 = vpack.c.b16 %v911, %v909
      %v938 = vpack.c.b16 %v914, %v912
      %v939 = vpack.c.b16 %v915, %v913
      %v940 = vpack.c.b16 %v918, %v916
      %v941 = vpack.c.b16 %v919, %v917
      %v942 = vpack.c.b16 %v922, %v920
      %v943 = vpack.c.b16 %v923, %v921
      %v944 = vpack.c.b16 %v926, %v924
      %v945 = vpack.c.b16 %v927, %v925
      %v946 = vpack.c.b16 %v930, %v928
      %v947 = vpack.c.b16 %v931, %v929
      %964 = vmatprep.subr.bf16.mxu0 %v933
      %965 = vmatpush1.bf16.msra.mxu0 %v932
      %966 = vmatprep.subr.bf16.mxu0 %v935
      %967 = vmatpush1.bf16.msra.mxu0 %v934
      %968 = vmatprep.subr.bf16.mxu0 %v937
      %969 = vmatpush1.bf16.msra.mxu0 %v936
      %970 = vmatprep.subr.bf16.mxu0 %v939
      %971 = vmatpush1.bf16.msra.mxu0 %v938
      %972 = vmatprep.subr.bf16.mxu0 %v941
      %973 = vmatpush1.bf16.msra.mxu0 %v940
      %974 = vmatprep.subr.bf16.mxu0 %v943
      %975 = vmatpush1.bf16.msra.mxu0 %v942
      %976 = vmatprep.subr.bf16.mxu0 %v945
      %977 = vmatpush1.bf16.msra.mxu0 %v944
      %978 = vmatprep.subr.bf16.mxu0 %v947
      %979 = vmatpush1.bf16.msra.mxu0 %v946
      %980 = vmatprep.subr.bf16.mxu0 0
      %981 = vmatpush1.bf16.msra.mxu0 0
      %982 = vmatprep.subr.bf16.mxu0 0
      %983 = vmatpush1.bf16.msra.mxu0 0
      %984 = vmatprep.subr.bf16.mxu0 0
      %985 = vmatpush1.bf16.msra.mxu0 0
      %986 = vmatprep.subr.bf16.mxu0 0
      %987 = vmatpush1.bf16.msra.mxu0 0
      %988 = vmatprep.subr.bf16.mxu0 0
      %989 = vmatpush1.bf16.msra.mxu0 0
      %990 = vmatprep.subr.bf16.mxu0 0
      %991 = vmatpush1.bf16.msra.mxu0 0
      %992 = vmatprep.subr.bf16.mxu0 0
      %993 = vmatpush1.bf16.msra.mxu0 0
      %994 = vmatprep.subr.bf16.mxu0 0
      %995 = vmatpush1.bf16.msra.mxu0 0
      %996 = vmatprep.mubr.bf16.mxu0 0
      %997 = vmatmul.mubr.bf16.gmra.mrb[0].mxu0 %v864
      %v998 = vpop.f32.mrb[0].mxu0
      %v999 = vadd.f32 0.0, %v998
      %v1000 = vpop.f32.mrb[0].mxu0
      %v1001 = vadd.f32 0.0, %v1000
      %v1002 = vpop.f32.mrb[0].mxu0
      %v1003 = vadd.f32 0.0, %v1002
      %v1004 = vpop.f32.mrb[0].mxu0
      %v1005 = vadd.f32 0.0, %v1004
      %1006 = vmatprep.mubr.bf16.mxu0 0
      %1007 = vmatmul.mubr.bf16.gmra.mrb[0].mxu0 %v865
      %v1008 = vpop.f32.mrb[0].mxu0
      %v1009 = vadd.f32 0.0, %v1008
      %v1010 = vpop.f32.mrb[0].mxu0
      %v1011 = vadd.f32 0.0, %v1010
      %v1012 = vpop.f32.mrb[0].mxu0
      %v1013 = vadd.f32 0.0, %v1012
      %v1014 = vpop.f32.mrb[0].mxu0
      %v1015 = vadd.f32 0.0, %v1014
      %1016 = vmatprep.mubr.bf16.mxu0 0
      %1017 = vmatmul.mubr.bf16.gmra.mrb[0].mxu0 %v866
      %v1018 = vpop.f32.mrb[0].mxu0
      %v1019 = vadd.f32 0.0, %v1018
      %v1020 = vpop.f32.mrb[0].mxu0
      %v1021 = vadd.f32 0.0, %v1020
      %v1022 = vpop.f32.mrb[0].mxu0
      %v1023 = vadd.f32 0.0, %v1022
      %v1024 = vpop.f32.mrb[0].mxu0
      %v1025 = vadd.f32 0.0, %v1024
      %1026 = vmatprep.mubr.bf16.mxu0 0
      %1027 = vmatmul.mubr.bf16.gmra.mrb[0].mxu0 %v867
      %v1028 = vpop.f32.mrb[0].mxu0
      %v1029 = vadd.f32 0.0, %v1028
      %v1030 = vpop.f32.mrb[0].mxu0
      %v1031 = vadd.f32 0.0, %v1030
      %v1032 = vpop.f32.mrb[0].mxu0
      %v1033 = vadd.f32 0.0, %v1032
      %v1034 = vpop.f32.mrb[0].mxu0
      %v1035 = vadd.f32 0.0, %v1034
      %1036 = vdwg.mxu0
      %v1037 = vld [vmem:[%s5] sm:$0xf]
      %v1038 = vld [vmem:[%s5 + $0x4] sm:$0xf]
      %v1039 = vld [vmem:[%s5 + $0x8] sm:$0xf]
      %v1040 = vld [vmem:[%s5 + $0xc] sm:$0xf]
      %v1041 = vpack.c.bf16 %v1003, %v999
      %v1042 = vpack.c.bf16 %v1005, %v1001
      %v1043 = vpack.c.bf16 %v1013, %v1009
      %v1044 = vpack.c.bf16 %v1015, %v1011
      %v1045 = vpack.c.bf16 %v1023, %v1019
      %v1046 = vpack.c.bf16 %v1025, %v1021
      %v1047 = vpack.c.bf16 %v1033, %v1029
      %v1048 = vpack.c.bf16 %v1035, %v1031
      %v1049 = vld [vmem:[%s374] sm:$0xff]
      %v1050 = vld [vmem:[%s374 + $0x8] sm:$0xff]
      %v1051 = vld [vmem:[%s374 + $0x10] sm:$0xff]
      %v1052 = vld [vmem:[%s374 + $0x18] sm:$0xff]
      %v1053 = vld [vmem:[%s6] sm:$0xff]
      %v1054 = vld [vmem:[%s6 + $0x8] sm:$0xff]
      %v1055 = vld [vmem:[%s6 + $0x10] sm:$0xff]
      %v1056 = vld [vmem:[%s6 + $0x18] sm:$0xff]
      %v1057 = vld [vmem:[%s7] sm:$0xff]
      %v1058 = vld [vmem:[%s7 + $0x8] sm:$0xff]
      %v1059 = vld [vmem:[%s7 + $0x10] sm:$0xff]
      %v1060 = vld [vmem:[%s7 + $0x18] sm:$0xff]
      %v1061 = vld [vmem:[%s8] sm:$0x3]
      %v1062 = vld [vmem:[%s9] sm:$0xf]
      %v1063 = vunpack.c.l.bf16 %v1049
      %v1064 = vunpack.c.h.bf16 %v1049
      %v1065 = vunpack.c.l.bf16 %v1050
      %v1066 = vunpack.c.h.bf16 %v1050
      %v1067 = vunpack.c.l.bf16 %v1051
      %v1068 = vunpack.c.h.bf16 %v1051
      %v1069 = vunpack.c.l.bf16 %v1052
      %v1070 = vunpack.c.h.bf16 %v1052
      %v1075 = vunpack.c.l.b16 %v1037
      %v1076 = vunpack.c.l.b16 %v1038
      %v1077 = vunpack.c.l.b16 %v1039
      %v1078 = vunpack.c.l.b16 %v1040
      %v1079 = vpack.c.b16 %v1076, %v1075
      %v1080 = vpack.c.b16 %v1078, %v1077
      %vm1081 = vcmask 523264
      %v1083 = vsel %vm1081, %v1079, 0
      %v1086 = vsel %vm1081, %v1080, 0
      %1088 = vmatprep.subr.bf16.mxu0 %v1042
      %1089 = vmatpush1.bf16.msra.mxu0 %v1041
      %1090 = vmatprep.subr.bf16.mxu0 %v1044
      %1091 = vmatpush1.bf16.msra.mxu0 %v1043
      %1092 = vmatprep.subr.bf16.mxu0 %v1046
      %1093 = vmatpush1.bf16.msra.mxu0 %v1045
      %1094 = vmatprep.subr.bf16.mxu0 %v1048
      %1095 = vmatpush1.bf16.msra.mxu0 %v1047
      %1096 = vmatprep.subr.bf16.mxu0 0
      %1097 = vmatpush1.bf16.msra.mxu0 0
      %1098 = vmatprep.subr.bf16.mxu0 0
      %1099 = vmatpush1.bf16.msra.mxu0 0
      %1100 = vmatprep.subr.bf16.mxu0 0
      %1101 = vmatpush1.bf16.msra.mxu0 0
      %1102 = vmatprep.subr.bf16.mxu0 0
      %1103 = vmatpush1.bf16.msra.mxu0 0
      %1104 = vmatprep.subr.bf16.mxu0 0
      %1105 = vmatpush1.bf16.msra.mxu0 0
      %1106 = vmatprep.subr.bf16.mxu0 0
      %1107 = vmatpush1.bf16.msra.mxu0 0
      %1108 = vmatprep.subr.bf16.mxu0 0
      %1109 = vmatpush1.bf16.msra.mxu0 0
      %1110 = vmatprep.subr.bf16.mxu0 0
      %1111 = vmatpush1.bf16.msra.mxu0 0
      %1112 = vmatprep.subr.bf16.mxu0 0
      %1113 = vmatpush1.bf16.msra.mxu0 0
      %1114 = vmatprep.subr.bf16.mxu0 0
      %1115 = vmatpush1.bf16.msra.mxu0 0
      %1116 = vmatprep.subr.bf16.mxu0 0
      %1117 = vmatpush1.bf16.msra.mxu0 0
      %1118 = vmatprep.subr.bf16.mxu0 0
      %1119 = vmatpush1.bf16.msra.mxu0 0
      %1120 = vmatprep.mubr.bf16.mxu0 0
      %1121 = vmatmul.mubr.bf16.gmra.mrb[0].mxu0 %v1083
      %v1122 = vpop.f32.mrb[0].mxu0
      %v1123 = vadd.f32 %v1063, %v1122
      %v1124 = vpop.f32.mrb[0].mxu0
      %v1125 = vadd.f32 %v1064, %v1124
      %v1126 = vpop.f32.mrb[0].mxu0
      %v1127 = vadd.f32 %v1065, %v1126
      %v1128 = vpop.f32.mrb[0].mxu0
      %v1129 = vadd.f32 %v1066, %v1128
      %1130 = vmatprep.mubr.bf16.mxu0 0
      %1131 = vmatmul.mubr.bf16.gmra.mrb[0].mxu0 %v1086
      %v1132 = vpop.f32.mrb[0].mxu0
      %v1133 = vadd.f32 %v1067, %v1132
      %v1134 = vpop.f32.mrb[0].mxu0
      %v1135 = vadd.f32 %v1068, %v1134
      %v1136 = vpop.f32.mrb[0].mxu0
      %v1137 = vadd.f32 %v1069, %v1136
      %v1138 = vpop.f32.mrb[0].mxu0
      %v1139 = vadd.f32 %v1070, %v1138
      %1140 = vdwg.mxu0
      %v1141 = vadd.f32 %v1123, %v1127
      %v1142 = vadd.f32 %v1141, %v1133
      %v1143 = vadd.f32 %v1142, %v1137
      %v1144 = vrot.slane %v1143, 4
      %v1145 = vadd.f32 %v1143, %v1144
      %v1146 = vrot.slane %v1145, 2
      %v1147 = vadd.f32 %v1145, %v1146
      %v1148 = vrot.slane %v1147, 1
      %v1149 = vadd.f32 %v1147, %v1148
      %v1150 = vadd.f32 %v1125, %v1129
      %v1151 = vadd.f32 %v1150, %v1135
      %v1152 = vadd.f32 %v1151, %v1139
      %v1153 = vrot.slane %v1152, 4
      %v1154 = vadd.f32 %v1152, %v1153
      %v1155 = vrot.slane %v1154, 2
      %v1156 = vadd.f32 %v1154, %v1155
      %v1157 = vrot.slane %v1156, 1
      %v1158 = vadd.f32 %v1156, %v1157
      %v1159 = vrcp.pop 32.0
      %v1160 = vmul.f32 %v1149, %v1159
      %v1161 = vmul.f32 %v1158, %v1159
      %v1162 = vsub.f32 %v1123, %v1160
      %v1163 = vsub.f32 %v1125, %v1161
      %v1164 = vsub.f32 %v1127, %v1160
      %v1165 = vsub.f32 %v1129, %v1161
      %v1166 = vsub.f32 %v1133, %v1160
      %v1167 = vsub.f32 %v1135, %v1161
      %v1168 = vsub.f32 %v1137, %v1160
      %v1169 = vsub.f32 %v1139, %v1161
      %v1170 = vmul.f32 %v1162, %v1162
      %v1171 = vmul.f32 %v1163, %v1163
      %v1172 = vmul.f32 %v1164, %v1164
      %v1173 = vmul.f32 %v1165, %v1165
      %v1174 = vmul.f32 %v1166, %v1166
      %v1175 = vmul.f32 %v1167, %v1167
      %v1176 = vmul.f32 %v1168, %v1168
      %v1177 = vmul.f32 %v1169, %v1169
      %v1178 = vadd.f32 %v1170, %v1172
      %v1179 = vadd.f32 %v1178, %v1174
      %v1180 = vadd.f32 %v1179, %v1176
      %v1181 = vrot.slane %v1180, 4
      %v1182 = vadd.f32 %v1180, %v1181
      %v1183 = vrot.slane %v1182, 2
      %v1184 = vadd.f32 %v1182, %v1183
      %v1185 = vrot.slane %v1184, 1
      %v1186 = vadd.f32 %v1184, %v1185
      %v1187 = vadd.f32 %v1171, %v1173
      %v1188 = vadd.f32 %v1187, %v1175
      %v1189 = vadd.f32 %v1188, %v1177
      %v1190 = vrot.slane %v1189, 4
      %v1191 = vadd.f32 %v1189, %v1190
      %v1192 = vrot.slane %v1191, 2
      %v1193 = vadd.f32 %v1191, %v1192
      %v1194 = vrot.slane %v1193, 1
      %v1195 = vadd.f32 %v1193, %v1194
      %v1196 = vmul.f32 %v1186, %v1159
      %v1197 = vmul.f32 %v1195, %v1159
      %v1198 = vadd.f32 %v1196, 1e-06
      %v1199 = vadd.f32 %v1197, 1e-06
      %v1200 = vrsqrt.pop %v1198
      %v1201 = vrsqrt.pop %v1199
      %v1202 = vmul.f32 %v1162, %v1200
      %v1203 = vmul.f32 %v1163, %v1201
      %v1204 = vmul.f32 %v1164, %v1200
      %v1205 = vmul.f32 %v1165, %v1201
      %v1206 = vmul.f32 %v1166, %v1200
      %v1207 = vmul.f32 %v1167, %v1201
      %v1208 = vmul.f32 %v1168, %v1200
      %v1209 = vmul.f32 %v1169, %v1201
      %1211 = vset.pattern.permute.xlu0 0
      %1212 = vperm.xlu0 %1211, %v1053
      %v1213 = vpop.permute.xlu0 %1212
      %1216 = vset.pattern.permute.xlu0 0
      %1217 = vperm.xlu0 %1216, %v1054
      %v1218 = vpop.permute.xlu0 %1217
      %1221 = vset.pattern.permute.xlu0 0
      %1222 = vperm.xlu0 %1221, %v1055
      %v1223 = vpop.permute.xlu0 %1222
      %1226 = vset.pattern.permute.xlu0 0
      %1227 = vperm.xlu0 %1226, %v1056
      %v1228 = vpop.permute.xlu0 %1227
      %v1230 = vmul.f32 %v1202, %v1213
      %v1231 = vmul.f32 %v1203, %v1213
      %v1232 = vmul.f32 %v1204, %v1218
      %v1233 = vmul.f32 %v1205, %v1218
      %v1234 = vmul.f32 %v1206, %v1223
      %v1235 = vmul.f32 %v1207, %v1223
      %v1236 = vmul.f32 %v1208, %v1228
      %v1237 = vmul.f32 %v1209, %v1228
      %1239 = vset.pattern.permute.xlu0 0
      %1240 = vperm.xlu0 %1239, %v1057
      %v1241 = vpop.permute.xlu0 %1240
      %1244 = vset.pattern.permute.xlu0 0
      %1245 = vperm.xlu0 %1244, %v1058
      %v1246 = vpop.permute.xlu0 %1245
      %1249 = vset.pattern.permute.xlu0 0
      %1250 = vperm.xlu0 %1249, %v1059
      %v1251 = vpop.permute.xlu0 %1250
      %1254 = vset.pattern.permute.xlu0 0
      %1255 = vperm.xlu0 %1254, %v1060
      %v1256 = vpop.permute.xlu0 %1255
      %v1258 = vadd.f32 %v1230, %v1241
      %v1259 = vadd.f32 %v1231, %v1241
      %v1260 = vadd.f32 %v1232, %v1246
      %v1261 = vadd.f32 %v1233, %v1246
      %v1262 = vadd.f32 %v1234, %v1251
      %v1263 = vadd.f32 %v1235, %v1251
      %v1264 = vadd.f32 %v1236, %v1256
      %v1265 = vadd.f32 %v1237, %v1256
      %v1266 = vpack.c.bf16 %v1260, %v1258
      %v1267 = vpack.c.bf16 %v1261, %v1259
      %v1268 = vpack.c.bf16 %v1264, %v1262
      %v1269 = vpack.c.bf16 %v1265, %v1263
      %1271 = vset.pattern.permute.xlu0 0
      %1272 = vperm.xlu0 %1271, %v1062
      %v1273 = vpop.permute.xlu0 %1272
      %v1276 = vsel %vm433, %v1061, 0
      %1278 = vmatprep.subr.bf16.mxu0 %v1267
      %1279 = vmatpush1.bf16.msra.mxu0 %v1266
      %1280 = vmatprep.subr.bf16.mxu0 %v1269
      %1281 = vmatpush1.bf16.msra.mxu0 %v1268
      %1282 = vmatprep.subr.bf16.mxu0 0
      %1283 = vmatpush1.bf16.msra.mxu0 0
      %1284 = vmatprep.subr.bf16.mxu0 0
      %1285 = vmatpush1.bf16.msra.mxu0 0
      %1286 = vmatprep.subr.bf16.mxu0 0
      %1287 = vmatpush1.bf16.msra.mxu0 0
      %1288 = vmatprep.subr.bf16.mxu0 0
      %1289 = vmatpush1.bf16.msra.mxu0 0
      %1290 = vmatprep.subr.bf16.mxu0 0
      %1291 = vmatpush1.bf16.msra.mxu0 0
      %1292 = vmatprep.subr.bf16.mxu0 0
      %1293 = vmatpush1.bf16.msra.mxu0 0
      %1294 = vmatprep.subr.bf16.mxu0 0
      %1295 = vmatpush1.bf16.msra.mxu0 0
      %1296 = vmatprep.subr.bf16.mxu0 0
      %1297 = vmatpush1.bf16.msra.mxu0 0
      %1298 = vmatprep.subr.bf16.mxu0 0
      %1299 = vmatpush1.bf16.msra.mxu0 0
      %1300 = vmatprep.subr.bf16.mxu0 0
      %1301 = vmatpush1.bf16.msra.mxu0 0
      %1302 = vmatprep.subr.bf16.mxu0 0
      %1303 = vmatpush1.bf16.msra.mxu0 0
      %1304 = vmatprep.subr.bf16.mxu0 0
      %1305 = vmatpush1.bf16.msra.mxu0 0
      %1306 = vmatprep.subr.bf16.mxu0 0
      %1307 = vmatpush1.bf16.msra.mxu0 0
      %1308 = vmatprep.subr.bf16.mxu0 0
      %1309 = vmatpush1.bf16.msra.mxu0 0
      %1310 = vmatprep.mubr.bf16.mxu0 0
      %1311 = vmatmul.mubr.bf16.gmra.mrb[0].mxu0 %v1276
      %v1312 = vpop.f32.mrb[0].mxu0
      %v1313 = vadd.f32 %v1273, %v1312
      %v1314 = vpop.f32.mrb[0].mxu0
      %v1315 = vadd.f32 %v1273, %v1314
      %v1316 = vpop.f32.mrb[0].mxu0
      %v1317 = vpop.f32.mrb[0].mxu0
      %1318 = vdwg.mxu0
      %v1319 = vmul.f32 %v1313, 0.5
      %v1320 = vmul.f32 %v1315, 0.5
      %v1321 = vmul.f32 %v1313, 0.044715
      %v1322 = vmul.f32 %v1315, 0.044715
      %v1323 = vmul.f32 %v1321, %v1313
      %v1324 = vmul.f32 %v1322, %v1315
      %v1325 = vmul.f32 %v1323, %v1313
      %v1326 = vmul.f32 %v1324, %v1315
      %v1327 = vadd.f32 %v1313, %v1325
      %v1328 = vadd.f32 %v1315, %v1326
      %v1329 = vmul.f32 %v1327, 0.7978846
      %v1330 = vmul.f32 %v1328, 0.7978846
      %v1331 = vtanh.pop %v1329
      %v1332 = vtanh.pop %v1330
      %v1333 = vadd.f32 %v1331, 1.0
      %v1334 = vadd.f32 %v1332, 1.0
      %v1335 = vmul.f32 %v1319, %v1333
      %v1336 = vmul.f32 %v1320, %v1334
      %v1339 = vcombine.low %v1335, %v1336
      %1341 = vst [vmem:[%s379] sm:$0xff] %v1339
      %p1342 = scmp.lt.s32.totalorder %s21, 1
      %s1343 = scalar_select %p1342, %s21, 1
      %s1344 = smul.addr %s1343, 2
      %s1345 = smul.addr %s1344, 4
      %s1346 = scalar_lea.vmem %s10, %s1345
      // Predicated region
      $region61: #{_allspark_forward_full.5} parent=59 // pred_check
        %p1347 = pneg %p259
      $region62: #{_allspark_forward_full.5} parent=59 // pred_check_branch
        %1349 = sbr.rel (%p1347) target = $region64
      $region63: #{_allspark_forward_full.5} parent=59 // pred_region
        _
      $region64: #{_allspark_forward_full.5} parent=59 // pred_fallthru
        _
    $region60: #{_allspark_forward_full.5} parent=5 // pred_fallthru
      _
    %p1350 = scmp.le.s32.totalorder 2, %s16
    // Predicated region
    $region65: #{_allspark_forward_full.5} parent=5 // pred_check
      %p1351 = pneg %p1350
    $region66: #{_allspark_forward_full.5} parent=5 // pred_check_branch
      %1353 = sbr.rel (%p1351) target = $region68
    $region67: #{_allspark_forward_full.5} parent=5 // pred_region
      %s1354 = ssub.s32 %s16, 2
      // Predicated region
      $region69: #{_allspark_forward_full.5} parent=67 // pred_check
        %p1355 = pneg %p265
      $region70: #{_allspark_forward_full.5} parent=67 // pred_check_branch
        %1357 = sbr.rel (%p1355) target = $region72
      $region71: #{_allspark_forward_full.5} parent=67 // pred_region
        %p1358 = scmp.lt.s32.totalorder %s22, 1
        %s1359 = scalar_select %p1358, %s22, 1
        %s1360 = smul.addr %s1359, 2
        %s1361 = smul.addr %s1360, 4
        %s1362 = scalar_lea.vmem %s10, %s1361
      $region72: #{_allspark_forward_full.5} parent=67 // pred_fallthru
        _
    $region68: #{_allspark_forward_full.5} parent=5 // pred_fallthru
      _
  $region6: #{_allspark_forward_full.5} parent=0 // loop_footer
    %s20 = sadd.s32 1, %s16
  $region7: #{_allspark_forward_full.5} parent=0 // loop_footer_branch
    %15 = sbr.rel target = $region3
  $region8: #{_allspark_forward_full.5} parent=0 // loop_exit
    _

// kernel: _allspark_forward_full.4
$region0: #{_allspark_forward_full.4}
  #allocation0 [shape = 'u32[]', space=smem, size = 0x4, offset = 0x4, fixed_abs, tag = 'smem constant byte address 0x4 - core index']
  #allocation1 [shape = 'u32[144,128]{1,0:T(1,128)}', space=vmem, size = 0x12000, scoped, tag = 'internal scratch']
  %s0 = inlined_call_operand.vmem [shape: bf16[2,32,256], index: 0, kind: input, shape index: {}]
  %s1 = inlined_call_operand.vmem [shape: bf16[2,32,256], index: 1, kind: input, shape index: {}]
  %s2 = inlined_call_operand.vmem [shape: bf16[192,32], index: 2, kind: input, shape index: {}]
  %s3 = inlined_call_operand.vmem [shape: bf16[32,64], index: 3, kind: input, shape index: {}]
  %s4 = inlined_call_operand.vmem [shape: f32[32,1], index: 4, kind: input, shape index: {}]
  %s5 = inlined_call_operand.vmem [shape: f32[32,1], index: 5, kind: input, shape index: {}]
  %s6 = inlined_call_operand.vmem [shape: bf16[4,32], index: 6, kind: input, shape index: {}]
  %s7 = inlined_call_operand.vmem [shape: f32[4,1], index: 7, kind: input, shape index: {}]
  %s8 = inlined_call_operand.vmem [shape: f32[2,4,256], index: 8, kind: output, shape index: {}]
  %s9 = sld [smem:[#allocation0]]
  $region65: #{_allspark_forward_full.4} parent=0
    _
  %s11 = ssub.s32 1, %s9
  %s12 = scalar_select 0, %s11, %s9
  loop: start=0, step=1, limit=4
  $region2: #{_allspark_forward_full.4} parent=0 // loop_pre_header
    _
  $region3: #{_allspark_forward_full.4} parent=0 // loop_header
    %s14 = sphi 0, %s18
    %p15 = scmp.ge.s32.totalorder %s14, 4
    %s24 = sphi 0, %s26
    %s27 = sphi 0, %s24
    %s28 = sphi 0, %s27
    %s44 = sphi 0, %s28
    %s50 = sphi 0, %s52
    %s53 = sphi 0, %s50
    %s54 = sphi 0, %s53
    %s70 = sphi 0, %s54
    %s74 = sphi 0, %s74
    %s76 = sphi 0, %s74
    %s77 = sphi 0, %s76
    %s91 = sphi 0, %s77
    %s95 = sphi 0, %s95
    %s97 = sphi 0, %s95
    %s98 = sphi 0, %s97
    %s112 = sphi 0, %s98
    %s116 = sphi 0, %s116
    %s118 = sphi 0, %s116
    %s119 = sphi 0, %s118
    %s133 = sphi 0, %s119
    %s137 = sphi 0, %s137
    %s139 = sphi 0, %s137
    %s140 = sphi 0, %s139
    %s154 = sphi 0, %s140
    %s158 = sphi 0, %s158
    %s160 = sphi 0, %s158
    %s161 = sphi 0, %s160
    %s175 = sphi 0, %s161
    %s179 = sphi 0, %s179
    %s181 = sphi 0, %s179
    %s182 = sphi 0, %s181
    %s196 = sphi 0, %s182
    %s202 = sphi 0, %s204
    %s205 = sphi 0, %s202
    %s206 = sphi 0, %s205
    %s222 = sphi 0, %s206
  $region4: #{_allspark_forward_full.4} parent=0 // loop_header_branch
    %17 = sbr.rel (%p15) target = $region8
  $region5: #{_allspark_forward_full.4} parent=0 // loop_body
    %s19 = ssub.s32 %s14, 1
    %s20 = ssub.s32 %s14, 2
    %s21 = sadd.s32 %s14, 1
    %s22 = ssub.s32 %s14, %s21
    %p23 = scmp.eq.s32.totalorder %s22, 0
    %s25 = sadd.s32 %s24, 1
    %s26 = scalar_select %p23, %s24, %s25
    %p29 = pneg %p23
    %p30 = scmp.eq.s32.totalorder %s14, 1
    %p31 = por %p29, %p30
    %p32 = scmp.ne.s32.totalorder %s24, %s27
    %p33 = scmp.eq.s32.totalorder %s14, 0
    %p34 = por %p32, %p33
    %p35 = scmp.ne.s32.totalorder %s24, %s27
    %p36 = scmp.eq.s32.totalorder %s19, 1
    %p37 = por %p35, %p36
    %p38 = scmp.ne.s32.totalorder %s27, %s28
    %p39 = scmp.eq.s32.totalorder %s19, 0
    %p40 = por %p38, %p39
    %p41 = scmp.ne.s32.totalorder %s27, %s28
    %p42 = scmp.eq.s32.totalorder %s20, 1
    %p43 = por %p41, %p42
    %p45 = scmp.ne.s32.totalorder %s28, %s44
    %p46 = scmp.eq.s32.totalorder %s20, 0
    %p47 = por %p45, %p46
    %s48 = ssub.s32 %s14, %s21
    %p49 = scmp.eq.s32.totalorder %s48, 0
    %s51 = sadd.s32 %s50, 1
    %s52 = scalar_select %p49, %s50, %s51
    %p55 = pneg %p49
    %p56 = scmp.eq.s32.totalorder %s14, 1
    %p57 = por %p55, %p56
    %p58 = scmp.ne.s32.totalorder %s50, %s53
    %p59 = scmp.eq.s32.totalorder %s14, 0
    %p60 = por %p58, %p59
    %p61 = scmp.ne.s32.totalorder %s50, %s53
    %p62 = scmp.eq.s32.totalorder %s19, 1
    %p63 = por %p61, %p62
    %p64 = scmp.ne.s32.totalorder %s53, %s54
    %p65 = scmp.eq.s32.totalorder %s19, 0
    %p66 = por %p64, %p65
    %p67 = scmp.ne.s32.totalorder %s53, %s54
    %p68 = scmp.eq.s32.totalorder %s20, 1
    %p69 = por %p67, %p68
    %p71 = scmp.ne.s32.totalorder %s54, %s70
    %p72 = scmp.eq.s32.totalorder %s20, 0
    %p73 = por %p71, %p72
    %s75 = sadd.s32 %s74, 1
    %p78 = scmp.eq.s32.totalorder %s14, 1
    %p79 = scmp.ne.s32.totalorder %s74, %s76
    %p80 = scmp.eq.s32.totalorder %s14, 0
    %p81 = por %p79, %p80
    %p82 = scmp.ne.s32.totalorder %s74, %s76
    %p83 = scmp.eq.s32.totalorder %s19, 1
    %p84 = por %p82, %p83
    %p85 = scmp.ne.s32.totalorder %s76, %s77
    %p86 = scmp.eq.s32.totalorder %s19, 0
    %p87 = por %p85, %p86
    %p88 = scmp.ne.s32.totalorder %s76, %s77
    %p89 = scmp.eq.s32.totalorder %s20, 1
    %p90 = por %p88, %p89
    %p92 = scmp.ne.s32.totalorder %s77, %s91
    %p93 = scmp.eq.s32.totalorder %s20, 0
    %p94 = por %p92, %p93
    %s96 = sadd.s32 %s95, 1
    %p99 = scmp.eq.s32.totalorder %s14, 1
    %p100 = scmp.ne.s32.totalorder %s95, %s97
    %p101 = scmp.eq.s32.totalorder %s14, 0
    %p102 = por %p100, %p101
    %p103 = scmp.ne.s32.totalorder %s95, %s97
    %p104 = scmp.eq.s32.totalorder %s19, 1
    %p105 = por %p103, %p104
    %p106 = scmp.ne.s32.totalorder %s97, %s98
    %p107 = scmp.eq.s32.totalorder %s19, 0
    %p108 = por %p106, %p107
    %p109 = scmp.ne.s32.totalorder %s97, %s98
    %p110 = scmp.eq.s32.totalorder %s20, 1
    %p111 = por %p109, %p110
    %p113 = scmp.ne.s32.totalorder %s98, %s112
    %p114 = scmp.eq.s32.totalorder %s20, 0
    %p115 = por %p113, %p114
    %s117 = sadd.s32 %s116, 1
    %p120 = scmp.eq.s32.totalorder %s14, 1
    %p121 = scmp.ne.s32.totalorder %s116, %s118
    %p122 = scmp.eq.s32.totalorder %s14, 0
    %p123 = por %p121, %p122
    %p124 = scmp.ne.s32.totalorder %s116, %s118
    %p125 = scmp.eq.s32.totalorder %s19, 1
    %p126 = por %p124, %p125
    %p127 = scmp.ne.s32.totalorder %s118, %s119
    %p128 = scmp.eq.s32.totalorder %s19, 0
    %p129 = por %p127, %p128
    %p130 = scmp.ne.s32.totalorder %s118, %s119
    %p131 = scmp.eq.s32.totalorder %s20, 1
    %p132 = por %p130, %p131
    %p134 = scmp.ne.s32.totalorder %s119, %s133
    %p135 = scmp.eq.s32.totalorder %s20, 0
    %p136 = por %p134, %p135
    %s138 = sadd.s32 %s137, 1
    %p141 = scmp.eq.s32.totalorder %s14, 1
    %p142 = scmp.ne.s32.totalorder %s137, %s139
    %p143 = scmp.eq.s32.totalorder %s14, 0
    %p144 = por %p142, %p143
    %p145 = scmp.ne.s32.totalorder %s137, %s139
    %p146 = scmp.eq.s32.totalorder %s19, 1
    %p147 = por %p145, %p146
    %p148 = scmp.ne.s32.totalorder %s139, %s140
    %p149 = scmp.eq.s32.totalorder %s19, 0
    %p150 = por %p148, %p149
    %p151 = scmp.ne.s32.totalorder %s139, %s140
    %p152 = scmp.eq.s32.totalorder %s20, 1
    %p153 = por %p151, %p152
    %p155 = scmp.ne.s32.totalorder %s140, %s154
    %p156 = scmp.eq.s32.totalorder %s20, 0
    %p157 = por %p155, %p156
    %s159 = sadd.s32 %s158, 1
    %p162 = scmp.eq.s32.totalorder %s14, 1
    %p163 = scmp.ne.s32.totalorder %s158, %s160
    %p164 = scmp.eq.s32.totalorder %s14, 0
    %p165 = por %p163, %p164
    %p166 = scmp.ne.s32.totalorder %s158, %s160
    %p167 = scmp.eq.s32.totalorder %s19, 1
    %p168 = por %p166, %p167
    %p169 = scmp.ne.s32.totalorder %s160, %s161
    %p170 = scmp.eq.s32.totalorder %s19, 0
    %p171 = por %p169, %p170
    %p172 = scmp.ne.s32.totalorder %s160, %s161
    %p173 = scmp.eq.s32.totalorder %s20, 1
    %p174 = por %p172, %p173
    %p176 = scmp.ne.s32.totalorder %s161, %s175
    %p177 = scmp.eq.s32.totalorder %s20, 0
    %p178 = por %p176, %p177
    %s180 = sadd.s32 %s179, 1
    %p183 = scmp.eq.s32.totalorder %s14, 1
    %p184 = scmp.ne.s32.totalorder %s179, %s181
    %p185 = scmp.eq.s32.totalorder %s14, 0
    %p186 = por %p184, %p185
    %p187 = scmp.ne.s32.totalorder %s179, %s181
    %p188 = scmp.eq.s32.totalorder %s19, 1
    %p189 = por %p187, %p188
    %p190 = scmp.ne.s32.totalorder %s181, %s182
    %p191 = scmp.eq.s32.totalorder %s19, 0
    %p192 = por %p190, %p191
    %p193 = scmp.ne.s32.totalorder %s181, %s182
    %p194 = scmp.eq.s32.totalorder %s20, 1
    %p195 = por %p193, %p194
    %p197 = scmp.ne.s32.totalorder %s182, %s196
    %p198 = scmp.eq.s32.totalorder %s20, 0
    %p199 = por %p197, %p198
    %s200 = ssub.s32 %s14, %s21
    %p201 = scmp.eq.s32.totalorder %s200, 0
    %s203 = sadd.s32 %s202, 1
    %s204 = scalar_select %p201, %s202, %s203
    %p207 = pneg %p201
    %p208 = scmp.eq.s32.totalorder %s14, 1
    %p209 = por %p207, %p208
    %p210 = scmp.ne.s32.totalorder %s202, %s205
    %p211 = scmp.eq.s32.totalorder %s14, 0
    %p212 = por %p210, %p211
    %p213 = scmp.ne.s32.totalorder %s202, %s205
    %p214 = scmp.eq.s32.totalorder %s19, 1
    %p215 = por %p213, %p214
    %p216 = scmp.ne.s32.totalorder %s205, %s206
    %p217 = scmp.eq.s32.totalorder %s19, 0
    %p218 = por %p216, %p217
    %p219 = scmp.ne.s32.totalorder %s205, %s206
    %p220 = scmp.eq.s32.totalorder %s20, 1
    %p221 = por %p219, %p220
    %p223 = scmp.ne.s32.totalorder %s206, %s222
    %p224 = scmp.eq.s32.totalorder %s20, 0
    %p225 = por %p223, %p224
    %p226 = scmp.le.s32.totalorder 1, %s14
    %p227 = scmp.lt.s32.totalorder %s14, 3
    %p228 = pnand %p226, %p227
    %p229 = pneg %p228
    // Predicated region
    $region9: #{_allspark_forward_full.4} parent=5 // pred_check
      _
    $region10: #{_allspark_forward_full.4} parent=5 // pred_check_branch
      %231 = sbr.rel (%p228) target = $region12
    $region11: #{_allspark_forward_full.4} parent=5 // pred_region
      %s232 = ssub.s32 %s14, 1
      // Predicated region
      $region13: #{_allspark_forward_full.4} parent=11 // pred_check
        %p233 = pneg %p87
      $region14: #{_allspark_forward_full.4} parent=11 // pred_check_branch
        %235 = sbr.rel (%p233) target = $region16
      $region15: #{_allspark_forward_full.4} parent=11 // pred_region
        _
      $region16: #{_allspark_forward_full.4} parent=11 // pred_fallthru
        _
      // Predicated region
      $region17: #{_allspark_forward_full.4} parent=11 // pred_check
        %p236 = pneg %p108
      $region18: #{_allspark_forward_full.4} parent=11 // pred_check_branch
        %238 = sbr.rel (%p236) target = $region20
      $region19: #{_allspark_forward_full.4} parent=11 // pred_region
        _
      $region20: #{_allspark_forward_full.4} parent=11 // pred_fallthru
        _
      // Predicated region
      $region21: #{_allspark_forward_full.4} parent=11 // pred_check
        %p239 = pneg %p129
      $region22: #{_allspark_forward_full.4} parent=11 // pred_check_branch
        %241 = sbr.rel (%p239) target = $region24
      $region23: #{_allspark_forward_full.4} parent=11 // pred_region
        _
      $region24: #{_allspark_forward_full.4} parent=11 // pred_fallthru
        _
      // Predicated region
      $region25: #{_allspark_forward_full.4} parent=11 // pred_check
        %p242 = pneg %p150
      $region26: #{_allspark_forward_full.4} parent=11 // pred_check_branch
        %244 = sbr.rel (%p242) target = $region28
      $region27: #{_allspark_forward_full.4} parent=11 // pred_region
        _
      $region28: #{_allspark_forward_full.4} parent=11 // pred_fallthru
        _
      // Predicated region
      $region29: #{_allspark_forward_full.4} parent=11 // pred_check
        %p245 = pneg %p171
      $region30: #{_allspark_forward_full.4} parent=11 // pred_check_branch
        %247 = sbr.rel (%p245) target = $region32
      $region31: #{_allspark_forward_full.4} parent=11 // pred_region
        _
      $region32: #{_allspark_forward_full.4} parent=11 // pred_fallthru
        _
      // Predicated region
      $region33: #{_allspark_forward_full.4} parent=11 // pred_check
        %p248 = pneg %p192
      $region34: #{_allspark_forward_full.4} parent=11 // pred_check_branch
        %250 = sbr.rel (%p248) target = $region36
      $region35: #{_allspark_forward_full.4} parent=11 // pred_region
        _
      $region36: #{_allspark_forward_full.4} parent=11 // pred_fallthru
        _
    $region12: #{_allspark_forward_full.4} parent=5 // pred_fallthru
      _
    %p251 = scmp.lt.s32.totalorder %s14, 2
    // Predicated region
    $region37: #{_allspark_forward_full.4} parent=5 // pred_check
      %p252 = pneg %p251
    $region38: #{_allspark_forward_full.4} parent=5 // pred_check_branch
      %254 = sbr.rel (%p252) target = $region40
    $region39: #{_allspark_forward_full.4} parent=5 // pred_region
      // Predicated region
      $region41: #{_allspark_forward_full.4} parent=39 // pred_check
        %p255 = pneg %p34
      $region42: #{_allspark_forward_full.4} parent=39 // pred_check_branch
        %257 = sbr.rel (%p255) target = $region44
      $region43: #{_allspark_forward_full.4} parent=39 // pred_region
        %p258 = scmp.lt.s32.totalorder %s14, 1
        %s259 = scalar_select %p258, %s14, 1
        %s260 = smul.addr %s259, 8
        %s261 = smul.addr %s260, 4
        %s262 = scalar_lea.vmem %s0, %s261
      $region44: #{_allspark_forward_full.4} parent=39 // pred_fallthru
        _
      // Predicated region
      $region45: #{_allspark_forward_full.4} parent=39 // pred_check
        %p263 = pneg %p60
      $region46: #{_allspark_forward_full.4} parent=39 // pred_check_branch
        %265 = sbr.rel (%p263) target = $region48
      $region47: #{_allspark_forward_full.4} parent=39 // pred_region
        %p266 = scmp.lt.s32.totalorder %s14, 1
        %s267 = scalar_select %p266, %s14, 1
        %s268 = smul.addr %s267, 8
        %s269 = smul.addr %s268, 4
        %s270 = scalar_lea.vmem %s1, %s269
      $region48: #{_allspark_forward_full.4} parent=39 // pred_fallthru
        _
    $region40: #{_allspark_forward_full.4} parent=5 // pred_fallthru
      _
    %p271 = scmp.le.s32.totalorder 1, %s14
    %p272 = scmp.lt.s32.totalorder %s14, 3
    %p273 = pnand %p271, %p272
    %p274 = pneg %p273
    // Predicated region
    $region49: #{_allspark_forward_full.4} parent=5 // pred_check
      _
    $region50: #{_allspark_forward_full.4} parent=5 // pred_check_branch
      %276 = sbr.rel (%p273) target = $region52
    $region51: #{_allspark_forward_full.4} parent=5 // pred_region
      %s277 = ssub.s32 %s14, 1
      %p278 = scmp.lt.s32.totalorder %s19, 1
      %s279 = scalar_select %p278, %s19, 1
      %s280 = smul.addr %s279, 8
      %s281 = smul.addr %s280, 4
      %s282 = scalar_lea.vmem %s0, %s281
      %p283 = pneg %p40
      %p284 = pneg %p37
      %p285 = scmp.lt.s32.totalorder %s19, 1
      %s286 = scalar_select %p285, %s19, 1
      %s287 = smul.addr %s286, 8
      %s288 = smul.addr %s287, 4
      %s289 = scalar_lea.vmem %s1, %s288
      %p290 = pneg %p66
      %p291 = pneg %p63
      %p292 = pneg %p87
      %p293 = pneg %p84
      %p294 = pneg %p108
      %p295 = pneg %p105
      %p296 = pneg %p129
      %p297 = pneg %p126
      %p298 = pneg %p150
      %p299 = pneg %p147
      %p300 = pneg %p171
      %p301 = pneg %p168
      %p302 = pneg %p192
      %p303 = pneg %p189
      %p304 = pneg %p218
      %p305 = pneg %p215
      %p306 = scmp.lt.s32.totalorder %s19, 1
      %s307 = scalar_select %p306, %s19, 1
      %s308 = smul.addr %s307, 2
      %s309 = smul.addr %s308, 4
      %s310 = scalar_lea.vmem %s8, %s309
      %p311 = scmp.lt.s32.totalorder %s19, 1
      %s312 = scalar_select %p311, %s19, 1
      %s313 = smul.addr %s312, 8
      %s314 = smul.addr %s313, 4
      %s315 = scalar_lea.vmem %s0, %s314
      %p316 = scmp.lt.s32.totalorder %s19, 1
      %s317 = scalar_select %p316, %s19, 1
      %s318 = smul.addr %s317, 8
      %s319 = smul.addr %s318, 4
      %s320 = scalar_lea.vmem %s1, %s319
      %p321 = scmp.lt.s32.totalorder %s19, 1
      %s322 = scalar_select %p321, %s19, 1
      %s323 = smul.addr %s322, 2
      %s324 = smul.addr %s323, 4
      %s325 = scalar_lea.vmem %s8, %s324
      %v327 = vld [vmem:[%s315] sm:$0xff]
      %v328 = vld [vmem:[%s315 + $0x8] sm:$0xff]
      %v329 = vld [vmem:[%s315 + $0x10] sm:$0xff]
      %v330 = vld [vmem:[%s315 + $0x18] sm:$0xff]
      %v331 = vld [vmem:[%s2] sm:$0xf]
      %v332 = vld [vmem:[%s2 + $0x4] sm:$0xf]
      %v333 = vld [vmem:[%s2 + $0x8] sm:$0xf]
      %v334 = vld [vmem:[%s2 + $0xc] sm:$0xf]
      %v335 = vld [vmem:[%s2 + $0x10] sm:$0xf]
      %v336 = vld [vmem:[%s2 + $0x14] sm:$0xf]
      %v337 = vld [vmem:[%s2 + $0x18] sm:$0xf]
      %v338 = vld [vmem:[%s2 + $0x1c] sm:$0xf]
      %v339 = vld [vmem:[%s2 + $0x20] sm:$0xf]
      %v340 = vld [vmem:[%s2 + $0x24] sm:$0xf]
      %v341 = vld [vmem:[%s2 + $0x28] sm:$0xf]
      %v342 = vld [vmem:[%s2 + $0x2c] sm:$0xf]
      %v343 = vld [vmem:[%s2 + $0x30] sm:$0xf]
      %v344 = vld [vmem:[%s2 + $0x34] sm:$0xf]
      %v345 = vld [vmem:[%s2 + $0x38] sm:$0xf]
      %v346 = vld [vmem:[%s2 + $0x3c] sm:$0xf]
      %v347 = vld [vmem:[%s2 + $0x40] sm:$0xf]
      %v348 = vld [vmem:[%s2 + $0x44] sm:$0xf]
      %v349 = vld [vmem:[%s2 + $0x48] sm:$0xf]
      %v350 = vld [vmem:[%s2 + $0x4c] sm:$0xf]
      %v351 = vld [vmem:[%s2 + $0x50] sm:$0xf]
      %v352 = vld [vmem:[%s2 + $0x54] sm:$0xf]
      %v353 = vld [vmem:[%s2 + $0x58] sm:$0xf]
      %v354 = vld [vmem:[%s2 + $0x5c] sm:$0xf]
      %v379 = vunpack.c.l.b16 %v331
      %v380 = vunpack.c.l.b16 %v332
      %v381 = vunpack.c.l.b16 %v333
      %v382 = vunpack.c.l.b16 %v334
      %v383 = vunpack.c.l.b16 %v335
      %v384 = vunpack.c.l.b16 %v336
      %v385 = vunpack.c.l.b16 %v337
      %v386 = vunpack.c.l.b16 %v338
      %v387 = vunpack.c.l.b16 %v339
      %v388 = vunpack.c.l.b16 %v340
      %v389 = vunpack.c.l.b16 %v341
      %v390 = vunpack.c.l.b16 %v342
      %v391 = vunpack.c.l.b16 %v343
      %v392 = vunpack.c.l.b16 %v344
      %v393 = vunpack.c.l.b16 %v345
      %v394 = vunpack.c.l.b16 %v346
      %v395 = vunpack.c.l.b16 %v347
      %v396 = vunpack.c.l.b16 %v348
      %v397 = vunpack.c.l.b16 %v349
      %v398 = vunpack.c.l.b16 %v350
      %v399 = vunpack.c.l.b16 %v351
      %v400 = vunpack.c.l.b16 %v352
      %v401 = vunpack.c.l.b16 %v353
      %v402 = vunpack.c.l.b16 %v354
      %v403 = vpack.c.b16 %v380, %v379
      %v404 = vpack.c.b16 %v382, %v381
      %v405 = vpack.c.b16 %v384, %v383
      %v406 = vpack.c.b16 %v386, %v385
      %v407 = vpack.c.b16 %v388, %v387
      %v408 = vpack.c.b16 %v390, %v389
      %v409 = vpack.c.b16 %v392, %v391
      %v410 = vpack.c.b16 %v394, %v393
      %v411 = vpack.c.b16 %v396, %v395
      %v412 = vpack.c.b16 %v398, %v397
      %v413 = vpack.c.b16 %v400, %v399
      %v414 = vpack.c.b16 %v402, %v401
      %v419 = vunpack.c.l.b16 %v327
      %v420 = vunpack.c.h.b16 %v327
      %v421 = vunpack.c.l.b16 %v328
      %v422 = vunpack.c.h.b16 %v328
      %v423 = vunpack.c.l.b16 %v329
      %v424 = vunpack.c.h.b16 %v329
      %v425 = vunpack.c.l.b16 %v330
      %v426 = vunpack.c.h.b16 %v330
      %v427 = vpack.c.b16 %v421, %v419
      %v428 = vpack.c.b16 %v422, %v420
      %v429 = vpack.c.b16 %v425, %v423
      %v430 = vpack.c.b16 %v426, %v424
      %vm435 = vcmask 261120
      %v437 = vsel %vm435, %v403, 0
      %v440 = vsel %vm435, %v404, 0
      %v443 = vsel %vm435, %v405, 0
      %v446 = vsel %vm435, %v406, 0
      %v449 = vsel %vm435, %v407, 0
      %v452 = vsel %vm435, %v408, 0
      %v455 = vsel %vm435, %v409, 0
      %v458 = vsel %vm435, %v410, 0
      %v461 = vsel %vm435, %v411, 0
      %v464 = vsel %vm435, %v412, 0
      %v467 = vsel %vm435, %v413, 0
      %v470 = vsel %vm435, %v414, 0
      %472 = vmatprep.subr.bf16.mxu0 %v428
      %473 = vmatpush1.bf16.msra.mxu0 %v427
      %474 = vmatprep.subr.bf16.mxu0 %v430
      %475 = vmatpush1.bf16.msra.mxu0 %v429
      %476 = vmatprep.subr.bf16.mxu0 0
      %477 = vmatpush1.bf16.msra.mxu0 0
      %478 = vmatprep.subr.bf16.mxu0 0
      %479 = vmatpush1.bf16.msra.mxu0 0
      %480 = vmatprep.subr.bf16.mxu0 0
      %481 = vmatpush1.bf16.msra.mxu0 0
      %482 = vmatprep.subr.bf16.mxu0 0
      %483 = vmatpush1.bf16.msra.mxu0 0
      %484 = vmatprep.subr.bf16.mxu0 0
      %485 = vmatpush1.bf16.msra.mxu0 0
      %486 = vmatprep.subr.bf16.mxu0 0
      %487 = vmatpush1.bf16.msra.mxu0 0
      %488 = vmatprep.subr.bf16.mxu0 0
      %489 = vmatpush1.bf16.msra.mxu0 0
      %490 = vmatprep.subr.bf16.mxu0 0
      %491 = vmatpush1.bf16.msra.mxu0 0
      %492 = vmatprep.subr.bf16.mxu0 0
      %493 = vmatpush1.bf16.msra.mxu0 0
      %494 = vmatprep.subr.bf16.mxu0 0
      %495 = vmatpush1.bf16.msra.mxu0 0
      %496 = vmatprep.subr.bf16.mxu0 0
      %497 = vmatpush1.bf16.msra.mxu0 0
      %498 = vmatprep.subr.bf16.mxu0 0
      %499 = vmatpush1.bf16.msra.mxu0 0
      %500 = vmatprep.subr.bf16.mxu0 0
      %501 = vmatpush1.bf16.msra.mxu0 0
      %502 = vmatprep.subr.bf16.mxu0 0
      %503 = vmatpush1.bf16.msra.mxu0 0
      %504 = vmatprep.mubr.bf16.mxu0 0
      %505 = vmatmul.mubr.bf16.gmra.mrb[0].mxu0 %v437
      %v506 = vpop.f32.mrb[0].mxu0
      %v507 = vadd.f32 0.0, %v506
      %v508 = vpop.f32.mrb[0].mxu0
      %v509 = vadd.f32 0.0, %v508
      %v510 = vpop.f32.mrb[0].mxu0
      %v511 = vadd.f32 0.0, %v510
      %v512 = vpop.f32.mrb[0].mxu0
      %v513 = vadd.f32 0.0, %v512
      %514 = vmatprep.mubr.bf16.mxu0 0
      %515 = vmatmul.mubr.bf16.gmra.mrb[0].mxu0 %v440
      %v516 = vpop.f32.mrb[0].mxu0
      %v517 = vadd.f32 0.0, %v516
      %v518 = vpop.f32.mrb[0].mxu0
      %v519 = vadd.f32 0.0, %v518
      %v520 = vpop.f32.mrb[0].mxu0
      %v521 = vadd.f32 0.0, %v520
      %v522 = vpop.f32.mrb[0].mxu0
      %v523 = vadd.f32 0.0, %v522
      %524 = vmatprep.mubr.bf16.mxu0 0
      %525 = vmatmul.mubr.bf16.gmra.mrb[0].mxu0 %v443
      %v526 = vpop.f32.mrb[0].mxu0
      %v527 = vadd.f32 0.0, %v526
      %v528 = vpop.f32.mrb[0].mxu0
      %v529 = vadd.f32 0.0, %v528
      %v530 = vpop.f32.mrb[0].mxu0
      %v531 = vadd.f32 0.0, %v530
      %v532 = vpop.f32.mrb[0].mxu0
      %v533 = vadd.f32 0.0, %v532
      %534 = vmatprep.mubr.bf16.mxu0 0
      %535 = vmatmul.mubr.bf16.gmra.mrb[0].mxu0 %v446
      %v536 = vpop.f32.mrb[0].mxu0
      %v537 = vadd.f32 0.0, %v536
      %v538 = vpop.f32.mrb[0].mxu0
      %v539 = vadd.f32 0.0, %v538
      %v540 = vpop.f32.mrb[0].mxu0
      %v541 = vadd.f32 0.0, %v540
      %v542 = vpop.f32.mrb[0].mxu0
      %v543 = vadd.f32 0.0, %v542
      %544 = vmatprep.mubr.bf16.mxu0 0
      %545 = vmatmul.mubr.bf16.gmra.mrb[0].mxu0 %v449
      %v546 = vpop.f32.mrb[0].mxu0
      %v547 = vadd.f32 0.0, %v546
      %v548 = vpop.f32.mrb[0].mxu0
      %v549 = vadd.f32 0.0, %v548
      %v550 = vpop.f32.mrb[0].mxu0
      %v551 = vadd.f32 0.0, %v550
      %v552 = vpop.f32.mrb[0].mxu0
      %v553 = vadd.f32 0.0, %v552
      %554 = vmatprep.mubr.bf16.mxu0 0
      %555 = vmatmul.mubr.bf16.gmra.mrb[0].mxu0 %v452
      %v556 = vpop.f32.mrb[0].mxu0
      %v557 = vadd.f32 0.0, %v556
      %v558 = vpop.f32.mrb[0].mxu0
      %v559 = vadd.f32 0.0, %v558
      %v560 = vpop.f32.mrb[0].mxu0
      %v561 = vadd.f32 0.0, %v560
      %v562 = vpop.f32.mrb[0].mxu0
      %v563 = vadd.f32 0.0, %v562
      %564 = vmatprep.mubr.bf16.mxu0 0
      %565 = vmatmul.mubr.bf16.gmra.mrb[0].mxu0 %v455
      %v566 = vpop.f32.mrb[0].mxu0
      %v567 = vadd.f32 0.0, %v566
      %v568 = vpop.f32.mrb[0].mxu0
      %v569 = vadd.f32 0.0, %v568
      %v570 = vpop.f32.mrb[0].mxu0
      %v571 = vadd.f32 0.0, %v570
      %v572 = vpop.f32.mrb[0].mxu0
      %v573 = vadd.f32 0.0, %v572
      %574 = vmatprep.mubr.bf16.mxu0 0
      %575 = vmatmul.mubr.bf16.gmra.mrb[0].mxu0 %v458
      %v576 = vpop.f32.mrb[0].mxu0
      %v577 = vadd.f32 0.0, %v576
      %v578 = vpop.f32.mrb[0].mxu0
      %v579 = vadd.f32 0.0, %v578
      %v580 = vpop.f32.mrb[0].mxu0
      %v581 = vadd.f32 0.0, %v580
      %v582 = vpop.f32.mrb[0].mxu0
      %v583 = vadd.f32 0.0, %v582
      %584 = vmatprep.mubr.bf16.mxu0 0
      %585 = vmatmul.mubr.bf16.gmra.mrb[0].mxu0 %v461
      %v586 = vpop.f32.mrb[0].mxu0
      %v587 = vadd.f32 0.0, %v586
      %v588 = vpop.f32.mrb[0].mxu0
      %v589 = vadd.f32 0.0, %v588
      %v590 = vpop.f32.mrb[0].mxu0
      %v591 = vadd.f32 0.0, %v590
      %v592 = vpop.f32.mrb[0].mxu0
      %v593 = vadd.f32 0.0, %v592
      %594 = vmatprep.mubr.bf16.mxu0 0
      %595 = vmatmul.mubr.bf16.gmra.mrb[0].mxu0 %v464
      %v596 = vpop.f32.mrb[0].mxu0
      %v597 = vadd.f32 0.0, %v596
      %v598 = vpop.f32.mrb[0].mxu0
      %v599 = vadd.f32 0.0, %v598
      %v600 = vpop.f32.mrb[0].mxu0
      %v601 = vadd.f32 0.0, %v600
      %v602 = vpop.f32.mrb[0].mxu0
      %v603 = vadd.f32 0.0, %v602
      %604 = vmatprep.mubr.bf16.mxu0 0
      %605 = vmatmul.mubr.bf16.gmra.mrb[0].mxu0 %v467
      %v606 = vpop.f32.mrb[0].mxu0
      %v607 = vadd.f32 0.0, %v606
      %v608 = vpop.f32.mrb[0].mxu0
      %v609 = vadd.f32 0.0, %v608
      %v610 = vpop.f32.mrb[0].mxu0
      %v611 = vadd.f32 0.0, %v610
      %v612 = vpop.f32.mrb[0].mxu0
      %v613 = vadd.f32 0.0, %v612
      %614 = vmatprep.mubr.bf16.mxu0 0
      %615 = vmatmul.mubr.bf16.gmra.mrb[0].mxu0 %v470
      %v616 = vpop.f32.mrb[0].mxu0
      %v617 = vadd.f32 0.0, %v616
      %v618 = vpop.f32.mrb[0].mxu0
      %v619 = vadd.f32 0.0, %v618
      %v620 = vpop.f32.mrb[0].mxu0
      %v621 = vadd.f32 0.0, %v620
      %v622 = vpop.f32.mrb[0].mxu0
      %v623 = vadd.f32 0.0, %v622
      %624 = vdwg.mxu0
      %v625 = vpack.c.bf16 %v511, %v507
      %v626 = vpack.c.bf16 %v513, %v509
      %v627 = vpack.c.bf16 %v521, %v517
      %v628 = vpack.c.bf16 %v523, %v519
      %v629 = vpack.c.bf16 %v551, %v547
      %v630 = vpack.c.bf16 %v553, %v549
      %v631 = vpack.c.bf16 %v561, %v557
      %v632 = vpack.c.bf16 %v563, %v559
      %v633 = vpack.c.bf16 %v591, %v587
      %v634 = vpack.c.bf16 %v593, %v589
      %v635 = vpack.c.bf16 %v601, %v597
      %v636 = vpack.c.bf16 %v603, %v599
      %637 = vmatprep.subr.bf16.mxu0 %v630
      %638 = vmatpush1.bf16.xpose.msra.mxu0 %v629
      %639 = vmatprep.subr.bf16.mxu0 %v632
      %640 = vmatpush1.bf16.xpose.msra.mxu0 %v631
      %641 = vmatprep.subr.bf16.mxu0 0
      %642 = vmatpush1.bf16.xpose.msra.mxu0 0
      %643 = vmatprep.subr.bf16.mxu0 0
      %644 = vmatpush1.bf16.xpose.msra.mxu0 0
      %645 = vmatprep.subr.bf16.mxu0 0
      %646 = vmatpush1.bf16.xpose.msra.mxu0 0
      %647 = vmatprep.subr.bf16.mxu0 0
      %648 = vmatpush1.bf16.xpose.msra.mxu0 0
      %649 = vmatprep.subr.bf16.mxu0 0
      %650 = vmatpush1.bf16.xpose.msra.mxu0 0
      %651 = vmatprep.subr.bf16.mxu0 0
      %652 = vmatpush1.bf16.xpose.msra.mxu0 0
      %653 = vmatprep.subr.bf16.mxu0 0
      %654 = vmatpush1.bf16.xpose.msra.mxu0 0
      %655 = vmatprep.subr.bf16.mxu0 0
      %656 = vmatpush1.bf16.xpose.msra.mxu0 0
      %657 = vmatprep.subr.bf16.mxu0 0
      %658 = vmatpush1.bf16.xpose.msra.mxu0 0
      %659 = vmatprep.subr.bf16.mxu0 0
      %660 = vmatpush1.bf16.xpose.msra.mxu0 0
      %661 = vmatprep.subr.bf16.mxu0 0
      %662 = vmatpush1.bf16.xpose.msra.mxu0 0
      %663 = vmatprep.subr.bf16.mxu0 0
      %664 = vmatpush1.bf16.xpose.msra.mxu0 0
      %665 = vmatprep.subr.bf16.mxu0 0
      %666 = vmatpush1.bf16.xpose.msra.mxu0 0
      %667 = vmatprep.subr.bf16.mxu0 0
      %668 = vmatpush1.bf16.xpose.msra.mxu0 0
      %669 = vmatprep.mubr.bf16.mxu0 %v626
      %670 = vmatmul.mubr.bf16.gmra.mrb[0].mxu0 %v625
      %v671 = vpop.f32.mrb[0].mxu0
      %v672 = vadd.f32 0.0, %v671
      %v673 = vpop.f32.mrb[0].mxu0
      %v674 = vpop.f32.mrb[0].mxu0
      %v675 = vadd.f32 0.0, %v674
      %v676 = vpop.f32.mrb[0].mxu0
      %677 = vmatprep.mubr.bf16.mxu0 %v628
      %678 = vmatmul.mubr.bf16.gmra.mrb[0].mxu0 %v627
      %v679 = vpop.f32.mrb[0].mxu0
      %v680 = vadd.f32 0.0, %v679
      %v681 = vpop.f32.mrb[0].mxu0
      %v682 = vpop.f32.mrb[0].mxu0
      %v683 = vadd.f32 0.0, %v682
      %v684 = vpop.f32.mrb[0].mxu0
      %685 = vdwg.mxu0
      %v686 = vsel %vm435, %v672, 0.0
      %687 = vadd.xlane.f32.xlu0 %v686
      %v688 = vpop.xlane.xlu0 %687
      %v689 = vsel %vm435, %v675, 0.0
      %690 = vadd.xlane.f32.xlu0 %v689
      %v691 = vpop.xlane.xlu0 %690
      %v692 = vsel %vm435, %v680, 0.0
      %693 = vadd.xlane.f32.xlu0 %v692
      %v694 = vpop.xlane.xlu0 %693
      %v695 = vsel %vm435, %v683, 0.0
      %696 = vadd.xlane.f32.xlu0 %v695
      %v697 = vpop.xlane.xlu0 %696
      %v698 = vrcp.pop 32.0
      %v699 = vmul.f32 %v688, %v698
      %v700 = vmul.f32 %v691, %v698
      %v701 = vmul.f32 %v694, %v698
      %v702 = vmul.f32 %v697, %v698
      %v703 = vadd.f32 %v699, %v700
      %v704 = vadd.f32 %v703, %v701
      %v705 = vadd.f32 %v704, %v702
      %v706 = vrot.slane %v705, 4
      %v707 = vadd.f32 %v705, %v706
      %v708 = vrot.slane %v707, 2
      %v709 = vadd.f32 %v707, %v708
      %v710 = vrot.slane %v709, 1
      %v711 = vadd.f32 %v709, %v710
      %v712 = vmul.f32 %v711, %v698
      %v713 = vsub.f32 %v672, %v712
      %v714 = vsub.f32 %v675, %v712
      %v715 = vsub.f32 %v680, %v712
      %v716 = vsub.f32 %v683, %v712
      %v717 = vmul.f32 %v713, %v713
      %v718 = vmul.f32 %v714, %v714
      %v719 = vmul.f32 %v715, %v715
      %v720 = vmul.f32 %v716, %v716
      %v721 = vsel %vm435, %v717, 0.0
      %722 = vadd.xlane.f32.xlu0 %v721
      %v723 = vpop.xlane.xlu0 %722
      %v724 = vsel %vm435, %v718, 0.0
      %725 = vadd.xlane.f32.xlu0 %v724
      %v726 = vpop.xlane.xlu0 %725
      %v727 = vsel %vm435, %v719, 0.0
      %728 = vadd.xlane.f32.xlu0 %v727
      %v729 = vpop.xlane.xlu0 %728
      %v730 = vsel %vm435, %v720, 0.0
      %731 = vadd.xlane.f32.xlu0 %v730
      %v732 = vpop.xlane.xlu0 %731
      %v733 = vmul.f32 %v723, %v698
      %v734 = vmul.f32 %v726, %v698
      %v735 = vmul.f32 %v729, %v698
      %v736 = vmul.f32 %v732, %v698
      %v737 = vadd.f32 %v733, %v734
      %v738 = vadd.f32 %v737, %v735
      %v739 = vadd.f32 %v738, %v736
      %v740 = vrot.slane %v739, 4
      %v741 = vadd.f32 %v739, %v740
      %v742 = vrot.slane %v741, 2
      %v743 = vadd.f32 %v741, %v742
      %v744 = vrot.slane %v743, 1
      %v745 = vadd.f32 %v743, %v744
      %v746 = vmul.f32 %v745, %v698
      %v747 = vadd.f32 %v746, 1e-05
      %v748 = vrsqrt.pop %v747
      %v749 = vmul.f32 %v713, %v748
      %v750 = vmul.f32 %v714, %v748
      %v751 = vmul.f32 %v715, %v748
      %v752 = vmul.f32 %v716, %v748
      %v753 = vsel %vm435, %v749, -inf
      %754 = vmax.xlane.f32.xlu0 %v753
      %v755 = vpop.xlane.xlu0 %754
      %v756 = vsel %vm435, %v750, -inf
      %757 = vmax.xlane.f32.xlu0 %v756
      %v758 = vpop.xlane.xlu0 %757
      %v759 = vsel %vm435, %v751, -inf
      %760 = vmax.xlane.f32.xlu0 %v759
      %v761 = vpop.xlane.xlu0 %760
      %v762 = vsel %vm435, %v752, -inf
      %763 = vmax.xlane.f32.xlu0 %v762
      %v764 = vpop.xlane.xlu0 %763
      %v765 = vsub.f32 %v749, %v755
      %v766 = vsub.f32 %v750, %v758
      %v767 = vsub.f32 %v751, %v761
      %v768 = vsub.f32 %v752, %v764
      %v769 = vmul.f32 %v765, 1.442695
      %v770 = vpow.pop %v769
      %v771 = vmul.f32 %v766, 1.442695
      %v772 = vpow.pop %v771
      %v773 = vmul.f32 %v767, 1.442695
      %v774 = vpow.pop %v773
      %v775 = vmul.f32 %v768, 1.442695
      %v776 = vpow.pop %v775
      %v777 = vsel %vm435, %v770, 0.0
      %778 = vadd.xlane.f32.xlu0 %v777
      %v779 = vpop.xlane.xlu0 %778
      %v780 = vsel %vm435, %v772, 0.0
      %781 = vadd.xlane.f32.xlu0 %v780
      %v782 = vpop.xlane.xlu0 %781
      %v783 = vsel %vm435, %v774, 0.0
      %784 = vadd.xlane.f32.xlu0 %v783
      %v785 = vpop.xlane.xlu0 %784
      %v786 = vsel %vm435, %v776, 0.0
      %787 = vadd.xlane.f32.xlu0 %v786
      %v788 = vpop.xlane.xlu0 %787
      %v789 = vrcp.pop %v779
      %v790 = vrcp.pop %v782
      %v791 = vrcp.pop %v785
      %v792 = vrcp.pop %v788
      %v793 = vmul.f32 %v770, %v789
      %v794 = vmul.f32 %v772, %v790
      %v795 = vmul.f32 %v774, %v791
      %v796 = vmul.f32 %v776, %v792
      %v797 = vpack.c.bf16 %v794, %v793
      %v798 = vpack.c.bf16 %v796, %v795
      %v800 = vsel %vm435, %v797, 0
      %v803 = vsel %vm435, %v798, 0
      %805 = vmatprep.subr.bf16.mxu0 %v634
      %806 = vmatpush1.bf16.msra.mxu0 %v633
      %807 = vmatprep.subr.bf16.mxu0 %v636
      %808 = vmatpush1.bf16.msra.mxu0 %v635
      %809 = vmatprep.subr.bf16.mxu0 0
      %810 = vmatpush1.bf16.msra.mxu0 0
      %811 = vmatprep.subr.bf16.mxu0 0
      %812 = vmatpush1.bf16.msra.mxu0 0
      %813 = vmatprep.subr.bf16.mxu0 0
      %814 = vmatpush1.bf16.msra.mxu0 0
      %815 = vmatprep.subr.bf16.mxu0 0
      %816 = vmatpush1.bf16.msra.mxu0 0
      %817 = vmatprep.subr.bf16.mxu0 0
      %818 = vmatpush1.bf16.msra.mxu0 0
      %819 = vmatprep.subr.bf16.mxu0 0
      %820 = vmatpush1.bf16.msra.mxu0 0
      %821 = vmatprep.subr.bf16.mxu0 0
      %822 = vmatpush1.bf16.msra.mxu0 0
      %823 = vmatprep.subr.bf16.mxu0 0
      %824 = vmatpush1.bf16.msra.mxu0 0
      %825 = vmatprep.subr.bf16.mxu0 0
      %826 = vmatpush1.bf16.msra.mxu0 0
      %827 = vmatprep.subr.bf16.mxu0 0
      %828 = vmatpush1.bf16.msra.mxu0 0
      %829 = vmatprep.subr.bf16.mxu0 0
      %830 = vmatpush1.bf16.msra.mxu0 0
      %831 = vmatprep.subr.bf16.mxu0 0
      %832 = vmatpush1.bf16.msra.mxu0 0
      %833 = vmatprep.subr.bf16.mxu0 0
      %834 = vmatpush1.bf16.msra.mxu0 0
      %835 = vmatprep.subr.bf16.mxu0 0
      %836 = vmatpush1.bf16.msra.mxu0 0
      %837 = vmatprep.mubr.bf16.mxu0 0
      %838 = vmatmul.mubr.bf16.gmra.mrb[0].mxu0 %v800
      %v839 = vpop.f32.mrb[0].mxu0
      %v840 = vadd.f32 0.0, %v839
      %v841 = vpop.f32.mrb[0].mxu0
      %v842 = vadd.f32 0.0, %v841
      %v843 = vpop.f32.mrb[0].mxu0
      %v844 = vadd.f32 0.0, %v843
      %v845 = vpop.f32.mrb[0].mxu0
      %v846 = vadd.f32 0.0, %v845
      %847 = vmatprep.mubr.bf16.mxu0 0
      %848 = vmatmul.mubr.bf16.gmra.mrb[0].mxu0 %v803
      %v849 = vpop.f32.mrb[0].mxu0
      %v850 = vadd.f32 0.0, %v849
      %v851 = vpop.f32.mrb[0].mxu0
      %v852 = vadd.f32 0.0, %v851
      %v853 = vpop.f32.mrb[0].mxu0
      %v854 = vadd.f32 0.0, %v853
      %v855 = vpop.f32.mrb[0].mxu0
      %v856 = vadd.f32 0.0, %v855
      %857 = vdwg.mxu0
      %v858 = vpack.c.bf16 %v531, %v527
      %v859 = vpack.c.bf16 %v533, %v529
      %v860 = vpack.c.bf16 %v541, %v537
      %v861 = vpack.c.bf16 %v543, %v539
      %v862 = vpack.c.bf16 %v571, %v567
      %v863 = vpack.c.bf16 %v573, %v569
      %v864 = vpack.c.bf16 %v581, %v577
      %v865 = vpack.c.bf16 %v583, %v579
      %v866 = vpack.c.bf16 %v611, %v607
      %v867 = vpack.c.bf16 %v613, %v609
      %v868 = vpack.c.bf16 %v621, %v617
      %v869 = vpack.c.bf16 %v623, %v619
      %870 = vmatprep.subr.bf16.mxu0 %v863
      %871 = vmatpush1.bf16.xpose.msra.mxu0 %v862
      %872 = vmatprep.subr.bf16.mxu0 %v865
      %873 = vmatpush1.bf16.xpose.msra.mxu0 %v864
      %874 = vmatprep.subr.bf16.mxu0 0
      %875 = vmatpush1.bf16.xpose.msra.mxu0 0
      %876 = vmatprep.subr.bf16.mxu0 0
      %877 = vmatpush1.bf16.xpose.msra.mxu0 0
      %878 = vmatprep.subr.bf16.mxu0 0
      %879 = vmatpush1.bf16.xpose.msra.mxu0 0
      %880 = vmatprep.subr.bf16.mxu0 0
      %881 = vmatpush1.bf16.xpose.msra.mxu0 0
      %882 = vmatprep.subr.bf16.mxu0 0
      %883 = vmatpush1.bf16.xpose.msra.mxu0 0
      %884 = vmatprep.subr.bf16.mxu0 0
      %885 = vmatpush1.bf16.xpose.msra.mxu0 0
      %886 = vmatprep.subr.bf16.mxu0 0
      %887 = vmatpush1.bf16.xpose.msra.mxu0 0
      %888 = vmatprep.subr.bf16.mxu0 0
      %889 = vmatpush1.bf16.xpose.msra.mxu0 0
      %890 = vmatprep.subr.bf16.mxu0 0
      %891 = vmatpush1.bf16.xpose.msra.mxu0 0
      %892 = vmatprep.subr.bf16.mxu0 0
      %893 = vmatpush1.bf16.xpose.msra.mxu0 0
      %894 = vmatprep.subr.bf16.mxu0 0
      %895 = vmatpush1.bf16.xpose.msra.mxu0 0
      %896 = vmatprep.subr.bf16.mxu0 0
      %897 = vmatpush1.bf16.xpose.msra.mxu0 0
      %898 = vmatprep.subr.bf16.mxu0 0
      %899 = vmatpush1.bf16.xpose.msra.mxu0 0
      %900 = vmatprep.subr.bf16.mxu0 0
      %901 = vmatpush1.bf16.xpose.msra.mxu0 0
      %902 = vmatprep.mubr.bf16.mxu0 %v859
      %903 = vmatmul.mubr.bf16.gmra.mrb[0].mxu0 %v858
      %v904 = vpop.f32.mrb[0].mxu0
      %v905 = vadd.f32 0.0, %v904
      %v906 = vpop.f32.mrb[0].mxu0
      %v907 = vpop.f32.mrb[0].mxu0
      %v908 = vadd.f32 0.0, %v907
      %v909 = vpop.f32.mrb[0].mxu0
      %910 = vmatprep.mubr.bf16.mxu0 %v861
      %911 = vmatmul.mubr.bf16.gmra.mrb[0].mxu0 %v860
      %v912 = vpop.f32.mrb[0].mxu0
      %v913 = vadd.f32 0.0, %v912
      %v914 = vpop.f32.mrb[0].mxu0
      %v915 = vpop.f32.mrb[0].mxu0
      %v916 = vadd.f32 0.0, %v915
      %v917 = vpop.f32.mrb[0].mxu0
      %918 = vdwg.mxu0
      %v919 = vsel %vm435, %v905, 0.0
      %920 = vadd.xlane.f32.xlu0 %v919
      %v921 = vpop.xlane.xlu0 %920
      %v922 = vsel %vm435, %v908, 0.0
      %923 = vadd.xlane.f32.xlu0 %v922
      %v924 = vpop.xlane.xlu0 %923
      %v925 = vsel %vm435, %v913, 0.0
      %926 = vadd.xlane.f32.xlu0 %v925
      %v927 = vpop.xlane.xlu0 %926
      %v928 = vsel %vm435, %v916, 0.0
      %929 = vadd.xlane.f32.xlu0 %v928
      %v930 = vpop.xlane.xlu0 %929
      %v931 = vmul.f32 %v921, %v698
      %v932 = vmul.f32 %v924, %v698
      %v933 = vmul.f32 %v927, %v698
      %v934 = vmul.f32 %v930, %v698
      %v935 = vadd.f32 %v931, %v932
      %v936 = vadd.f32 %v935, %v933
      %v937 = vadd.f32 %v936, %v934
      %v938 = vrot.slane %v937, 4
      %v939 = vadd.f32 %v937, %v938
      %v940 = vrot.slane %v939, 2
      %v941 = vadd.f32 %v939, %v940
      %v942 = vrot.slane %v941, 1
      %v943 = vadd.f32 %v941, %v942
      %v944 = vmul.f32 %v943, %v698
      %v945 = vsub.f32 %v905, %v944
      %v946 = vsub.f32 %v908, %v944
      %v947 = vsub.f32 %v913, %v944
      %v948 = vsub.f32 %v916, %v944
      %v949 = vmul.f32 %v945, %v945
      %v950 = vmul.f32 %v946, %v946
      %v951 = vmul.f32 %v947, %v947
      %v952 = vmul.f32 %v948, %v948
      %v953 = vsel %vm435, %v949, 0.0
      %954 = vadd.xlane.f32.xlu0 %v953
      %v955 = vpop.xlane.xlu0 %954
      %v956 = vsel %vm435, %v950, 0.0
      %957 = vadd.xlane.f32.xlu0 %v956
      %v958 = vpop.xlane.xlu0 %957
      %v959 = vsel %vm435, %v951, 0.0
      %960 = vadd.xlane.f32.xlu0 %v959
      %v961 = vpop.xlane.xlu0 %960
      %v962 = vsel %vm435, %v952, 0.0
      %963 = vadd.xlane.f32.xlu0 %v962
      %v964 = vpop.xlane.xlu0 %963
      %v965 = vmul.f32 %v955, %v698
      %v966 = vmul.f32 %v958, %v698
      %v967 = vmul.f32 %v961, %v698
      %v968 = vmul.f32 %v964, %v698
      %v969 = vadd.f32 %v965, %v966
      %v970 = vadd.f32 %v969, %v967
      %v971 = vadd.f32 %v970, %v968
      %v972 = vrot.slane %v971, 4
      %v973 = vadd.f32 %v971, %v972
      %v974 = vrot.slane %v973, 2
      %v975 = vadd.f32 %v973, %v974
      %v976 = vrot.slane %v975, 1
      %v977 = vadd.f32 %v975, %v976
      %v978 = vmul.f32 %v977, %v698
      %v979 = vadd.f32 %v978, 1e-05
      %v980 = vrsqrt.pop %v979
      %v981 = vmul.f32 %v945, %v980
      %v982 = vmul.f32 %v946, %v980
      %v983 = vmul.f32 %v947, %v980
      %v984 = vmul.f32 %v948, %v980
      %v985 = vsel %vm435, %v981, -inf
      %986 = vmax.xlane.f32.xlu0 %v985
      %v987 = vpop.xlane.xlu0 %986
      %v988 = vsel %vm435, %v982, -inf
      %989 = vmax.xlane.f32.xlu0 %v988
      %v990 = vpop.xlane.xlu0 %989
      %v991 = vsel %vm435, %v983, -inf
      %992 = vmax.xlane.f32.xlu0 %v991
      %v993 = vpop.xlane.xlu0 %992
      %v994 = vsel %vm435, %v984, -inf
      %995 = vmax.xlane.f32.xlu0 %v994
      %v996 = vpop.xlane.xlu0 %995
      %v997 = vsub.f32 %v981, %v987
      %v998 = vsub.f32 %v982, %v990
      %v999 = vsub.f32 %v983, %v993
      %v1000 = vsub.f32 %v984, %v996
      %v1001 = vmul.f32 %v997, 1.442695
      %v1002 = vpow.pop %v1001
      %v1003 = vmul.f32 %v998, 1.442695
      %v1004 = vpow.pop %v1003
      %v1005 = vmul.f32 %v999, 1.442695
      %v1006 = vpow.pop %v1005
      %v1007 = vmul.f32 %v1000, 1.442695
      %v1008 = vpow.pop %v1007
      %v1009 = vsel %vm435, %v1002, 0.0
      %1010 = vadd.xlane.f32.xlu0 %v1009
      %v1011 = vpop.xlane.xlu0 %1010
      %v1012 = vsel %vm435, %v1004, 0.0
      %1013 = vadd.xlane.f32.xlu0 %v1012
      %v1014 = vpop.xlane.xlu0 %1013
      %v1015 = vsel %vm435, %v1006, 0.0
      %1016 = vadd.xlane.f32.xlu0 %v1015
      %v1017 = vpop.xlane.xlu0 %1016
      %v1018 = vsel %vm435, %v1008, 0.0
      %1019 = vadd.xlane.f32.xlu0 %v1018
      %v1020 = vpop.xlane.xlu0 %1019
      %v1021 = vrcp.pop %v1011
      %v1022 = vrcp.pop %v1014
      %v1023 = vrcp.pop %v1017
      %v1024 = vrcp.pop %v1020
      %v1025 = vmul.f32 %v1002, %v1021
      %v1026 = vmul.f32 %v1004, %v1022
      %v1027 = vmul.f32 %v1006, %v1023
      %v1028 = vmul.f32 %v1008, %v1024
      %v1029 = vpack.c.bf16 %v1026, %v1025
      %v1030 = vpack.c.bf16 %v1028, %v1027
      %v1032 = vsel %vm435, %v1029, 0
      %v1035 = vsel %vm435, %v1030, 0
      %1037 = vmatprep.subr.bf16.mxu0 %v867
      %1038 = vmatpush1.bf16.msra.mxu0 %v866
      %1039 = vmatprep.subr.bf16.mxu0 %v869
      %1040 = vmatpush1.bf16.msra.mxu0 %v868
      %1041 = vmatprep.subr.bf16.mxu0 0
      %1042 = vmatpush1.bf16.msra.mxu0 0
      %1043 = vmatprep.subr.bf16.mxu0 0
      %1044 = vmatpush1.bf16.msra.mxu0 0
      %1045 = vmatprep.subr.bf16.mxu0 0
      %1046 = vmatpush1.bf16.msra.mxu0 0
      %1047 = vmatprep.subr.bf16.mxu0 0
      %1048 = vmatpush1.bf16.msra.mxu0 0
      %1049 = vmatprep.subr.bf16.mxu0 0
      %1050 = vmatpush1.bf16.msra.mxu0 0
      %1051 = vmatprep.subr.bf16.mxu0 0
      %1052 = vmatpush1.bf16.msra.mxu0 0
      %1053 = vmatprep.subr.bf16.mxu0 0
      %1054 = vmatpush1.bf16.msra.mxu0 0
      %1055 = vmatprep.subr.bf16.mxu0 0
      %1056 = vmatpush1.bf16.msra.mxu0 0
      %1057 = vmatprep.subr.bf16.mxu0 0
      %1058 = vmatpush1.bf16.msra.mxu0 0
      %1059 = vmatprep.subr.bf16.mxu0 0
      %1060 = vmatpush1.bf16.msra.mxu0 0
      %1061 = vmatprep.subr.bf16.mxu0 0
      %1062 = vmatpush1.bf16.msra.mxu0 0
      %1063 = vmatprep.subr.bf16.mxu0 0
      %1064 = vmatpush1.bf16.msra.mxu0 0
      %1065 = vmatprep.subr.bf16.mxu0 0
      %1066 = vmatpush1.bf16.msra.mxu0 0
      %1067 = vmatprep.subr.bf16.mxu0 0
      %1068 = vmatpush1.bf16.msra.mxu0 0
      %1069 = vmatprep.mubr.bf16.mxu0 0
      %1070 = vmatmul.mubr.bf16.gmra.mrb[0].mxu0 %v1032
      %v1071 = vpop.f32.mrb[0].mxu0
      %v1072 = vadd.f32 0.0, %v1071
      %v1073 = vpop.f32.mrb[0].mxu0
      %v1074 = vadd.f32 0.0, %v1073
      %v1075 = vpop.f32.mrb[0].mxu0
      %v1076 = vadd.f32 0.0, %v1075
      %v1077 = vpop.f32.mrb[0].mxu0
      %v1078 = vadd.f32 0.0, %v1077
      %1079 = vmatprep.mubr.bf16.mxu0 0
      %1080 = vmatmul.mubr.bf16.gmra.mrb[0].mxu0 %v1035
      %v1081 = vpop.f32.mrb[0].mxu0
      %v1082 = vadd.f32 0.0, %v1081
      %v1083 = vpop.f32.mrb[0].mxu0
      %v1084 = vadd.f32 0.0, %v1083
      %v1085 = vpop.f32.mrb[0].mxu0
      %v1086 = vadd.f32 0.0, %v1085
      %v1087 = vpop.f32.mrb[0].mxu0
      %v1088 = vadd.f32 0.0, %v1087
      %1089 = vdwg.mxu0
      %v1090 = vpack.c.bf16 %v844, %v840
      %v1091 = vpack.c.bf16 %v846, %v842
      %v1092 = vpack.c.bf16 %v854, %v850
      %v1093 = vpack.c.bf16 %v856, %v852
      %v1094 = vpack.c.bf16 %v1076, %v1072
      %v1095 = vpack.c.bf16 %v1078, %v1074
      %v1096 = vpack.c.bf16 %v1086, %v1082
      %v1097 = vpack.c.bf16 %v1088, %v1084
      %v1098 = vld [vmem:[%s3] sm:$0xf]
      %v1099 = vld [vmem:[%s3 + $0x4] sm:$0xf]
      %v1100 = vld [vmem:[%s3 + $0x8] sm:$0xf]
      %v1101 = vld [vmem:[%s3 + $0xc] sm:$0xf]
      %v1102 = vld [vmem:[%s320] sm:$0xff]
      %v1103 = vld [vmem:[%s320 + $0x8] sm:$0xff]
      %v1104 = vld [vmem:[%s320 + $0x10] sm:$0xff]
      %v1105 = vld [vmem:[%s320 + $0x18] sm:$0xff]
      %v1106 = vld [vmem:[%s4] sm:$0xff]
      %v1107 = vld [vmem:[%s4 + $0x8] sm:$0xff]
      %v1108 = vld [vmem:[%s4 + $0x10] sm:$0xff]
      %v1109 = vld [vmem:[%s4 + $0x18] sm:$0xff]
      %v1110 = vld [vmem:[%s5] sm:$0xff]
      %v1111 = vld [vmem:[%s5 + $0x8] sm:$0xff]
      %v1112 = vld [vmem:[%s5 + $0x10] sm:$0xff]
      %v1113 = vld [vmem:[%s5 + $0x18] sm:$0xff]
      %v1114 = vld [vmem:[%s6] sm:$0x3]
      %v1115 = vld [vmem:[%s7] sm:$0xf]
      %v1116 = vunpack.c.l.bf16 %v1102
      %v1117 = vunpack.c.h.bf16 %v1102
      %v1118 = vunpack.c.l.bf16 %v1103
      %v1119 = vunpack.c.h.bf16 %v1103
      %v1120 = vunpack.c.l.bf16 %v1104
      %v1121 = vunpack.c.h.bf16 %v1104
      %v1122 = vunpack.c.l.bf16 %v1105
      %v1123 = vunpack.c.h.bf16 %v1105
      %v1128 = vunpack.c.l.b16 %v1098
      %v1129 = vunpack.c.l.b16 %v1099
      %v1130 = vunpack.c.l.b16 %v1100
      %v1131 = vunpack.c.l.b16 %v1101
      %v1132 = vpack.c.b16 %v1129, %v1128
      %v1133 = vpack.c.b16 %v1131, %v1130
      %vm1134 = vcmask 523264
      %v1136 = vsel %vm1134, %v1132, 0
      %v1139 = vsel %vm1134, %v1133, 0
      %1141 = vmatprep.subr.bf16.mxu0 %v1091
      %1142 = vmatpush1.bf16.msra.mxu0 %v1090
      %1143 = vmatprep.subr.bf16.mxu0 %v1093
      %1144 = vmatpush1.bf16.msra.mxu0 %v1092
      %1145 = vmatprep.subr.bf16.mxu0 %v1095
      %1146 = vmatpush1.bf16.msra.mxu0 %v1094
      %1147 = vmatprep.subr.bf16.mxu0 %v1097
      %1148 = vmatpush1.bf16.msra.mxu0 %v1096
      %1149 = vmatprep.subr.bf16.mxu0 0
      %1150 = vmatpush1.bf16.msra.mxu0 0
      %1151 = vmatprep.subr.bf16.mxu0 0
      %1152 = vmatpush1.bf16.msra.mxu0 0
      %1153 = vmatprep.subr.bf16.mxu0 0
      %1154 = vmatpush1.bf16.msra.mxu0 0
      %1155 = vmatprep.subr.bf16.mxu0 0
      %1156 = vmatpush1.bf16.msra.mxu0 0
      %1157 = vmatprep.subr.bf16.mxu0 0
      %1158 = vmatpush1.bf16.msra.mxu0 0
      %1159 = vmatprep.subr.bf16.mxu0 0
      %1160 = vmatpush1.bf16.msra.mxu0 0
      %1161 = vmatprep.subr.bf16.mxu0 0
      %1162 = vmatpush1.bf16.msra.mxu0 0
      %1163 = vmatprep.subr.bf16.mxu0 0
      %1164 = vmatpush1.bf16.msra.mxu0 0
      %1165 = vmatprep.subr.bf16.mxu0 0
      %1166 = vmatpush1.bf16.msra.mxu0 0
      %1167 = vmatprep.subr.bf16.mxu0 0
      %1168 = vmatpush1.bf16.msra.mxu0 0
      %1169 = vmatprep.subr.bf16.mxu0 0
      %1170 = vmatpush1.bf16.msra.mxu0 0
      %1171 = vmatprep.subr.bf16.mxu0 0
      %1172 = vmatpush1.bf16.msra.mxu0 0
      %1173 = vmatprep.mubr.bf16.mxu0 0
      %1174 = vmatmul.mubr.bf16.gmra.mrb[0].mxu0 %v1136
      %v1175 = vpop.f32.mrb[0].mxu0
      %v1176 = vadd.f32 %v1116, %v1175
      %v1177 = vpop.f32.mrb[0].mxu0
      %v1178 = vadd.f32 %v1117, %v1177
      %v1179 = vpop.f32.mrb[0].mxu0
      %v1180 = vadd.f32 %v1118, %v1179
      %v1181 = vpop.f32.mrb[0].mxu0
      %v1182 = vadd.f32 %v1119, %v1181
      %1183 = vmatprep.mubr.bf16.mxu0 0
      %1184 = vmatmul.mubr.bf16.gmra.mrb[0].mxu0 %v1139
      %v1185 = vpop.f32.mrb[0].mxu0
      %v1186 = vadd.f32 %v1120, %v1185
      %v1187 = vpop.f32.mrb[0].mxu0
      %v1188 = vadd.f32 %v1121, %v1187
      %v1189 = vpop.f32.mrb[0].mxu0
      %v1190 = vadd.f32 %v1122, %v1189
      %v1191 = vpop.f32.mrb[0].mxu0
      %v1192 = vadd.f32 %v1123, %v1191
      %1193 = vdwg.mxu0
      %v1194 = vadd.f32 %v1176, %v1180
      %v1195 = vadd.f32 %v1194, %v1186
      %v1196 = vadd.f32 %v1195, %v1190
      %v1197 = vrot.slane %v1196, 4
      %v1198 = vadd.f32 %v1196, %v1197
      %v1199 = vrot.slane %v1198, 2
      %v1200 = vadd.f32 %v1198, %v1199
      %v1201 = vrot.slane %v1200, 1
      %v1202 = vadd.f32 %v1200, %v1201
      %v1203 = vadd.f32 %v1178, %v1182
      %v1204 = vadd.f32 %v1203, %v1188
      %v1205 = vadd.f32 %v1204, %v1192
      %v1206 = vrot.slane %v1205, 4
      %v1207 = vadd.f32 %v1205, %v1206
      %v1208 = vrot.slane %v1207, 2
      %v1209 = vadd.f32 %v1207, %v1208
      %v1210 = vrot.slane %v1209, 1
      %v1211 = vadd.f32 %v1209, %v1210
      %v1212 = vmul.f32 %v1202, %v698
      %v1213 = vmul.f32 %v1211, %v698
      %v1214 = vsub.f32 %v1176, %v1212
      %v1215 = vsub.f32 %v1178, %v1213
      %v1216 = vsub.f32 %v1180, %v1212
      %v1217 = vsub.f32 %v1182, %v1213
      %v1218 = vsub.f32 %v1186, %v1212
      %v1219 = vsub.f32 %v1188, %v1213
      %v1220 = vsub.f32 %v1190, %v1212
      %v1221 = vsub.f32 %v1192, %v1213
      %v1222 = vmul.f32 %v1214, %v1214
      %v1223 = vmul.f32 %v1215, %v1215
      %v1224 = vmul.f32 %v1216, %v1216
      %v1225 = vmul.f32 %v1217, %v1217
      %v1226 = vmul.f32 %v1218, %v1218
      %v1227 = vmul.f32 %v1219, %v1219
      %v1228 = vmul.f32 %v1220, %v1220
      %v1229 = vmul.f32 %v1221, %v1221
      %v1230 = vadd.f32 %v1222, %v1224
      %v1231 = vadd.f32 %v1230, %v1226
      %v1232 = vadd.f32 %v1231, %v1228
      %v1233 = vrot.slane %v1232, 4
      %v1234 = vadd.f32 %v1232, %v1233
      %v1235 = vrot.slane %v1234, 2
      %v1236 = vadd.f32 %v1234, %v1235
      %v1237 = vrot.slane %v1236, 1
      %v1238 = vadd.f32 %v1236, %v1237
      %v1239 = vadd.f32 %v1223, %v1225
      %v1240 = vadd.f32 %v1239, %v1227
      %v1241 = vadd.f32 %v1240, %v1229
      %v1242 = vrot.slane %v1241, 4
      %v1243 = vadd.f32 %v1241, %v1242
      %v1244 = vrot.slane %v1243, 2
      %v1245 = vadd.f32 %v1243, %v1244
      %v1246 = vrot.slane %v1245, 1
      %v1247 = vadd.f32 %v1245, %v1246
      %v1248 = vmul.f32 %v1238, %v698
      %v1249 = vmul.f32 %v1247, %v698
      %v1250 = vadd.f32 %v1248, 1e-06
      %v1251 = vadd.f32 %v1249, 1e-06
      %v1252 = vrsqrt.pop %v1250
      %v1253 = vrsqrt.pop %v1251
      %v1254 = vmul.f32 %v1214, %v1252
      %v1255 = vmul.f32 %v1215, %v1253
      %v1256 = vmul.f32 %v1216, %v1252
      %v1257 = vmul.f32 %v1217, %v1253
      %v1258 = vmul.f32 %v1218, %v1252
      %v1259 = vmul.f32 %v1219, %v1253
      %v1260 = vmul.f32 %v1220, %v1252
      %v1261 = vmul.f32 %v1221, %v1253
      %1263 = vset.pattern.permute.xlu0 0
      %1264 = vperm.xlu0 %1263, %v1106
      %v1265 = vpop.permute.xlu0 %1264
      %1268 = vset.pattern.permute.xlu0 0
      %1269 = vperm.xlu0 %1268, %v1107
      %v1270 = vpop.permute.xlu0 %1269
      %1273 = vset.pattern.permute.xlu0 0
      %1274 = vperm.xlu0 %1273, %v1108
      %v1275 = vpop.permute.xlu0 %1274
      %1278 = vset.pattern.permute.xlu0 0
      %1279 = vperm.xlu0 %1278, %v1109
      %v1280 = vpop.permute.xlu0 %1279
      %v1282 = vmul.f32 %v1254, %v1265
      %v1283 = vmul.f32 %v1255, %v1265
      %v1284 = vmul.f32 %v1256, %v1270
      %v1285 = vmul.f32 %v1257, %v1270
      %v1286 = vmul.f32 %v1258, %v1275
      %v1287 = vmul.f32 %v1259, %v1275
      %v1288 = vmul.f32 %v1260, %v1280
      %v1289 = vmul.f32 %v1261, %v1280
      %1291 = vset.pattern.permute.xlu0 0
      %1292 = vperm.xlu0 %1291, %v1110
      %v1293 = vpop.permute.xlu0 %1292
      %1296 = vset.pattern.permute.xlu0 0
      %1297 = vperm.xlu0 %1296, %v1111
      %v1298 = vpop.permute.xlu0 %1297
      %1301 = vset.pattern.permute.xlu0 0
      %1302 = vperm.xlu0 %1301, %v1112
      %v1303 = vpop.permute.xlu0 %1302
      %1306 = vset.pattern.permute.xlu0 0
      %1307 = vperm.xlu0 %1306, %v1113
      %v1308 = vpop.permute.xlu0 %1307
      %v1310 = vadd.f32 %v1282, %v1293
      %v1311 = vadd.f32 %v1283, %v1293
      %v1312 = vadd.f32 %v1284, %v1298
      %v1313 = vadd.f32 %v1285, %v1298
      %v1314 = vadd.f32 %v1286, %v1303
      %v1315 = vadd.f32 %v1287, %v1303
      %v1316 = vadd.f32 %v1288, %v1308
      %v1317 = vadd.f32 %v1289, %v1308
      %v1318 = vpack.c.bf16 %v1312, %v1310
      %v1319 = vpack.c.bf16 %v1313, %v1311
      %v1320 = vpack.c.bf16 %v1316, %v1314
      %v1321 = vpack.c.bf16 %v1317, %v1315
      %1323 = vset.pattern.permute.xlu0 0
      %1324 = vperm.xlu0 %1323, %v1115
      %v1325 = vpop.permute.xlu0 %1324
      %v1328 = vsel %vm435, %v1114, 0
      %1330 = vmatprep.subr.bf16.mxu0 %v1319
      %1331 = vmatpush1.bf16.msra.mxu0 %v1318
      %1332 = vmatprep.subr.bf16.mxu0 %v1321
      %1333 = vmatpush1.bf16.msra.mxu0 %v1320
      %1334 = vmatprep.subr.bf16.mxu0 0
      %1335 = vmatpush1.bf16.msra.mxu0 0
      %1336 = vmatprep.subr.bf16.mxu0 0
      %1337 = vmatpush1.bf16.msra.mxu0 0
      %1338 = vmatprep.subr.bf16.mxu0 0
      %1339 = vmatpush1.bf16.msra.mxu0 0
      %1340 = vmatprep.subr.bf16.mxu0 0
      %1341 = vmatpush1.bf16.msra.mxu0 0
      %1342 = vmatprep.subr.bf16.mxu0 0
      %1343 = vmatpush1.bf16.msra.mxu0 0
      %1344 = vmatprep.subr.bf16.mxu0 0
      %1345 = vmatpush1.bf16.msra.mxu0 0
      %1346 = vmatprep.subr.bf16.mxu0 0
      %1347 = vmatpush1.bf16.msra.mxu0 0
      %1348 = vmatprep.subr.bf16.mxu0 0
      %1349 = vmatpush1.bf16.msra.mxu0 0
      %1350 = vmatprep.subr.bf16.mxu0 0
      %1351 = vmatpush1.bf16.msra.mxu0 0
      %1352 = vmatprep.subr.bf16.mxu0 0
      %1353 = vmatpush1.bf16.msra.mxu0 0
      %1354 = vmatprep.subr.bf16.mxu0 0
      %1355 = vmatpush1.bf16.msra.mxu0 0
      %1356 = vmatprep.subr.bf16.mxu0 0
      %1357 = vmatpush1.bf16.msra.mxu0 0
      %1358 = vmatprep.subr.bf16.mxu0 0
      %1359 = vmatpush1.bf16.msra.mxu0 0
      %1360 = vmatprep.subr.bf16.mxu0 0
      %1361 = vmatpush1.bf16.msra.mxu0 0
      %1362 = vmatprep.mubr.bf16.mxu0 0
      %1363 = vmatmul.mubr.bf16.gmra.mrb[0].mxu0 %v1328
      %v1364 = vpop.f32.mrb[0].mxu0
      %v1365 = vadd.f32 %v1325, %v1364
      %v1366 = vpop.f32.mrb[0].mxu0
      %v1367 = vadd.f32 %v1325, %v1366
      %v1368 = vpop.f32.mrb[0].mxu0
      %v1369 = vpop.f32.mrb[0].mxu0
      %1370 = vdwg.mxu0
      %v1371 = vmul.f32 %v1365, 0.5
      %v1372 = vmul.f32 %v1367, 0.5
      %v1373 = vmul.f32 %v1365, 0.044715
      %v1374 = vmul.f32 %v1367, 0.044715
      %v1375 = vmul.f32 %v1373, %v1365
      %v1376 = vmul.f32 %v1374, %v1367
      %v1377 = vmul.f32 %v1375, %v1365
      %v1378 = vmul.f32 %v1376, %v1367
      %v1379 = vadd.f32 %v1365, %v1377
      %v1380 = vadd.f32 %v1367, %v1378
      %v1381 = vmul.f32 %v1379, 0.7978846
      %v1382 = vmul.f32 %v1380, 0.7978846
      %v1383 = vtanh.pop %v1381
      %v1384 = vtanh.pop %v1382
      %v1385 = vadd.f32 %v1383, 1.0
      %v1386 = vadd.f32 %v1384, 1.0
      %v1387 = vmul.f32 %v1371, %v1385
      %v1388 = vmul.f32 %v1372, %v1386
      %v1391 = vcombine.low %v1387, %v1388
      %1393 = vst [vmem:[%s325] sm:$0xff] %v1391
      %p1394 = scmp.lt.s32.totalorder %s19, 1
      %s1395 = scalar_select %p1394, %s19, 1
      %s1396 = smul.addr %s1395, 2
      %s1397 = smul.addr %s1396, 4
      %s1398 = scalar_lea.vmem %s8, %s1397
      // Predicated region
      $region53: #{_allspark_forward_full.4} parent=51 // pred_check
        %p1399 = pneg %p215
      $region54: #{_allspark_forward_full.4} parent=51 // pred_check_branch
        %1401 = sbr.rel (%p1399) target = $region56
      $region55: #{_allspark_forward_full.4} parent=51 // pred_region
        _
      $region56: #{_allspark_forward_full.4} parent=51 // pred_fallthru
        _
    $region52: #{_allspark_forward_full.4} parent=5 // pred_fallthru
      _
    %p1402 = scmp.le.s32.totalorder 2, %s14
    // Predicated region
    $region57: #{_allspark_forward_full.4} parent=5 // pred_check
      %p1403 = pneg %p1402
    $region58: #{_allspark_forward_full.4} parent=5 // pred_check_branch
      %1405 = sbr.rel (%p1403) target = $region60
    $region59: #{_allspark_forward_full.4} parent=5 // pred_region
      %s1406 = ssub.s32 %s14, 2
      // Predicated region
      $region61: #{_allspark_forward_full.4} parent=59 // pred_check
        %p1407 = pneg %p221
      $region62: #{_allspark_forward_full.4} parent=59 // pred_check_branch
        %1409 = sbr.rel (%p1407) target = $region64
      $region63: #{_allspark_forward_full.4} parent=59 // pred_region
        %p1410 = scmp.lt.s32.totalorder %s20, 1
        %s1411 = scalar_select %p1410, %s20, 1
        %s1412 = smul.addr %s1411, 2
        %s1413 = smul.addr %s1412, 4
        %s1414 = scalar_lea.vmem %s8, %s1413
      $region64: #{_allspark_forward_full.4} parent=59 // pred_fallthru
        _
    $region60: #{_allspark_forward_full.4} parent=5 // pred_fallthru
      _
  $region6: #{_allspark_forward_full.4} parent=0 // loop_footer
    %s18 = sadd.s32 1, %s14
  $region7: #{_allspark_forward_full.4} parent=0 // loop_footer_branch
    %13 = sbr.rel target = $region3
  $region8: #{_allspark_forward_full.4} parent=0 // loop_exit
    _

</llo_original>
